<compile_context>
chip_gen: v6e
topology: v6e:2x2x1
jax: 0.10.0
libtpu: 0.0.40
codegen_flags: <defaults>
</compile_context>

<pallas_src>
import functools

import jax
import jax.numpy as jnp
from jax.experimental import pallas as pl
from jax.experimental.pallas import tpu as pltpu


def _round_up(x, m):
    return ((x + m - 1) // m) * m


def _attention_kernel(x_ref, wqkv_ref, wo_ref, b_ref, o_ref,
                      qkv_ref, heads_ref, *, seq_len, num_heads, head_dim):
    """One batch element per grid step.

    x_ref:     (1, Np, C)  bf16  tokens (zero padded to Np)
    wqkv_ref:  (C, 3C)     bf16  W_qkv^T, q-columns pre-scaled by qk_scale
    wo_ref:    (C, C)      bf16  W_proj^T
    b_ref:     (1, C)      f32   proj bias
    o_ref:     (1, Np, C)        output block
    qkv_ref:   (Np, 3C)    bf16  VMEM scratch: full-width QKV activations
    heads_ref: (Np, C)     bf16  VMEM scratch: concatenated per-head outputs
    """
    nm = (((1,), (0,)), ((), ()))   # (n,k) x (k,m) -> (n,m)
    nt = (((1,), (1,)), ((), ()))   # (n,k) x (m,k) -> (n,m)

    C = num_heads * head_dim
    x = x_ref[0]                                            # (Np, C) bf16
    n_pad = x.shape[0]

    # --- One full-width QKV GEMM (K = C, output 3C lanes wide) ------------
    qkv = jax.lax.dot_general(x, wqkv_ref[...], nm,
                              preferred_element_type=jnp.float32)
    qkv_ref[...] = qkv.astype(jnp.bfloat16)

    # Mask for zero-padded keys (static: only emitted when padding exists).
    if seq_len != n_pad:
        key_idx = jax.lax.broadcasted_iota(jnp.int32, (1, n_pad), 1)
        key_mask = key_idx < seq_len
    else:
        key_mask = None

    # --- Per-head attention (static unroll over the small head count) -----
    for h in range(num_heads):
        lo = h * head_dim
        hi = lo + head_dim
        q_h = qkv_ref[:, lo:hi]                             # (Np, hd) bf16
        k_h = qkv_ref[:, C + lo:C + hi]
        v_h = qkv_ref[:, 2 * C + lo:2 * C + hi]

        # Scores: contract over head_dim of both operands -> (Np, Np).
        # (scale already folded into the q weight columns)
        s = jax.lax.dot_general(q_h, k_h, nt,
                                preferred_element_type=jnp.float32)
        if key_mask is not None:
            s = jnp.where(key_mask, s, jnp.float32(-1e30))

        # Numerically stable softmax, normalization deferred past the PV
        # matmul; reciprocal goes to the otherwise-idle EUP and overlaps MXU.
        m = jnp.max(s, axis=-1, keepdims=True)
        e = jnp.exp(s - m)
        inv = pl.reciprocal(jnp.sum(e, axis=-1, keepdims=True), approx=True)
        pv = jax.lax.dot_general(e.astype(jnp.bfloat16), v_h, nm,
                                 preferred_element_type=jnp.float32)
        heads_ref[:, lo:hi] = (pv * inv).astype(jnp.bfloat16)

    # --- Single deferred output projection (K = C) + bias -----------------
    out = jax.lax.dot_general(heads_ref[...], wo_ref[...], nm,
                              preferred_element_type=jnp.float32)
    o_ref[0] = (out + b_ref[...]).astype(o_ref.dtype)


def prepare_params(w_qkv, w_proj, b_proj, *, num_heads, qk_scale=None):
    """One-time (model-load-time) weight relayout: transpose, fold the qk
    scale into the query columns, cast to bf16.  Keep this out of the
    per-call path for repeated inference."""
    three_c, C = w_qkv.shape
    assert three_c == 3 * C
    hd = C // num_heads
    scale = qk_scale if qk_scale is not None else hd ** (-0.5)

    # torch: qkv = x @ W_qkv.T; W_qkv.T columns are already ordered
    # [q(head-major) | k | v], so just scale the first C columns.
    col_scale = jnp.concatenate([jnp.full((C,), scale, jnp.float32),
                                 jnp.ones((2 * C,), jnp.float32)])
    w_qkv_t = (jnp.transpose(w_qkv) * col_scale[None, :]).astype(jnp.bfloat16)
    w_proj_t = jnp.transpose(w_proj).astype(jnp.bfloat16)   # (C, C)
    b2 = b_proj.reshape(1, C).astype(jnp.float32)
    return w_qkv_t, w_proj_t, b2


def attention_forward(x, params, *, num_heads):
    """ViT Attention forward.  x: (B, N, C).  Returns (B, N, C) in x.dtype."""
    w_qkv_t, w_proj_t, b2 = params
    B, N, C = x.shape
    hd = C // num_heads

    # Pad the sequence axis to a lane-dense multiple of 128 (padded keys are
    # masked in-kernel; padded query rows are sliced off afterwards).
    n_pad = _round_up(N, 128)
    x_p = x if n_pad == N else jnp.pad(x, ((0, 0), (0, n_pad - N), (0, 0)))
    x_p = x_p.astype(jnp.bfloat16)

    kernel = functools.partial(_attention_kernel, seq_len=N,
                               num_heads=num_heads, head_dim=hd)

    out = pl.pallas_call(
        kernel,
        out_shape=jax.ShapeDtypeStruct((B, n_pad, C), x.dtype),
        grid_spec=pltpu.PrefetchScalarGridSpec(
            num_scalar_prefetch=0,
            grid=(B,),                               # one step per batch elem
            in_specs=[
                pl.BlockSpec((1, n_pad, C), lambda b: (b, 0, 0)),   # x
                pl.BlockSpec((C, 3 * C),    lambda b: (0, 0)),      # W_qkv^T
                pl.BlockSpec((C, C),        lambda b: (0, 0)),      # W_proj^T
                pl.BlockSpec((1, C),        lambda b: (0, 0)),      # bias
            ],
            out_specs=pl.BlockSpec((1, n_pad, C), lambda b: (b, 0, 0)),
            scratch_shapes=[
                pltpu.VMEM((n_pad, 3 * C), jnp.bfloat16),   # QKV activations
                pltpu.VMEM((n_pad, C), jnp.bfloat16),       # concat'd heads
            ],
        ),
        compiler_params=pltpu.CompilerParams(
            dimension_semantics=("parallel",),
            vmem_limit_bytes=32 * 1024 * 1024),
    )(x_p, w_qkv_t, w_proj_t, b2)

    return out if n_pad == N else out[:, :N, :]


def _reference(x, w_qkv, w_proj, b_proj, num_heads):
    """Pure-JAX f32 replica of the PyTorch forward, for verification."""
    B, N, C = x.shape
    hd = C // num_heads
    scale = hd ** (-0.5)
    qkv = x @ w_qkv.T                                     # (B, N, 3C)
    qkv = qkv.reshape(B, N, 3, num_heads, hd).transpose(2, 0, 3, 1, 4)
    q, k, v = qkv[0], qkv[1], qkv[2]                      # (B, H, N, hd)
    attn = (q @ jnp.swapaxes(k, -2, -1)) * scale          # (B, H, N, N)
    attn = jax.nn.softmax(attn, axis=-1)
    o = (attn @ v).transpose(0, 2, 1, 3).reshape(B, N, C)
    return o @ w_proj.T + b_proj


if __name__ == "__main__":
    # Small shapes consistent with the module: B=2, N=8 tokens, C=32, 8 heads.
    B, N, C, H = 2, 8, 32, 8

    key = jax.random.PRNGKey(0)
    kx, kqkv, kp, kb = jax.random.split(key, 4)

    x = jax.random.normal(kx, (B, N, C), dtype=jnp.float32)
    # Deterministic parameter init (nn.Linear-style scaling).
    w_qkv = jax.random.normal(kqkv, (3 * C, C), dtype=jnp.float32) * (1.0 / C ** 0.5)
    w_proj = jax.random.normal(kp, (C, C), dtype=jnp.float32) * (1.0 / C ** 0.5)
    b_proj = jax.random.normal(kb, (C,), dtype=jnp.float32) * 0.01

    params = prepare_params(w_qkv, w_proj, b_proj, num_heads=H)  # load-time prep
    out = attention_forward(x, params, num_heads=H)
    out = jax.block_until_ready(out)

    ref = _reference(x, w_qkv, w_proj, b_proj, H)
    assert out.shape == (B, N, C)
    # bf16 MXU operands + approx reciprocal -> loosened tolerance vs f32 ref.
    err = jnp.abs(out - ref)
    assert float(jnp.mean(err)) < 3e-2, "mean error too large vs reference"
    assert jnp.allclose(out, ref, atol=1e-1, rtol=1e-1), "mismatch vs reference"

    print("KERNEL_OK")
</pallas_src>

<mosaic_0001>
module attributes {stable_mosaic.version = 11 : i64} {
  func.func @_attention_kernel(%arg0: i32, %arg1: memref<1x128x32xbf16, #tpu.memory_space<vmem>>, %arg2: memref<32x96xbf16, #tpu.memory_space<vmem>>, %arg3: memref<32x32xbf16, #tpu.memory_space<vmem>>, %arg4: memref<1x32xf32, #tpu.memory_space<vmem>>, %arg5: memref<1x128x32xf32, #tpu.memory_space<vmem>>, %arg6: memref<128x96xbf16, #tpu.memory_space<vmem>>, %arg7: memref<128x32xbf16, #tpu.memory_space<vmem>>) attributes {dimension_semantics = [#tpu.dimension_semantics<parallel>], iteration_bounds = array<i64: 2>, scalar_prefetch = 0 : i64, scratch_operands = 2 : i64, tpu.core_type = #tpu.core_type<tc>, window_params = [{transform_indices = @transform_0, window_bounds = array<i64: 1, 128, 32>}, {pipeline_mode = #tpu.pipeline_mode<synchronous>, transform_indices = @transform_1, window_bounds = array<i64: 32, 96>}, {pipeline_mode = #tpu.pipeline_mode<synchronous>, transform_indices = @transform_2, window_bounds = array<i64: 32, 32>}, {pipeline_mode = #tpu.pipeline_mode<synchronous>, transform_indices = @transform_3, window_bounds = array<i64: 1, 32>}, {transform_indices = @transform_4, window_bounds = array<i64: 1, 128, 32>}]} {
    %c0 = arith.constant 0 : index
    %c0_0 = arith.constant 0 : index
    %c0_1 = arith.constant 0 : index
    %0 = vector.load %arg1[%c0, %c0_0, %c0_1] : memref<1x128x32xbf16, #tpu.memory_space<vmem>>, vector<1x128x32xbf16>
    %1 = vector.shape_cast %0 : vector<1x128x32xbf16> to vector<128x32xbf16>
    %c0_2 = arith.constant 0 : index
    %c0_3 = arith.constant 0 : index
    %2 = vector.load %arg2[%c0_2, %c0_3] : memref<32x96xbf16, #tpu.memory_space<vmem>>, vector<32x96xbf16>
    %cst = arith.constant dense<0.000000e+00> : vector<128x96xf32>
    %3 = tpu.matmul %1, %2, %cst {dimension_numbers = #tpu.dot_dimension_numbers<[1], [0], [0], [1], [0, 0, 1, 1], [], []>} : vector<128x32xbf16>, vector<32x96xbf16>, vector<128x96xf32> -> vector<128x96xf32>
    %4 = arith.truncf %3 : vector<128x96xf32> to vector<128x96xbf16>
    %c0_4 = arith.constant 0 : index
    %c0_5 = arith.constant 0 : index
    %5 = vector.load %arg6[%c0_4, %c0_5] : memref<128x96xbf16, #tpu.memory_space<vmem>>, vector<128x96xbf16>
    tpu.vector_store %arg6[%c0_4, %c0_5], %4 {strides = array<i32>} : memref<128x96xbf16, #tpu.memory_space<vmem>>, vector<128x96xbf16>,
    %6 = tpu.iota {dimensions = array<i32: 1>} : vector<1x128xi32>
    %c8_i32 = arith.constant 8 : i32
    %7 = vector.broadcast %c8_i32 : i32 to vector<1x128xi32>
    %8 = arith.cmpi slt, %6, %7 : vector<1x128xi32>
    %c0_6 = arith.constant 0 : index
    %c0_7 = arith.constant 0 : index
    %9 = vector.load %arg6[%c0_6, %c0_7] : memref<128x96xbf16, #tpu.memory_space<vmem>>, vector<128x4xbf16>
    %c0_8 = arith.constant 0 : index
    %c32 = arith.constant 32 : index
    %10 = vector.load %arg6[%c0_8, %c32] : memref<128x96xbf16, #tpu.memory_space<vmem>>, vector<128x4xbf16>
    %c0_9 = arith.constant 0 : index
    %c64 = arith.constant 64 : index
    %11 = vector.load %arg6[%c0_9, %c64] : memref<128x96xbf16, #tpu.memory_space<vmem>>, vector<128x4xbf16>
    %cst_10 = arith.constant dense<0.000000e+00> : vector<128x128xf32>
    %12 = tpu.matmul %9, %10, %cst_10 {dimension_numbers = #tpu.dot_dimension_numbers<[1], [1], [0], [0], [0, 0, 1, 0], [], []>} : vector<128x4xbf16>, vector<128x4xbf16>, vector<128x128xf32> -> vector<128x128xf32>
    %cst_11 = arith.constant -1.000000e+30 : f32
    %13 = vector.shape_cast %8 : vector<1x128xi1> to vector<1x128xi1>
    %14 = vector.broadcast %13 : vector<1x128xi1> to vector<128x128xi1>
    %15 = vector.broadcast %cst_11 : f32 to vector<128x128xf32>
    %16 = arith.select %14, %12, %15 : vector<128x128xi1>, vector<128x128xf32>
    %cst_12 = arith.constant dense<0xFF800000> : vector<128xf32>
    %17 = vector.multi_reduction <maximumf>, %16, %cst_12 [1] : vector<128x128xf32> to vector<128xf32>
    %18 = vector.shape_cast %17 : vector<128xf32> to vector<128x1xf32>
    %19 = vector.broadcast %18 : vector<128x1xf32> to vector<128x128xf32>
    %20 = arith.subf %16, %19 : vector<128x128xf32>
    %21 = math.exp %20 : vector<128x128xf32>
    %cst_13 = arith.constant dense<0.000000e+00> : vector<128xf32>
    %22 = vector.multi_reduction <add>, %21, %cst_13 [1] : vector<128x128xf32> to vector<128xf32>
    %23 = vector.shape_cast %22 : vector<128xf32> to vector<128x1xf32>
    %24 = tpu.reciprocal %23 {approx = true} : vector<128x1xf32> -> vector<128x1xf32>
    %25 = arith.truncf %21 : vector<128x128xf32> to vector<128x128xbf16>
    %cst_14 = arith.constant dense<0.000000e+00> : vector<128x4xf32>
    %26 = tpu.matmul %25, %11, %cst_14 {dimension_numbers = #tpu.dot_dimension_numbers<[1], [0], [0], [1], [0, 0, 1, 1], [], []>} : vector<128x128xbf16>, vector<128x4xbf16>, vector<128x4xf32> -> vector<128x4xf32>
    %27 = vector.broadcast %24 : vector<128x1xf32> to vector<128x4xf32>
    %28 = arith.mulf %26, %27 : vector<128x4xf32>
    %29 = arith.truncf %28 : vector<128x4xf32> to vector<128x4xbf16>
    %c0_15 = arith.constant 0 : index
    %c0_16 = arith.constant 0 : index
    %30 = vector.load %arg7[%c0_15, %c0_16] : memref<128x32xbf16, #tpu.memory_space<vmem>>, vector<128x4xbf16>
    tpu.vector_store %arg7[%c0_15, %c0_16], %29 {strides = array<i32>} : memref<128x32xbf16, #tpu.memory_space<vmem>>, vector<128x4xbf16>,
    %c0_17 = arith.constant 0 : index
    %c4 = arith.constant 4 : index
    %31 = vector.load %arg6[%c0_17, %c4] : memref<128x96xbf16, #tpu.memory_space<vmem>>, vector<128x4xbf16>
    %c0_18 = arith.constant 0 : index
    %c36 = arith.constant 36 : index
    %32 = vector.load %arg6[%c0_18, %c36] : memref<128x96xbf16, #tpu.memory_space<vmem>>, vector<128x4xbf16>
    %c0_19 = arith.constant 0 : index
    %c68 = arith.constant 68 : index
    %33 = vector.load %arg6[%c0_19, %c68] : memref<128x96xbf16, #tpu.memory_space<vmem>>, vector<128x4xbf16>
    %cst_20 = arith.constant dense<0.000000e+00> : vector<128x128xf32>
    %34 = tpu.matmul %31, %32, %cst_20 {dimension_numbers = #tpu.dot_dimension_numbers<[1], [1], [0], [0], [0, 0, 1, 0], [], []>} : vector<128x4xbf16>, vector<128x4xbf16>, vector<128x128xf32> -> vector<128x128xf32>
    %cst_21 = arith.constant -1.000000e+30 : f32
    %35 = vector.shape_cast %8 : vector<1x128xi1> to vector<1x128xi1>
    %36 = vector.broadcast %35 : vector<1x128xi1> to vector<128x128xi1>
    %37 = vector.broadcast %cst_21 : f32 to vector<128x128xf32>
    %38 = arith.select %36, %34, %37 : vector<128x128xi1>, vector<128x128xf32>
    %cst_22 = arith.constant dense<0xFF800000> : vector<128xf32>
    %39 = vector.multi_reduction <maximumf>, %38, %cst_22 [1] : vector<128x128xf32> to vector<128xf32>
    %40 = vector.shape_cast %39 : vector<128xf32> to vector<128x1xf32>
    %41 = vector.broadcast %40 : vector<128x1xf32> to vector<128x128xf32>
    %42 = arith.subf %38, %41 : vector<128x128xf32>
    %43 = math.exp %42 : vector<128x128xf32>
    %cst_23 = arith.constant dense<0.000000e+00> : vector<128xf32>
    %44 = vector.multi_reduction <add>, %43, %cst_23 [1] : vector<128x128xf32> to vector<128xf32>
    %45 = vector.shape_cast %44 : vector<128xf32> to vector<128x1xf32>
    %46 = tpu.reciprocal %45 {approx = true} : vector<128x1xf32> -> vector<128x1xf32>
    %47 = arith.truncf %43 : vector<128x128xf32> to vector<128x128xbf16>
    %cst_24 = arith.constant dense<0.000000e+00> : vector<128x4xf32>
    %48 = tpu.matmul %47, %33, %cst_24 {dimension_numbers = #tpu.dot_dimension_numbers<[1], [0], [0], [1], [0, 0, 1, 1], [], []>} : vector<128x128xbf16>, vector<128x4xbf16>, vector<128x4xf32> -> vector<128x4xf32>
    %49 = vector.broadcast %46 : vector<128x1xf32> to vector<128x4xf32>
    %50 = arith.mulf %48, %49 : vector<128x4xf32>
    %51 = arith.truncf %50 : vector<128x4xf32> to vector<128x4xbf16>
    %c0_25 = arith.constant 0 : index
    %c4_26 = arith.constant 4 : index
    %52 = vector.load %arg7[%c0_25, %c4_26] : memref<128x32xbf16, #tpu.memory_space<vmem>>, vector<128x4xbf16>
    tpu.vector_store %arg7[%c0_25, %c4_26], %51 {strides = array<i32>} : memref<128x32xbf16, #tpu.memory_space<vmem>>, vector<128x4xbf16>,
    %c0_27 = arith.constant 0 : index
    %c8 = arith.constant 8 : index
    %53 = vector.load %arg6[%c0_27, %c8] : memref<128x96xbf16, #tpu.memory_space<vmem>>, vector<128x4xbf16>
    %c0_28 = arith.constant 0 : index
    %c40 = arith.constant 40 : index
    %54 = vector.load %arg6[%c0_28, %c40] : memref<128x96xbf16, #tpu.memory_space<vmem>>, vector<128x4xbf16>
    %c0_29 = arith.constant 0 : index
    %c72 = arith.constant 72 : index
    %55 = vector.load %arg6[%c0_29, %c72] : memref<128x96xbf16, #tpu.memory_space<vmem>>, vector<128x4xbf16>
    %cst_30 = arith.constant dense<0.000000e+00> : vector<128x128xf32>
    %56 = tpu.matmul %53, %54, %cst_30 {dimension_numbers = #tpu.dot_dimension_numbers<[1], [1], [0], [0], [0, 0, 1, 0], [], []>} : vector<128x4xbf16>, vector<128x4xbf16>, vector<128x128xf32> -> vector<128x128xf32>
    %cst_31 = arith.constant -1.000000e+30 : f32
    %57 = vector.shape_cast %8 : vector<1x128xi1> to vector<1x128xi1>
    %58 = vector.broadcast %57 : vector<1x128xi1> to vector<128x128xi1>
    %59 = vector.broadcast %cst_31 : f32 to vector<128x128xf32>
    %60 = arith.select %58, %56, %59 : vector<128x128xi1>, vector<128x128xf32>
    %cst_32 = arith.constant dense<0xFF800000> : vector<128xf32>
    %61 = vector.multi_reduction <maximumf>, %60, %cst_32 [1] : vector<128x128xf32> to vector<128xf32>
    %62 = vector.shape_cast %61 : vector<128xf32> to vector<128x1xf32>
    %63 = vector.broadcast %62 : vector<128x1xf32> to vector<128x128xf32>
    %64 = arith.subf %60, %63 : vector<128x128xf32>
    %65 = math.exp %64 : vector<128x128xf32>
    %cst_33 = arith.constant dense<0.000000e+00> : vector<128xf32>
    %66 = vector.multi_reduction <add>, %65, %cst_33 [1] : vector<128x128xf32> to vector<128xf32>
    %67 = vector.shape_cast %66 : vector<128xf32> to vector<128x1xf32>
    %68 = tpu.reciprocal %67 {approx = true} : vector<128x1xf32> -> vector<128x1xf32>
    %69 = arith.truncf %65 : vector<128x128xf32> to vector<128x128xbf16>
    %cst_34 = arith.constant dense<0.000000e+00> : vector<128x4xf32>
    %70 = tpu.matmul %69, %55, %cst_34 {dimension_numbers = #tpu.dot_dimension_numbers<[1], [0], [0], [1], [0, 0, 1, 1], [], []>} : vector<128x128xbf16>, vector<128x4xbf16>, vector<128x4xf32> -> vector<128x4xf32>
    %71 = vector.broadcast %68 : vector<128x1xf32> to vector<128x4xf32>
    %72 = arith.mulf %70, %71 : vector<128x4xf32>
    %73 = arith.truncf %72 : vector<128x4xf32> to vector<128x4xbf16>
    %c0_35 = arith.constant 0 : index
    %c8_36 = arith.constant 8 : index
    %74 = vector.load %arg7[%c0_35, %c8_36] : memref<128x32xbf16, #tpu.memory_space<vmem>>, vector<128x4xbf16>
    tpu.vector_store %arg7[%c0_35, %c8_36], %73 {strides = array<i32>} : memref<128x32xbf16, #tpu.memory_space<vmem>>, vector<128x4xbf16>,
    %c0_37 = arith.constant 0 : index
    %c12 = arith.constant 12 : index
    %75 = vector.load %arg6[%c0_37, %c12] : memref<128x96xbf16, #tpu.memory_space<vmem>>, vector<128x4xbf16>
    %c0_38 = arith.constant 0 : index
    %c44 = arith.constant 44 : index
    %76 = vector.load %arg6[%c0_38, %c44] : memref<128x96xbf16, #tpu.memory_space<vmem>>, vector<128x4xbf16>
    %c0_39 = arith.constant 0 : index
    %c76 = arith.constant 76 : index
    %77 = vector.load %arg6[%c0_39, %c76] : memref<128x96xbf16, #tpu.memory_space<vmem>>, vector<128x4xbf16>
    %cst_40 = arith.constant dense<0.000000e+00> : vector<128x128xf32>
    %78 = tpu.matmul %75, %76, %cst_40 {dimension_numbers = #tpu.dot_dimension_numbers<[1], [1], [0], [0], [0, 0, 1, 0], [], []>} : vector<128x4xbf16>, vector<128x4xbf16>, vector<128x128xf32> -> vector<128x128xf32>
    %cst_41 = arith.constant -1.000000e+30 : f32
    %79 = vector.shape_cast %8 : vector<1x128xi1> to vector<1x128xi1>
    %80 = vector.broadcast %79 : vector<1x128xi1> to vector<128x128xi1>
    %81 = vector.broadcast %cst_41 : f32 to vector<128x128xf32>
    %82 = arith.select %80, %78, %81 : vector<128x128xi1>, vector<128x128xf32>
    %cst_42 = arith.constant dense<0xFF800000> : vector<128xf32>
    %83 = vector.multi_reduction <maximumf>, %82, %cst_42 [1] : vector<128x128xf32> to vector<128xf32>
    %84 = vector.shape_cast %83 : vector<128xf32> to vector<128x1xf32>
    %85 = vector.broadcast %84 : vector<128x1xf32> to vector<128x128xf32>
    %86 = arith.subf %82, %85 : vector<128x128xf32>
    %87 = math.exp %86 : vector<128x128xf32>
    %cst_43 = arith.constant dense<0.000000e+00> : vector<128xf32>
    %88 = vector.multi_reduction <add>, %87, %cst_43 [1] : vector<128x128xf32> to vector<128xf32>
    %89 = vector.shape_cast %88 : vector<128xf32> to vector<128x1xf32>
    %90 = tpu.reciprocal %89 {approx = true} : vector<128x1xf32> -> vector<128x1xf32>
    %91 = arith.truncf %87 : vector<128x128xf32> to vector<128x128xbf16>
    %cst_44 = arith.constant dense<0.000000e+00> : vector<128x4xf32>
    %92 = tpu.matmul %91, %77, %cst_44 {dimension_numbers = #tpu.dot_dimension_numbers<[1], [0], [0], [1], [0, 0, 1, 1], [], []>} : vector<128x128xbf16>, vector<128x4xbf16>, vector<128x4xf32> -> vector<128x4xf32>
    %93 = vector.broadcast %90 : vector<128x1xf32> to vector<128x4xf32>
    %94 = arith.mulf %92, %93 : vector<128x4xf32>
    %95 = arith.truncf %94 : vector<128x4xf32> to vector<128x4xbf16>
    %c0_45 = arith.constant 0 : index
    %c12_46 = arith.constant 12 : index
    %96 = vector.load %arg7[%c0_45, %c12_46] : memref<128x32xbf16, #tpu.memory_space<vmem>>, vector<128x4xbf16>
    tpu.vector_store %arg7[%c0_45, %c12_46], %95 {strides = array<i32>} : memref<128x32xbf16, #tpu.memory_space<vmem>>, vector<128x4xbf16>,
    %c0_47 = arith.constant 0 : index
    %c16 = arith.constant 16 : index
    %97 = vector.load %arg6[%c0_47, %c16] : memref<128x96xbf16, #tpu.memory_space<vmem>>, vector<128x4xbf16>
    %c0_48 = arith.constant 0 : index
    %c48 = arith.constant 48 : index
    %98 = vector.load %arg6[%c0_48, %c48] : memref<128x96xbf16, #tpu.memory_space<vmem>>, vector<128x4xbf16>
    %c0_49 = arith.constant 0 : index
    %c80 = arith.constant 80 : index
    %99 = vector.load %arg6[%c0_49, %c80] : memref<128x96xbf16, #tpu.memory_space<vmem>>, vector<128x4xbf16>
    %cst_50 = arith.constant dense<0.000000e+00> : vector<128x128xf32>
    %100 = tpu.matmul %97, %98, %cst_50 {dimension_numbers = #tpu.dot_dimension_numbers<[1], [1], [0], [0], [0, 0, 1, 0], [], []>} : vector<128x4xbf16>, vector<128x4xbf16>, vector<128x128xf32> -> vector<128x128xf32>
    %cst_51 = arith.constant -1.000000e+30 : f32
    %101 = vector.shape_cast %8 : vector<1x128xi1> to vector<1x128xi1>
    %102 = vector.broadcast %101 : vector<1x128xi1> to vector<128x128xi1>
    %103 = vector.broadcast %cst_51 : f32 to vector<128x128xf32>
    %104 = arith.select %102, %100, %103 : vector<128x128xi1>, vector<128x128xf32>
    %cst_52 = arith.constant dense<0xFF800000> : vector<128xf32>
    %105 = vector.multi_reduction <maximumf>, %104, %cst_52 [1] : vector<128x128xf32> to vector<128xf32>
    %106 = vector.shape_cast %105 : vector<128xf32> to vector<128x1xf32>
    %107 = vector.broadcast %106 : vector<128x1xf32> to vector<128x128xf32>
    %108 = arith.subf %104, %107 : vector<128x128xf32>
    %109 = math.exp %108 : vector<128x128xf32>
    %cst_53 = arith.constant dense<0.000000e+00> : vector<128xf32>
    %110 = vector.multi_reduction <add>, %109, %cst_53 [1] : vector<128x128xf32> to vector<128xf32>
    %111 = vector.shape_cast %110 : vector<128xf32> to vector<128x1xf32>
    %112 = tpu.reciprocal %111 {approx = true} : vector<128x1xf32> -> vector<128x1xf32>
    %113 = arith.truncf %109 : vector<128x128xf32> to vector<128x128xbf16>
    %cst_54 = arith.constant dense<0.000000e+00> : vector<128x4xf32>
    %114 = tpu.matmul %113, %99, %cst_54 {dimension_numbers = #tpu.dot_dimension_numbers<[1], [0], [0], [1], [0, 0, 1, 1], [], []>} : vector<128x128xbf16>, vector<128x4xbf16>, vector<128x4xf32> -> vector<128x4xf32>
    %115 = vector.broadcast %112 : vector<128x1xf32> to vector<128x4xf32>
    %116 = arith.mulf %114, %115 : vector<128x4xf32>
    %117 = arith.truncf %116 : vector<128x4xf32> to vector<128x4xbf16>
    %c0_55 = arith.constant 0 : index
    %c16_56 = arith.constant 16 : index
    %118 = vector.load %arg7[%c0_55, %c16_56] : memref<128x32xbf16, #tpu.memory_space<vmem>>, vector<128x4xbf16>
    tpu.vector_store %arg7[%c0_55, %c16_56], %117 {strides = array<i32>} : memref<128x32xbf16, #tpu.memory_space<vmem>>, vector<128x4xbf16>,
    %c0_57 = arith.constant 0 : index
    %c20 = arith.constant 20 : index
    %119 = vector.load %arg6[%c0_57, %c20] : memref<128x96xbf16, #tpu.memory_space<vmem>>, vector<128x4xbf16>
    %c0_58 = arith.constant 0 : index
    %c52 = arith.constant 52 : index
    %120 = vector.load %arg6[%c0_58, %c52] : memref<128x96xbf16, #tpu.memory_space<vmem>>, vector<128x4xbf16>
    %c0_59 = arith.constant 0 : index
    %c84 = arith.constant 84 : index
    %121 = vector.load %arg6[%c0_59, %c84] : memref<128x96xbf16, #tpu.memory_space<vmem>>, vector<128x4xbf16>
    %cst_60 = arith.constant dense<0.000000e+00> : vector<128x128xf32>
    %122 = tpu.matmul %119, %120, %cst_60 {dimension_numbers = #tpu.dot_dimension_numbers<[1], [1], [0], [0], [0, 0, 1, 0], [], []>} : vector<128x4xbf16>, vector<128x4xbf16>, vector<128x128xf32> -> vector<128x128xf32>
    %cst_61 = arith.constant -1.000000e+30 : f32
    %123 = vector.shape_cast %8 : vector<1x128xi1> to vector<1x128xi1>
    %124 = vector.broadcast %123 : vector<1x128xi1> to vector<128x128xi1>
    %125 = vector.broadcast %cst_61 : f32 to vector<128x128xf32>
    %126 = arith.select %124, %122, %125 : vector<128x128xi1>, vector<128x128xf32>
    %cst_62 = arith.constant dense<0xFF800000> : vector<128xf32>
    %127 = vector.multi_reduction <maximumf>, %126, %cst_62 [1] : vector<128x128xf32> to vector<128xf32>
    %128 = vector.shape_cast %127 : vector<128xf32> to vector<128x1xf32>
    %129 = vector.broadcast %128 : vector<128x1xf32> to vector<128x128xf32>
    %130 = arith.subf %126, %129 : vector<128x128xf32>
    %131 = math.exp %130 : vector<128x128xf32>
    %cst_63 = arith.constant dense<0.000000e+00> : vector<128xf32>
    %132 = vector.multi_reduction <add>, %131, %cst_63 [1] : vector<128x128xf32> to vector<128xf32>
    %133 = vector.shape_cast %132 : vector<128xf32> to vector<128x1xf32>
    %134 = tpu.reciprocal %133 {approx = true} : vector<128x1xf32> -> vector<128x1xf32>
    %135 = arith.truncf %131 : vector<128x128xf32> to vector<128x128xbf16>
    %cst_64 = arith.constant dense<0.000000e+00> : vector<128x4xf32>
    %136 = tpu.matmul %135, %121, %cst_64 {dimension_numbers = #tpu.dot_dimension_numbers<[1], [0], [0], [1], [0, 0, 1, 1], [], []>} : vector<128x128xbf16>, vector<128x4xbf16>, vector<128x4xf32> -> vector<128x4xf32>
    %137 = vector.broadcast %134 : vector<128x1xf32> to vector<128x4xf32>
    %138 = arith.mulf %136, %137 : vector<128x4xf32>
    %139 = arith.truncf %138 : vector<128x4xf32> to vector<128x4xbf16>
    %c0_65 = arith.constant 0 : index
    %c20_66 = arith.constant 20 : index
    %140 = vector.load %arg7[%c0_65, %c20_66] : memref<128x32xbf16, #tpu.memory_space<vmem>>, vector<128x4xbf16>
    tpu.vector_store %arg7[%c0_65, %c20_66], %139 {strides = array<i32>} : memref<128x32xbf16, #tpu.memory_space<vmem>>, vector<128x4xbf16>,
    %c0_67 = arith.constant 0 : index
    %c24 = arith.constant 24 : index
    %141 = vector.load %arg6[%c0_67, %c24] : memref<128x96xbf16, #tpu.memory_space<vmem>>, vector<128x4xbf16>
    %c0_68 = arith.constant 0 : index
    %c56 = arith.constant 56 : index
    %142 = vector.load %arg6[%c0_68, %c56] : memref<128x96xbf16, #tpu.memory_space<vmem>>, vector<128x4xbf16>
    %c0_69 = arith.constant 0 : index
    %c88 = arith.constant 88 : index
    %143 = vector.load %arg6[%c0_69, %c88] : memref<128x96xbf16, #tpu.memory_space<vmem>>, vector<128x4xbf16>
    %cst_70 = arith.constant dense<0.000000e+00> : vector<128x128xf32>
    %144 = tpu.matmul %141, %142, %cst_70 {dimension_numbers = #tpu.dot_dimension_numbers<[1], [1], [0], [0], [0, 0, 1, 0], [], []>} : vector<128x4xbf16>, vector<128x4xbf16>, vector<128x128xf32> -> vector<128x128xf32>
    %cst_71 = arith.constant -1.000000e+30 : f32
    %145 = vector.shape_cast %8 : vector<1x128xi1> to vector<1x128xi1>
    %146 = vector.broadcast %145 : vector<1x128xi1> to vector<128x128xi1>
    %147 = vector.broadcast %cst_71 : f32 to vector<128x128xf32>
    %148 = arith.select %146, %144, %147 : vector<128x128xi1>, vector<128x128xf32>
    %cst_72 = arith.constant dense<0xFF800000> : vector<128xf32>
    %149 = vector.multi_reduction <maximumf>, %148, %cst_72 [1] : vector<128x128xf32> to vector<128xf32>
    %150 = vector.shape_cast %149 : vector<128xf32> to vector<128x1xf32>
    %151 = vector.broadcast %150 : vector<128x1xf32> to vector<128x128xf32>
    %152 = arith.subf %148, %151 : vector<128x128xf32>
    %153 = math.exp %152 : vector<128x128xf32>
    %cst_73 = arith.constant dense<0.000000e+00> : vector<128xf32>
    %154 = vector.multi_reduction <add>, %153, %cst_73 [1] : vector<128x128xf32> to vector<128xf32>
    %155 = vector.shape_cast %154 : vector<128xf32> to vector<128x1xf32>
    %156 = tpu.reciprocal %155 {approx = true} : vector<128x1xf32> -> vector<128x1xf32>
    %157 = arith.truncf %153 : vector<128x128xf32> to vector<128x128xbf16>
    %cst_74 = arith.constant dense<0.000000e+00> : vector<128x4xf32>
    %158 = tpu.matmul %157, %143, %cst_74 {dimension_numbers = #tpu.dot_dimension_numbers<[1], [0], [0], [1], [0, 0, 1, 1], [], []>} : vector<128x128xbf16>, vector<128x4xbf16>, vector<128x4xf32> -> vector<128x4xf32>
    %159 = vector.broadcast %156 : vector<128x1xf32> to vector<128x4xf32>
    %160 = arith.mulf %158, %159 : vector<128x4xf32>
    %161 = arith.truncf %160 : vector<128x4xf32> to vector<128x4xbf16>
    %c0_75 = arith.constant 0 : index
    %c24_76 = arith.constant 24 : index
    %162 = vector.load %arg7[%c0_75, %c24_76] : memref<128x32xbf16, #tpu.memory_space<vmem>>, vector<128x4xbf16>
    tpu.vector_store %arg7[%c0_75, %c24_76], %161 {strides = array<i32>} : memref<128x32xbf16, #tpu.memory_space<vmem>>, vector<128x4xbf16>,
    %c0_77 = arith.constant 0 : index
    %c28 = arith.constant 28 : index
    %163 = vector.load %arg6[%c0_77, %c28] : memref<128x96xbf16, #tpu.memory_space<vmem>>, vector<128x4xbf16>
    %c0_78 = arith.constant 0 : index
    %c60 = arith.constant 60 : index
    %164 = vector.load %arg6[%c0_78, %c60] : memref<128x96xbf16, #tpu.memory_space<vmem>>, vector<128x4xbf16>
    %c0_79 = arith.constant 0 : index
    %c92 = arith.constant 92 : index
    %165 = vector.load %arg6[%c0_79, %c92] : memref<128x96xbf16, #tpu.memory_space<vmem>>, vector<128x4xbf16>
    %cst_80 = arith.constant dense<0.000000e+00> : vector<128x128xf32>
    %166 = tpu.matmul %163, %164, %cst_80 {dimension_numbers = #tpu.dot_dimension_numbers<[1], [1], [0], [0], [0, 0, 1, 0], [], []>} : vector<128x4xbf16>, vector<128x4xbf16>, vector<128x128xf32> -> vector<128x128xf32>
    %cst_81 = arith.constant -1.000000e+30 : f32
    %167 = vector.shape_cast %8 : vector<1x128xi1> to vector<1x128xi1>
    %168 = vector.broadcast %167 : vector<1x128xi1> to vector<128x128xi1>
    %169 = vector.broadcast %cst_81 : f32 to vector<128x128xf32>
    %170 = arith.select %168, %166, %169 : vector<128x128xi1>, vector<128x128xf32>
    %cst_82 = arith.constant dense<0xFF800000> : vector<128xf32>
    %171 = vector.multi_reduction <maximumf>, %170, %cst_82 [1] : vector<128x128xf32> to vector<128xf32>
    %172 = vector.shape_cast %171 : vector<128xf32> to vector<128x1xf32>
    %173 = vector.broadcast %172 : vector<128x1xf32> to vector<128x128xf32>
    %174 = arith.subf %170, %173 : vector<128x128xf32>
    %175 = math.exp %174 : vector<128x128xf32>
    %cst_83 = arith.constant dense<0.000000e+00> : vector<128xf32>
    %176 = vector.multi_reduction <add>, %175, %cst_83 [1] : vector<128x128xf32> to vector<128xf32>
    %177 = vector.shape_cast %176 : vector<128xf32> to vector<128x1xf32>
    %178 = tpu.reciprocal %177 {approx = true} : vector<128x1xf32> -> vector<128x1xf32>
    %179 = arith.truncf %175 : vector<128x128xf32> to vector<128x128xbf16>
    %cst_84 = arith.constant dense<0.000000e+00> : vector<128x4xf32>
    %180 = tpu.matmul %179, %165, %cst_84 {dimension_numbers = #tpu.dot_dimension_numbers<[1], [0], [0], [1], [0, 0, 1, 1], [], []>} : vector<128x128xbf16>, vector<128x4xbf16>, vector<128x4xf32> -> vector<128x4xf32>
    %181 = vector.broadcast %178 : vector<128x1xf32> to vector<128x4xf32>
    %182 = arith.mulf %180, %181 : vector<128x4xf32>
    %183 = arith.truncf %182 : vector<128x4xf32> to vector<128x4xbf16>
    %c0_85 = arith.constant 0 : index
    %c28_86 = arith.constant 28 : index
    %184 = vector.load %arg7[%c0_85, %c28_86] : memref<128x32xbf16, #tpu.memory_space<vmem>>, vector<128x4xbf16>
    tpu.vector_store %arg7[%c0_85, %c28_86], %183 {strides = array<i32>} : memref<128x32xbf16, #tpu.memory_space<vmem>>, vector<128x4xbf16>,
    %c0_87 = arith.constant 0 : index
    %c0_88 = arith.constant 0 : index
    %185 = vector.load %arg7[%c0_87, %c0_88] : memref<128x32xbf16, #tpu.memory_space<vmem>>, vector<128x32xbf16>
    %c0_89 = arith.constant 0 : index
    %c0_90 = arith.constant 0 : index
    %186 = vector.load %arg3[%c0_89, %c0_90] : memref<32x32xbf16, #tpu.memory_space<vmem>>, vector<32x32xbf16>
    %cst_91 = arith.constant dense<0.000000e+00> : vector<128x32xf32>
    %187 = tpu.matmul %185, %186, %cst_91 {dimension_numbers = #tpu.dot_dimension_numbers<[1], [0], [0], [1], [0, 0, 1, 1], [], []>} : vector<128x32xbf16>, vector<32x32xbf16>, vector<128x32xf32> -> vector<128x32xf32>
    %c0_92 = arith.constant 0 : index
    %c0_93 = arith.constant 0 : index
    %188 = vector.load %arg4[%c0_92, %c0_93] : memref<1x32xf32, #tpu.memory_space<vmem>>, vector<1x32xf32>
    %189 = vector.broadcast %188 : vector<1x32xf32> to vector<128x32xf32>
    %190 = arith.addf %187, %189 : vector<128x32xf32>
    %c0_94 = arith.constant 0 : index
    %c0_95 = arith.constant 0 : index
    %c0_96 = arith.constant 0 : index
    %191 = vector.load %arg5[%c0_94, %c0_95, %c0_96] : memref<1x128x32xf32, #tpu.memory_space<vmem>>, vector<1x128x32xf32>
    %192 = vector.shape_cast %191 : vector<1x128x32xf32> to vector<128x32xf32>
    %193 = vector.shape_cast %190 : vector<128x32xf32> to vector<1x128x32xf32>
    tpu.vector_store %arg5[%c0_94, %c0_95, %c0_96], %193 {strides = array<i32>} : memref<1x128x32xf32, #tpu.memory_space<vmem>>, vector<1x128x32xf32>,
    return
  }
  func.func @transform_0(%arg0: i32) -> (i32, i32, i32) {
    %c0_i32 = arith.constant 0 : i32
    %c0_i32_0 = arith.constant 0 : i32
    %c0_i32_1 = arith.constant 0 : i32
    return %arg0, %c0_i32, %c0_i32_0 : i32, i32, i32
  }
  func.func @transform_1(%arg0: i32) -> (i32, i32) {
    %c0_i32 = arith.constant 0 : i32
    %c0_i32_0 = arith.constant 0 : i32
    %c0_i32_1 = arith.constant 0 : i32
    return %c0_i32, %c0_i32_0 : i32, i32
  }
  func.func @transform_2(%arg0: i32) -> (i32, i32) {
    %c0_i32 = arith.constant 0 : i32
    %c0_i32_0 = arith.constant 0 : i32
    %c0_i32_1 = arith.constant 0 : i32
    return %c0_i32, %c0_i32_0 : i32, i32
  }
  func.func @transform_3(%arg0: i32) -> (i32, i32) {
    %c0_i32 = arith.constant 0 : i32
    %c0_i32_0 = arith.constant 0 : i32
    %c0_i32_1 = arith.constant 0 : i32
    return %c0_i32, %c0_i32_0 : i32, i32
  }
  func.func @transform_4(%arg0: i32) -> (i32, i32, i32) {
    %c0_i32 = arith.constant 0 : i32
    %c0_i32_0 = arith.constant 0 : i32
    %c0_i32_1 = arith.constant 0 : i32
    return %arg0, %c0_i32, %c0_i32_0 : i32, i32, i32
  }
}

</mosaic_0001>

<llo_original>
// kernel: tpu_custom_call.1
$region0: #{tpu_custom_call.1}
  #allocation0 [shape = 'u32[]', space=smem, size = 0x4, offset = 0x4, fixed_abs, tag = 'smem constant byte address 0x4 - core index']
  #allocation1 [shape = 'u32[144,128]{1,0:T(1,128)}', space=vmem, size = 0x12000, scoped, tag = 'internal scratch']
  #allocation2 [shape = 'bf16[128,96]{1,0:T(8,128)(2,1)}', space=vmem, size = 0x8000, scoped, tag = 'scratch operand']
  #allocation3 [shape = 'bf16[128,32]{1,0:T(8,128)(2,1)}', space=vmem, size = 0x8000, scoped, tag = 'scratch operand']
  %s0 = inlined_call_operand.vmem [shape: bf16[2,128,32], index: 0, kind: input, shape index: {}]
  %s1 = inlined_call_operand.vmem [shape: bf16[32,96], index: 1, kind: input, shape index: {}]
  %s2 = inlined_call_operand.vmem [shape: bf16[32,32], index: 2, kind: input, shape index: {}]
  %s3 = inlined_call_operand.vmem [shape: f32[1,32], index: 3, kind: input, shape index: {}]
  %s4 = inlined_call_operand.vmem [shape: f32[2,128,32], index: 4, kind: output, shape index: {}]
  %s5 = sld [smem:[#allocation0]]
  $region49: #{tpu_custom_call.1} parent=0
    _
  %s7 = ssub.s32 1, %s5
  %s8 = scalar_select 0, %s7, %s5
  loop: start=0, step=1, limit=4
  $region2: #{tpu_custom_call.1} parent=0 // loop_pre_header
    _
  $region3: #{tpu_custom_call.1} parent=0 // loop_header
    %s10 = sphi 0, %s14
    %p11 = scmp.ge.s32.totalorder %s10, 4
    %s20 = sphi 0, %s22
    %s23 = sphi 0, %s20
    %s24 = sphi 0, %s23
    %s40 = sphi 0, %s24
    %s44 = sphi 0, %s44
    %s46 = sphi 0, %s44
    %s47 = sphi 0, %s46
    %s61 = sphi 0, %s47
    %s65 = sphi 0, %s65
    %s67 = sphi 0, %s65
    %s68 = sphi 0, %s67
    %s82 = sphi 0, %s68
    %s86 = sphi 0, %s86
    %s88 = sphi 0, %s86
    %s89 = sphi 0, %s88
    %s103 = sphi 0, %s89
    %s109 = sphi 0, %s111
    %s112 = sphi 0, %s109
    %s113 = sphi 0, %s112
    %s129 = sphi 0, %s113
  $region4: #{tpu_custom_call.1} parent=0 // loop_header_branch
    %13 = sbr.rel (%p11) target = $region8
  $region5: #{tpu_custom_call.1} parent=0 // loop_body
    %s15 = ssub.s32 %s10, 1
    %s16 = ssub.s32 %s10, 2
    %s17 = sadd.s32 %s10, 1
    %s18 = ssub.s32 %s10, %s17
    %p19 = scmp.eq.s32.totalorder %s18, 0
    %s21 = sadd.s32 %s20, 1
    %s22 = scalar_select %p19, %s20, %s21
    %p25 = pneg %p19
    %p26 = scmp.eq.s32.totalorder %s10, 1
    %p27 = por %p25, %p26
    %p28 = scmp.ne.s32.totalorder %s20, %s23
    %p29 = scmp.eq.s32.totalorder %s10, 0
    %p30 = por %p28, %p29
    %p31 = scmp.ne.s32.totalorder %s20, %s23
    %p32 = scmp.eq.s32.totalorder %s15, 1
    %p33 = por %p31, %p32
    %p34 = scmp.ne.s32.totalorder %s23, %s24
    %p35 = scmp.eq.s32.totalorder %s15, 0
    %p36 = por %p34, %p35
    %p37 = scmp.ne.s32.totalorder %s23, %s24
    %p38 = scmp.eq.s32.totalorder %s16, 1
    %p39 = por %p37, %p38
    %p41 = scmp.ne.s32.totalorder %s24, %s40
    %p42 = scmp.eq.s32.totalorder %s16, 0
    %p43 = por %p41, %p42
    %s45 = sadd.s32 %s44, 1
    %p48 = scmp.eq.s32.totalorder %s10, 1
    %p49 = scmp.ne.s32.totalorder %s44, %s46
    %p50 = scmp.eq.s32.totalorder %s10, 0
    %p51 = por %p49, %p50
    %p52 = scmp.ne.s32.totalorder %s44, %s46
    %p53 = scmp.eq.s32.totalorder %s15, 1
    %p54 = por %p52, %p53
    %p55 = scmp.ne.s32.totalorder %s46, %s47
    %p56 = scmp.eq.s32.totalorder %s15, 0
    %p57 = por %p55, %p56
    %p58 = scmp.ne.s32.totalorder %s46, %s47
    %p59 = scmp.eq.s32.totalorder %s16, 1
    %p60 = por %p58, %p59
    %p62 = scmp.ne.s32.totalorder %s47, %s61
    %p63 = scmp.eq.s32.totalorder %s16, 0
    %p64 = por %p62, %p63
    %s66 = sadd.s32 %s65, 1
    %p69 = scmp.eq.s32.totalorder %s10, 1
    %p70 = scmp.ne.s32.totalorder %s65, %s67
    %p71 = scmp.eq.s32.totalorder %s10, 0
    %p72 = por %p70, %p71
    %p73 = scmp.ne.s32.totalorder %s65, %s67
    %p74 = scmp.eq.s32.totalorder %s15, 1
    %p75 = por %p73, %p74
    %p76 = scmp.ne.s32.totalorder %s67, %s68
    %p77 = scmp.eq.s32.totalorder %s15, 0
    %p78 = por %p76, %p77
    %p79 = scmp.ne.s32.totalorder %s67, %s68
    %p80 = scmp.eq.s32.totalorder %s16, 1
    %p81 = por %p79, %p80
    %p83 = scmp.ne.s32.totalorder %s68, %s82
    %p84 = scmp.eq.s32.totalorder %s16, 0
    %p85 = por %p83, %p84
    %s87 = sadd.s32 %s86, 1
    %p90 = scmp.eq.s32.totalorder %s10, 1
    %p91 = scmp.ne.s32.totalorder %s86, %s88
    %p92 = scmp.eq.s32.totalorder %s10, 0
    %p93 = por %p91, %p92
    %p94 = scmp.ne.s32.totalorder %s86, %s88
    %p95 = scmp.eq.s32.totalorder %s15, 1
    %p96 = por %p94, %p95
    %p97 = scmp.ne.s32.totalorder %s88, %s89
    %p98 = scmp.eq.s32.totalorder %s15, 0
    %p99 = por %p97, %p98
    %p100 = scmp.ne.s32.totalorder %s88, %s89
    %p101 = scmp.eq.s32.totalorder %s16, 1
    %p102 = por %p100, %p101
    %p104 = scmp.ne.s32.totalorder %s89, %s103
    %p105 = scmp.eq.s32.totalorder %s16, 0
    %p106 = por %p104, %p105
    %s107 = ssub.s32 %s10, %s17
    %p108 = scmp.eq.s32.totalorder %s107, 0
    %s110 = sadd.s32 %s109, 1
    %s111 = scalar_select %p108, %s109, %s110
    %p114 = pneg %p108
    %p115 = scmp.eq.s32.totalorder %s10, 1
    %p116 = por %p114, %p115
    %p117 = scmp.ne.s32.totalorder %s109, %s112
    %p118 = scmp.eq.s32.totalorder %s10, 0
    %p119 = por %p117, %p118
    %p120 = scmp.ne.s32.totalorder %s109, %s112
    %p121 = scmp.eq.s32.totalorder %s15, 1
    %p122 = por %p120, %p121
    %p123 = scmp.ne.s32.totalorder %s112, %s113
    %p124 = scmp.eq.s32.totalorder %s15, 0
    %p125 = por %p123, %p124
    %p126 = scmp.ne.s32.totalorder %s112, %s113
    %p127 = scmp.eq.s32.totalorder %s16, 1
    %p128 = por %p126, %p127
    %p130 = scmp.ne.s32.totalorder %s113, %s129
    %p131 = scmp.eq.s32.totalorder %s16, 0
    %p132 = por %p130, %p131
    %p133 = scmp.le.s32.totalorder 1, %s10
    %p134 = scmp.lt.s32.totalorder %s10, 3
    %p135 = pnand %p133, %p134
    %p136 = pneg %p135
    // Predicated region
    $region9: #{tpu_custom_call.1} parent=5 // pred_check
      _
    $region10: #{tpu_custom_call.1} parent=5 // pred_check_branch
      %138 = sbr.rel (%p135) target = $region12
    $region11: #{tpu_custom_call.1} parent=5 // pred_region
      %s139 = ssub.s32 %s10, 1
      // Predicated region
      $region13: #{tpu_custom_call.1} parent=11 // pred_check
        %p140 = pneg %p57
      $region14: #{tpu_custom_call.1} parent=11 // pred_check_branch
        %142 = sbr.rel (%p140) target = $region16
      $region15: #{tpu_custom_call.1} parent=11 // pred_region
        _
      $region16: #{tpu_custom_call.1} parent=11 // pred_fallthru
        _
      // Predicated region
      $region17: #{tpu_custom_call.1} parent=11 // pred_check
        %p143 = pneg %p78
      $region18: #{tpu_custom_call.1} parent=11 // pred_check_branch
        %145 = sbr.rel (%p143) target = $region20
      $region19: #{tpu_custom_call.1} parent=11 // pred_region
        _
      $region20: #{tpu_custom_call.1} parent=11 // pred_fallthru
        _
      // Predicated region
      $region21: #{tpu_custom_call.1} parent=11 // pred_check
        %p146 = pneg %p99
      $region22: #{tpu_custom_call.1} parent=11 // pred_check_branch
        %148 = sbr.rel (%p146) target = $region24
      $region23: #{tpu_custom_call.1} parent=11 // pred_region
        _
      $region24: #{tpu_custom_call.1} parent=11 // pred_fallthru
        _
    $region12: #{tpu_custom_call.1} parent=5 // pred_fallthru
      _
    %p149 = scmp.lt.s32.totalorder %s10, 2
    // Predicated region
    $region25: #{tpu_custom_call.1} parent=5 // pred_check
      %p150 = pneg %p149
    $region26: #{tpu_custom_call.1} parent=5 // pred_check_branch
      %152 = sbr.rel (%p150) target = $region28
    $region27: #{tpu_custom_call.1} parent=5 // pred_region
      // Predicated region
      $region29: #{tpu_custom_call.1} parent=27 // pred_check
        %p153 = pneg %p30
      $region30: #{tpu_custom_call.1} parent=27 // pred_check_branch
        %155 = sbr.rel (%p153) target = $region32
      $region31: #{tpu_custom_call.1} parent=27 // pred_region
        %p156 = scmp.lt.s32.totalorder %s10, 1
        %s157 = scalar_select %p156, %s10, 1
        %s158 = smul.addr %s157, 16
        %s159 = smul.addr %s158, 4
        %s160 = scalar_lea.vmem %s0, %s159
      $region32: #{tpu_custom_call.1} parent=27 // pred_fallthru
        _
    $region28: #{tpu_custom_call.1} parent=5 // pred_fallthru
      _
    %p161 = scmp.le.s32.totalorder 1, %s10
    %p162 = scmp.lt.s32.totalorder %s10, 3
    %p163 = pnand %p161, %p162
    %p164 = pneg %p163
    // Predicated region
    $region33: #{tpu_custom_call.1} parent=5 // pred_check
      _
    $region34: #{tpu_custom_call.1} parent=5 // pred_check_branch
      %166 = sbr.rel (%p163) target = $region36
    $region35: #{tpu_custom_call.1} parent=5 // pred_region
      %s167 = ssub.s32 %s10, 1
      %p168 = scmp.lt.s32.totalorder %s15, 1
      %s169 = scalar_select %p168, %s15, 1
      %s170 = smul.addr %s169, 16
      %s171 = smul.addr %s170, 4
      %s172 = scalar_lea.vmem %s0, %s171
      %p173 = pneg %p36
      %p174 = pneg %p33
      %p175 = pneg %p57
      %p176 = pneg %p54
      %p177 = pneg %p78
      %p178 = pneg %p75
      %p179 = pneg %p99
      %p180 = pneg %p96
      %p181 = pneg %p125
      %p182 = pneg %p122
      %p183 = scmp.lt.s32.totalorder %s15, 1
      %s184 = scalar_select %p183, %s15, 1
      %s185 = smul.addr %s184, 16
      %s186 = smul.addr %s185, 8
      %s187 = scalar_lea.vmem %s4, %s186
      %p188 = scmp.lt.s32.totalorder %s15, 1
      %s189 = scalar_select %p188, %s15, 1
      %s190 = smul.addr %s189, 16
      %s191 = smul.addr %s190, 4
      %s192 = scalar_lea.vmem %s0, %s191
      %p193 = scmp.lt.s32.totalorder %s15, 1
      %s194 = scalar_select %p193, %s15, 1
      %s195 = smul.addr %s194, 16
      %s196 = smul.addr %s195, 8
      %s197 = scalar_lea.vmem %s4, %s196
      %v199 = vld [vmem:[%s192] sm:$0xf]
      %v200 = vld [vmem:[%s192 + $0x4] sm:$0xf]
      %v201 = vld [vmem:[%s192 + $0x8] sm:$0xf]
      %v202 = vld [vmem:[%s192 + $0xc] sm:$0xf]
      %v203 = vld [vmem:[%s192 + $0x10] sm:$0xf]
      %v204 = vld [vmem:[%s192 + $0x14] sm:$0xf]
      %v205 = vld [vmem:[%s192 + $0x18] sm:$0xf]
      %v206 = vld [vmem:[%s192 + $0x1c] sm:$0xf]
      %v207 = vld [vmem:[%s192 + $0x20] sm:$0xf]
      %v208 = vld [vmem:[%s192 + $0x24] sm:$0xf]
      %v209 = vld [vmem:[%s192 + $0x28] sm:$0xf]
      %v210 = vld [vmem:[%s192 + $0x2c] sm:$0xf]
      %v211 = vld [vmem:[%s192 + $0x30] sm:$0xf]
      %v212 = vld [vmem:[%s192 + $0x34] sm:$0xf]
      %v213 = vld [vmem:[%s192 + $0x38] sm:$0xf]
      %v214 = vld [vmem:[%s192 + $0x3c] sm:$0xf]
      %v215 = vld [vmem:[%s1] sm:$0xf]
      %v216 = vld [vmem:[%s1 + $0x4] sm:$0xf]
      %v217 = vld [vmem:[%s1 + $0x8] sm:$0xf]
      %v218 = vld [vmem:[%s1 + $0xc] sm:$0xf]
      %v235 = vunpack.c.l.b16 %v199
      %v236 = vunpack.c.l.b16 %v200
      %v237 = vunpack.c.l.b16 %v201
      %v238 = vunpack.c.l.b16 %v202
      %v239 = vunpack.c.l.b16 %v203
      %v240 = vunpack.c.l.b16 %v204
      %v241 = vunpack.c.l.b16 %v205
      %v242 = vunpack.c.l.b16 %v206
      %v243 = vunpack.c.l.b16 %v207
      %v244 = vunpack.c.l.b16 %v208
      %v245 = vunpack.c.l.b16 %v209
      %v246 = vunpack.c.l.b16 %v210
      %v247 = vunpack.c.l.b16 %v211
      %v248 = vunpack.c.l.b16 %v212
      %v249 = vunpack.c.l.b16 %v213
      %v250 = vunpack.c.l.b16 %v214
      %v251 = vpack.c.b16 %v236, %v235
      %v252 = vpack.c.b16 %v238, %v237
      %v253 = vpack.c.b16 %v240, %v239
      %v254 = vpack.c.b16 %v242, %v241
      %v255 = vpack.c.b16 %v244, %v243
      %v256 = vpack.c.b16 %v246, %v245
      %v257 = vpack.c.b16 %v248, %v247
      %v258 = vpack.c.b16 %v250, %v249
      %v263 = vunpack.c.l.b16 %v215
      %v264 = vunpack.c.l.b16 %v216
      %v265 = vunpack.c.l.b16 %v217
      %v266 = vunpack.c.l.b16 %v218
      %v267 = vpack.c.b16 %v264, %v263
      %v268 = vpack.c.b16 %v266, %v265
      %vm271 = vcmask 261120
      %v273 = vsel %vm271, %v251, 0
      %v276 = vsel %vm271, %v252, 0
      %v279 = vsel %vm271, %v253, 0
      %v282 = vsel %vm271, %v254, 0
      %v285 = vsel %vm271, %v255, 0
      %v288 = vsel %vm271, %v256, 0
      %v291 = vsel %vm271, %v257, 0
      %v294 = vsel %vm271, %v258, 0
      %296 = vmatprep.subr.bf16.mxu0 0
      %297 = vmatpush1.bf16.msra.mxu0 0
      %298 = vmatprep.subr.bf16.mxu0 0
      %299 = vmatpush1.bf16.msra.mxu0 0
      %300 = vmatprep.subr.bf16.mxu0 0
      %301 = vmatpush1.bf16.msra.mxu0 0
      %302 = vmatprep.subr.bf16.mxu0 0
      %303 = vmatpush1.bf16.msra.mxu0 0
      %304 = vmatprep.subr.bf16.mxu0 0
      %305 = vmatpush1.bf16.msra.mxu0 0
      %306 = vmatprep.subr.bf16.mxu0 0
      %307 = vmatpush1.bf16.msra.mxu0 0
      %308 = vmatprep.subr.bf16.mxu0 0
      %309 = vmatpush1.bf16.msra.mxu0 %v268
      %310 = vmatprep.subr.bf16.mxu0 0
      %311 = vmatpush1.bf16.msra.mxu0 %v267
      %312 = vmatprep.subr.bf16.mxu0 0
      %313 = vmatpush2.bf16.msra.mxu0 0
      %314 = vmatprep.subr.bf16.mxu0 0
      %315 = vmatpush2.bf16.msra.mxu0 0
      %316 = vmatprep.subr.bf16.mxu0 0
      %317 = vmatpush2.bf16.msra.mxu0 0
      %318 = vmatprep.subr.bf16.mxu0 0
      %319 = vmatpush2.bf16.msra.mxu0 0
      %320 = vmatprep.subr.bf16.mxu0 0
      %321 = vmatpush2.bf16.msra.mxu0 0
      %322 = vmatprep.subr.bf16.mxu0 0
      %323 = vmatpush2.bf16.msra.mxu0 0
      %324 = vmatprep.subr.bf16.mxu0 0
      %325 = vmatpush2.bf16.msra.mxu0 0
      %326 = vmatprep.subr.bf16.mxu0 0
      %327 = vmatpush2.bf16.msra.mxu0 0
      %328 = vmatprep.mubr.bf16.mxu0 0
      %329 = vmatmul.mubr.bf16.gmra.mxu0 %v273
      %v330 = vpop.f32.mrf.mxu0
      %v331 = vadd.f32 0.0, %v330
      %v332 = vpop.f32.mrf.mxu0
      %v333 = vpop.f32.mrf.mxu0
      %v334 = vadd.f32 0.0, %v333
      %v335 = vpop.f32.mrf.mxu0
      %336 = vmatprep.mubr.bf16.mxu0 0
      %337 = vmatmul.mubr.bf16.gmra.mxu0 %v276
      %v338 = vpop.f32.mrf.mxu0
      %v339 = vadd.f32 0.0, %v338
      %v340 = vpop.f32.mrf.mxu0
      %v341 = vpop.f32.mrf.mxu0
      %v342 = vadd.f32 0.0, %v341
      %v343 = vpop.f32.mrf.mxu0
      %344 = vmatprep.mubr.bf16.mxu0 0
      %345 = vmatmul.mubr.bf16.gmra.mxu0 %v279
      %v346 = vpop.f32.mrf.mxu0
      %v347 = vadd.f32 0.0, %v346
      %v348 = vpop.f32.mrf.mxu0
      %v349 = vpop.f32.mrf.mxu0
      %v350 = vadd.f32 0.0, %v349
      %v351 = vpop.f32.mrf.mxu0
      %352 = vmatprep.mubr.bf16.mxu0 0
      %353 = vmatmul.mubr.bf16.gmra.mxu0 %v282
      %v354 = vpop.f32.mrf.mxu0
      %v355 = vadd.f32 0.0, %v354
      %v356 = vpop.f32.mrf.mxu0
      %v357 = vpop.f32.mrf.mxu0
      %v358 = vadd.f32 0.0, %v357
      %v359 = vpop.f32.mrf.mxu0
      %360 = vmatprep.mubr.bf16.mxu0 0
      %361 = vmatmul.mubr.bf16.gmra.mxu0 %v285
      %v362 = vpop.f32.mrf.mxu0
      %v363 = vadd.f32 0.0, %v362
      %v364 = vpop.f32.mrf.mxu0
      %v365 = vpop.f32.mrf.mxu0
      %v366 = vadd.f32 0.0, %v365
      %v367 = vpop.f32.mrf.mxu0
      %368 = vmatprep.mubr.bf16.mxu0 0
      %369 = vmatmul.mubr.bf16.gmra.mxu0 %v288
      %v370 = vpop.f32.mrf.mxu0
      %v371 = vadd.f32 0.0, %v370
      %v372 = vpop.f32.mrf.mxu0
      %v373 = vpop.f32.mrf.mxu0
      %v374 = vadd.f32 0.0, %v373
      %v375 = vpop.f32.mrf.mxu0
      %376 = vmatprep.mubr.bf16.mxu0 0
      %377 = vmatmul.mubr.bf16.gmra.mxu0 %v291
      %v378 = vpop.f32.mrf.mxu0
      %v379 = vadd.f32 0.0, %v378
      %v380 = vpop.f32.mrf.mxu0
      %v381 = vpop.f32.mrf.mxu0
      %v382 = vadd.f32 0.0, %v381
      %v383 = vpop.f32.mrf.mxu0
      %384 = vmatprep.mubr.bf16.mxu0 0
      %385 = vmatmul.mubr.bf16.gmra.mxu0 %v294
      %v386 = vpop.f32.mrf.mxu0
      %v387 = vadd.f32 0.0, %v386
      %v388 = vpop.f32.mrf.mxu0
      %v389 = vpop.f32.mrf.mxu0
      %v390 = vadd.f32 0.0, %v389
      %v391 = vpop.f32.mrf.mxu0
      %392 = vdwg.mxu0
      %v393 = vpack.c.bf16 %v334, %v331
      %v394 = vpack.c.bf16 %v342, %v339
      %v395 = vpack.c.bf16 %v350, %v347
      %v396 = vpack.c.bf16 %v358, %v355
      %v397 = vpack.c.bf16 %v366, %v363
      %v398 = vpack.c.bf16 %v374, %v371
      %v399 = vpack.c.bf16 %v382, %v379
      %v400 = vpack.c.bf16 %v390, %v387
      %v409 = vunpack.c.l.b16 %v393
      %v410 = vunpack.c.h.b16 %v393
      %v411 = vunpack.c.l.b16 %v394
      %v412 = vunpack.c.h.b16 %v394
      %v413 = vunpack.c.l.b16 %v395
      %v414 = vunpack.c.h.b16 %v395
      %v415 = vunpack.c.l.b16 %v396
      %v416 = vunpack.c.h.b16 %v396
      %v417 = vunpack.c.l.b16 %v397
      %v418 = vunpack.c.h.b16 %v397
      %v419 = vunpack.c.l.b16 %v398
      %v420 = vunpack.c.h.b16 %v398
      %v421 = vunpack.c.l.b16 %v399
      %v422 = vunpack.c.h.b16 %v399
      %v423 = vunpack.c.l.b16 %v400
      %v424 = vunpack.c.h.b16 %v400
      %v425 = vpack.c.b16 %v409, %v409
      %v426 = vpack.c.b16 %v410, %v410
      %v427 = vpack.c.b16 %v411, %v411
      %v428 = vpack.c.b16 %v412, %v412
      %v429 = vpack.c.b16 %v413, %v413
      %v430 = vpack.c.b16 %v414, %v414
      %v431 = vpack.c.b16 %v415, %v415
      %v432 = vpack.c.b16 %v416, %v416
      %v433 = vpack.c.b16 %v417, %v417
      %v434 = vpack.c.b16 %v418, %v418
      %v435 = vpack.c.b16 %v419, %v419
      %v436 = vpack.c.b16 %v420, %v420
      %v437 = vpack.c.b16 %v421, %v421
      %v438 = vpack.c.b16 %v422, %v422
      %v439 = vpack.c.b16 %v423, %v423
      %v440 = vpack.c.b16 %v424, %v424
      %vm457 = vcmask 781312
      %458 = vst.msk [vmem:[#allocation2] sm:$0xf] %vm457, %v425
      %459 = vst.msk [vmem:[#allocation2 + $0x4] sm:$0xf] %vm457, %v426
      %460 = vst.msk [vmem:[#allocation2 + $0x8] sm:$0xf] %vm457, %v427
      %461 = vst.msk [vmem:[#allocation2 + $0xc] sm:$0xf] %vm457, %v428
      %462 = vst.msk [vmem:[#allocation2 + $0x10] sm:$0xf] %vm457, %v429
      %463 = vst.msk [vmem:[#allocation2 + $0x14] sm:$0xf] %vm457, %v430
      %464 = vst.msk [vmem:[#allocation2 + $0x18] sm:$0xf] %vm457, %v431
      %465 = vst.msk [vmem:[#allocation2 + $0x1c] sm:$0xf] %vm457, %v432
      %466 = vst.msk [vmem:[#allocation2 + $0x20] sm:$0xf] %vm457, %v433
      %467 = vst.msk [vmem:[#allocation2 + $0x24] sm:$0xf] %vm457, %v434
      %468 = vst.msk [vmem:[#allocation2 + $0x28] sm:$0xf] %vm457, %v435
      %469 = vst.msk [vmem:[#allocation2 + $0x2c] sm:$0xf] %vm457, %v436
      %470 = vst.msk [vmem:[#allocation2 + $0x30] sm:$0xf] %vm457, %v437
      %471 = vst.msk [vmem:[#allocation2 + $0x34] sm:$0xf] %vm457, %v438
      %472 = vst.msk [vmem:[#allocation2 + $0x38] sm:$0xf] %vm457, %v439
      %473 = vst.msk [vmem:[#allocation2 + $0x3c] sm:$0xf] %vm457, %v440
      %v474 = vlaneseq
      %v475 = vand.u32 %v474, 127
      %vm476 = vcmp.lt.s32.totalorder %v475, 8
      %v477 = vld [vmem:[#allocation2] sm:$0xf]
      %v478 = vld [vmem:[#allocation2 + $0x4] sm:$0xf]
      %v479 = vld [vmem:[#allocation2 + $0x8] sm:$0xf]
      %v480 = vld [vmem:[#allocation2 + $0xc] sm:$0xf]
      %v481 = vld [vmem:[#allocation2 + $0x10] sm:$0xf]
      %v482 = vld [vmem:[#allocation2 + $0x14] sm:$0xf]
      %v483 = vld [vmem:[#allocation2 + $0x18] sm:$0xf]
      %v484 = vld [vmem:[#allocation2 + $0x1c] sm:$0xf]
      %v485 = vld [vmem:[#allocation2 + $0x20] sm:$0xf]
      %v486 = vld [vmem:[#allocation2 + $0x24] sm:$0xf]
      %v487 = vld [vmem:[#allocation2 + $0x28] sm:$0xf]
      %v488 = vld [vmem:[#allocation2 + $0x2c] sm:$0xf]
      %v489 = vld [vmem:[#allocation2 + $0x30] sm:$0xf]
      %v490 = vld [vmem:[#allocation2 + $0x34] sm:$0xf]
      %v491 = vld [vmem:[#allocation2 + $0x38] sm:$0xf]
      %v492 = vld [vmem:[#allocation2 + $0x3c] sm:$0xf]
      %v509 = vunpack.c.l.b16 %v477
      %v510 = vunpack.c.l.b16 %v478
      %v511 = vunpack.c.l.b16 %v479
      %v512 = vunpack.c.l.b16 %v480
      %v513 = vunpack.c.l.b16 %v481
      %v514 = vunpack.c.l.b16 %v482
      %v515 = vunpack.c.l.b16 %v483
      %v516 = vunpack.c.l.b16 %v484
      %v517 = vunpack.c.l.b16 %v485
      %v518 = vunpack.c.l.b16 %v486
      %v519 = vunpack.c.l.b16 %v487
      %v520 = vunpack.c.l.b16 %v488
      %v521 = vunpack.c.l.b16 %v489
      %v522 = vunpack.c.l.b16 %v490
      %v523 = vunpack.c.l.b16 %v491
      %v524 = vunpack.c.l.b16 %v492
      %v525 = vpack.c.b16 %v510, %v509
      %v526 = vpack.c.b16 %v512, %v511
      %v527 = vpack.c.b16 %v514, %v513
      %v528 = vpack.c.b16 %v516, %v515
      %v529 = vpack.c.b16 %v518, %v517
      %v530 = vpack.c.b16 %v520, %v519
      %v531 = vpack.c.b16 %v522, %v521
      %v532 = vpack.c.b16 %v524, %v523
      %533 = vrot.lane.b32.xlu0 %v525, 96
      %v534 = vpop.permute.xlu0 %533
      %535 = vrot.lane.b32.xlu0 %v526, 96
      %v536 = vpop.permute.xlu0 %535
      %537 = vrot.lane.b32.xlu0 %v527, 96
      %v538 = vpop.permute.xlu0 %537
      %539 = vrot.lane.b32.xlu0 %v528, 96
      %v540 = vpop.permute.xlu0 %539
      %541 = vrot.lane.b32.xlu0 %v529, 96
      %v542 = vpop.permute.xlu0 %541
      %543 = vrot.lane.b32.xlu0 %v530, 96
      %v544 = vpop.permute.xlu0 %543
      %545 = vrot.lane.b32.xlu0 %v531, 96
      %v546 = vpop.permute.xlu0 %545
      %547 = vrot.lane.b32.xlu0 %v532, 96
      %v548 = vpop.permute.xlu0 %547
      %vm549 = vcmask 31744
      %v551 = vsel %vm549, %v525, 0
      %v554 = vsel %vm549, %v526, 0
      %v557 = vsel %vm549, %v527, 0
      %v560 = vsel %vm549, %v528, 0
      %v563 = vsel %vm549, %v529, 0
      %v566 = vsel %vm549, %v530, 0
      %v569 = vsel %vm549, %v531, 0
      %v572 = vsel %vm549, %v532, 0
      %v575 = vsel %vm549, %v534, 0
      %v578 = vsel %vm549, %v536, 0
      %v581 = vsel %vm549, %v538, 0
      %v584 = vsel %vm549, %v540, 0
      %v587 = vsel %vm549, %v542, 0
      %v590 = vsel %vm549, %v544, 0
      %v593 = vsel %vm549, %v546, 0
      %v596 = vsel %vm549, %v548, 0
      %598 = vmatprep.subr.bf16.mxu0 0
      %599 = vmatpush1.bf16.xpose.msra.mxu0 %v596
      %600 = vmatprep.subr.bf16.mxu0 0
      %601 = vmatpush1.bf16.xpose.msra.mxu0 %v593
      %602 = vmatprep.subr.bf16.mxu0 0
      %603 = vmatpush1.bf16.xpose.msra.mxu0 %v590
      %604 = vmatprep.subr.bf16.mxu0 0
      %605 = vmatpush1.bf16.xpose.msra.mxu0 %v587
      %606 = vmatprep.subr.bf16.mxu0 0
      %607 = vmatpush1.bf16.xpose.msra.mxu0 %v584
      %608 = vmatprep.subr.bf16.mxu0 0
      %609 = vmatpush1.bf16.xpose.msra.mxu0 %v581
      %610 = vmatprep.subr.bf16.mxu0 0
      %611 = vmatpush1.bf16.xpose.msra.mxu0 %v578
      %612 = vmatprep.subr.bf16.mxu0 0
      %613 = vmatpush1.bf16.xpose.msra.mxu0 %v575
      %614 = vmatprep.subr.bf16.mxu0 0
      %615 = vmatpush2.bf16.xpose.msra.mxu0 0
      %616 = vmatprep.subr.bf16.mxu0 0
      %617 = vmatpush2.bf16.xpose.msra.mxu0 0
      %618 = vmatprep.subr.bf16.mxu0 0
      %619 = vmatpush2.bf16.xpose.msra.mxu0 0
      %620 = vmatprep.subr.bf16.mxu0 0
      %621 = vmatpush2.bf16.xpose.msra.mxu0 0
      %622 = vmatprep.subr.bf16.mxu0 0
      %623 = vmatpush2.bf16.xpose.msra.mxu0 0
      %624 = vmatprep.subr.bf16.mxu0 0
      %625 = vmatpush2.bf16.xpose.msra.mxu0 0
      %626 = vmatprep.subr.bf16.mxu0 0
      %627 = vmatpush2.bf16.xpose.msra.mxu0 0
      %628 = vmatprep.subr.bf16.mxu0 0
      %629 = vmatpush2.bf16.xpose.msra.mxu0 0
      %630 = vmatprep.mubr.bf16.mxu0 0
      %631 = vmatmul.mubr.bf16.gmra.mxu0 %v551
      %v632 = vpop.f32.mrf.mxu0
      %v633 = vadd.f32 0.0, %v632
      %v634 = vpop.f32.mrf.mxu0
      %v635 = vpop.f32.mrf.mxu0
      %v636 = vadd.f32 0.0, %v635
      %v637 = vpop.f32.mrf.mxu0
      %638 = vmatprep.mubr.bf16.mxu0 0
      %639 = vmatmul.mubr.bf16.gmra.mxu0 %v554
      %v640 = vpop.f32.mrf.mxu0
      %v641 = vadd.f32 0.0, %v640
      %v642 = vpop.f32.mrf.mxu0
      %v643 = vpop.f32.mrf.mxu0
      %v644 = vadd.f32 0.0, %v643
      %v645 = vpop.f32.mrf.mxu0
      %646 = vmatprep.mubr.bf16.mxu0 0
      %647 = vmatmul.mubr.bf16.gmra.mxu0 %v557
      %v648 = vpop.f32.mrf.mxu0
      %v649 = vadd.f32 0.0, %v648
      %v650 = vpop.f32.mrf.mxu0
      %v651 = vpop.f32.mrf.mxu0
      %v652 = vadd.f32 0.0, %v651
      %v653 = vpop.f32.mrf.mxu0
      %654 = vmatprep.mubr.bf16.mxu0 0
      %655 = vmatmul.mubr.bf16.gmra.mxu0 %v560
      %v656 = vpop.f32.mrf.mxu0
      %v657 = vadd.f32 0.0, %v656
      %v658 = vpop.f32.mrf.mxu0
      %v659 = vpop.f32.mrf.mxu0
      %v660 = vadd.f32 0.0, %v659
      %v661 = vpop.f32.mrf.mxu0
      %662 = vmatprep.mubr.bf16.mxu0 0
      %663 = vmatmul.mubr.bf16.gmra.mxu0 %v563
      %v664 = vpop.f32.mrf.mxu0
      %v665 = vadd.f32 0.0, %v664
      %v666 = vpop.f32.mrf.mxu0
      %v667 = vpop.f32.mrf.mxu0
      %v668 = vadd.f32 0.0, %v667
      %v669 = vpop.f32.mrf.mxu0
      %670 = vmatprep.mubr.bf16.mxu0 0
      %671 = vmatmul.mubr.bf16.gmra.mxu0 %v566
      %v672 = vpop.f32.mrf.mxu0
      %v673 = vadd.f32 0.0, %v672
      %v674 = vpop.f32.mrf.mxu0
      %v675 = vpop.f32.mrf.mxu0
      %v676 = vadd.f32 0.0, %v675
      %v677 = vpop.f32.mrf.mxu0
      %678 = vmatprep.mubr.bf16.mxu0 0
      %679 = vmatmul.mubr.bf16.gmra.mxu0 %v569
      %v680 = vpop.f32.mrf.mxu0
      %v681 = vadd.f32 0.0, %v680
      %v682 = vpop.f32.mrf.mxu0
      %v683 = vpop.f32.mrf.mxu0
      %v684 = vadd.f32 0.0, %v683
      %v685 = vpop.f32.mrf.mxu0
      %686 = vmatprep.mubr.bf16.mxu0 0
      %687 = vmatmul.mubr.bf16.gmra.mxu0 %v572
      %v688 = vpop.f32.mrf.mxu0
      %v689 = vadd.f32 0.0, %v688
      %v690 = vpop.f32.mrf.mxu0
      %v691 = vpop.f32.mrf.mxu0
      %v692 = vadd.f32 0.0, %v691
      %v693 = vpop.f32.mrf.mxu0
      %694 = vdwg.mxu0
      %v695 = vsel %vm476, 1, 0
      %vm696 = vcmp.eq.s32.totalorder %v695, 1
      %v697 = vsel %vm696, %v633, -1e+30
      %v698 = vsel %vm696, %v636, -1e+30
      %v699 = vsel %vm696, %v641, -1e+30
      %v700 = vsel %vm696, %v644, -1e+30
      %v701 = vsel %vm696, %v649, -1e+30
      %v702 = vsel %vm696, %v652, -1e+30
      %v703 = vsel %vm696, %v657, -1e+30
      %v704 = vsel %vm696, %v660, -1e+30
      %v705 = vsel %vm696, %v665, -1e+30
      %v706 = vsel %vm696, %v668, -1e+30
      %v707 = vsel %vm696, %v673, -1e+30
      %v708 = vsel %vm696, %v676, -1e+30
      %v709 = vsel %vm696, %v681, -1e+30
      %v710 = vsel %vm696, %v684, -1e+30
      %v711 = vsel %vm696, %v689, -1e+30
      %v712 = vsel %vm696, %v692, -1e+30
      %713 = vmax.xlane.f32.xlu0 %v697
      %v714 = vpop.xlane.xlu0 %713
      %715 = vmax.xlane.f32.xlu0 %v698
      %v716 = vpop.xlane.xlu0 %715
      %717 = vmax.xlane.f32.xlu0 %v699
      %v718 = vpop.xlane.xlu0 %717
      %719 = vmax.xlane.f32.xlu0 %v700
      %v720 = vpop.xlane.xlu0 %719
      %721 = vmax.xlane.f32.xlu0 %v701
      %v722 = vpop.xlane.xlu0 %721
      %723 = vmax.xlane.f32.xlu0 %v702
      %v724 = vpop.xlane.xlu0 %723
      %725 = vmax.xlane.f32.xlu0 %v703
      %v726 = vpop.xlane.xlu0 %725
      %727 = vmax.xlane.f32.xlu0 %v704
      %v728 = vpop.xlane.xlu0 %727
      %729 = vmax.xlane.f32.xlu0 %v705
      %v730 = vpop.xlane.xlu0 %729
      %731 = vmax.xlane.f32.xlu0 %v706
      %v732 = vpop.xlane.xlu0 %731
      %733 = vmax.xlane.f32.xlu0 %v707
      %v734 = vpop.xlane.xlu0 %733
      %735 = vmax.xlane.f32.xlu0 %v708
      %v736 = vpop.xlane.xlu0 %735
      %737 = vmax.xlane.f32.xlu0 %v709
      %v738 = vpop.xlane.xlu0 %737
      %739 = vmax.xlane.f32.xlu0 %v710
      %v740 = vpop.xlane.xlu0 %739
      %741 = vmax.xlane.f32.xlu0 %v711
      %v742 = vpop.xlane.xlu0 %741
      %743 = vmax.xlane.f32.xlu0 %v712
      %v744 = vpop.xlane.xlu0 %743
      %v745 = vsub.f32 %v697, %v714
      %v746 = vsub.f32 %v698, %v716
      %v747 = vsub.f32 %v699, %v718
      %v748 = vsub.f32 %v700, %v720
      %v749 = vsub.f32 %v701, %v722
      %v750 = vsub.f32 %v702, %v724
      %v751 = vsub.f32 %v703, %v726
      %v752 = vsub.f32 %v704, %v728
      %v753 = vsub.f32 %v705, %v730
      %v754 = vsub.f32 %v706, %v732
      %v755 = vsub.f32 %v707, %v734
      %v756 = vsub.f32 %v708, %v736
      %v757 = vsub.f32 %v709, %v738
      %v758 = vsub.f32 %v710, %v740
      %v759 = vsub.f32 %v711, %v742
      %v760 = vsub.f32 %v712, %v744
      %v761 = vmul.f32 %v745, 1.442695
      %v762 = vpow.pop %v761
      %v763 = vmul.f32 %v746, 1.442695
      %v764 = vpow.pop %v763
      %v765 = vmul.f32 %v747, 1.442695
      %v766 = vpow.pop %v765
      %v767 = vmul.f32 %v748, 1.442695
      %v768 = vpow.pop %v767
      %v769 = vmul.f32 %v749, 1.442695
      %v770 = vpow.pop %v769
      %v771 = vmul.f32 %v750, 1.442695
      %v772 = vpow.pop %v771
      %v773 = vmul.f32 %v751, 1.442695
      %v774 = vpow.pop %v773
      %v775 = vmul.f32 %v752, 1.442695
      %v776 = vpow.pop %v775
      %v777 = vmul.f32 %v753, 1.442695
      %v778 = vpow.pop %v777
      %v779 = vmul.f32 %v754, 1.442695
      %v780 = vpow.pop %v779
      %v781 = vmul.f32 %v755, 1.442695
      %v782 = vpow.pop %v781
      %v783 = vmul.f32 %v756, 1.442695
      %v784 = vpow.pop %v783
      %v785 = vmul.f32 %v757, 1.442695
      %v786 = vpow.pop %v785
      %v787 = vmul.f32 %v758, 1.442695
      %v788 = vpow.pop %v787
      %v789 = vmul.f32 %v759, 1.442695
      %v790 = vpow.pop %v789
      %v791 = vmul.f32 %v760, 1.442695
      %v792 = vpow.pop %v791
      %793 = vadd.xlane.f32.xlu0 %v762
      %v794 = vpop.xlane.xlu0 %793
      %795 = vadd.xlane.f32.xlu0 %v764
      %v796 = vpop.xlane.xlu0 %795
      %797 = vadd.xlane.f32.xlu0 %v766
      %v798 = vpop.xlane.xlu0 %797
      %799 = vadd.xlane.f32.xlu0 %v768
      %v800 = vpop.xlane.xlu0 %799
      %801 = vadd.xlane.f32.xlu0 %v770
      %v802 = vpop.xlane.xlu0 %801
      %803 = vadd.xlane.f32.xlu0 %v772
      %v804 = vpop.xlane.xlu0 %803
      %805 = vadd.xlane.f32.xlu0 %v774
      %v806 = vpop.xlane.xlu0 %805
      %807 = vadd.xlane.f32.xlu0 %v776
      %v808 = vpop.xlane.xlu0 %807
      %809 = vadd.xlane.f32.xlu0 %v778
      %v810 = vpop.xlane.xlu0 %809
      %811 = vadd.xlane.f32.xlu0 %v780
      %v812 = vpop.xlane.xlu0 %811
      %813 = vadd.xlane.f32.xlu0 %v782
      %v814 = vpop.xlane.xlu0 %813
      %815 = vadd.xlane.f32.xlu0 %v784
      %v816 = vpop.xlane.xlu0 %815
      %817 = vadd.xlane.f32.xlu0 %v786
      %v818 = vpop.xlane.xlu0 %817
      %819 = vadd.xlane.f32.xlu0 %v788
      %v820 = vpop.xlane.xlu0 %819
      %821 = vadd.xlane.f32.xlu0 %v790
      %v822 = vpop.xlane.xlu0 %821
      %823 = vadd.xlane.f32.xlu0 %v792
      %v824 = vpop.xlane.xlu0 %823
      %v825 = vrcp.pop %v794
      %v826 = vrcp.pop %v796
      %v827 = vrcp.pop %v798
      %v828 = vrcp.pop %v800
      %v829 = vrcp.pop %v802
      %v830 = vrcp.pop %v804
      %v831 = vrcp.pop %v806
      %v832 = vrcp.pop %v808
      %v833 = vrcp.pop %v810
      %v834 = vrcp.pop %v812
      %v835 = vrcp.pop %v814
      %v836 = vrcp.pop %v816
      %v837 = vrcp.pop %v818
      %v838 = vrcp.pop %v820
      %v839 = vrcp.pop %v822
      %v840 = vrcp.pop %v824
      %v841 = vpack.c.bf16 %v764, %v762
      %v842 = vpack.c.bf16 %v768, %v766
      %v843 = vpack.c.bf16 %v772, %v770
      %v844 = vpack.c.bf16 %v776, %v774
      %v845 = vpack.c.bf16 %v780, %v778
      %v846 = vpack.c.bf16 %v784, %v782
      %v847 = vpack.c.bf16 %v788, %v786
      %v848 = vpack.c.bf16 %v792, %v790
      %849 = vrot.lane.b32.xlu0 %v525, 64
      %v850 = vpop.permute.xlu0 %849
      %851 = vrot.lane.b32.xlu0 %v526, 64
      %v852 = vpop.permute.xlu0 %851
      %853 = vrot.lane.b32.xlu0 %v527, 64
      %v854 = vpop.permute.xlu0 %853
      %855 = vrot.lane.b32.xlu0 %v528, 64
      %v856 = vpop.permute.xlu0 %855
      %857 = vrot.lane.b32.xlu0 %v529, 64
      %v858 = vpop.permute.xlu0 %857
      %859 = vrot.lane.b32.xlu0 %v530, 64
      %v860 = vpop.permute.xlu0 %859
      %861 = vrot.lane.b32.xlu0 %v531, 64
      %v862 = vpop.permute.xlu0 %861
      %863 = vrot.lane.b32.xlu0 %v532, 64
      %v864 = vpop.permute.xlu0 %863
      %873 = vmatprep.subr.bf16.mxu0 0
      %874 = vmatpush1.bf16.msra.mxu0 %v864
      %875 = vmatprep.subr.bf16.mxu0 0
      %876 = vmatpush1.bf16.msra.mxu0 %v862
      %877 = vmatprep.subr.bf16.mxu0 0
      %878 = vmatpush1.bf16.msra.mxu0 %v860
      %879 = vmatprep.subr.bf16.mxu0 0
      %880 = vmatpush1.bf16.msra.mxu0 %v858
      %881 = vmatprep.subr.bf16.mxu0 0
      %882 = vmatpush1.bf16.msra.mxu0 %v856
      %883 = vmatprep.subr.bf16.mxu0 0
      %884 = vmatpush1.bf16.msra.mxu0 %v854
      %885 = vmatprep.subr.bf16.mxu0 0
      %886 = vmatpush1.bf16.msra.mxu0 %v852
      %887 = vmatprep.subr.bf16.mxu0 0
      %888 = vmatpush1.bf16.msra.mxu0 %v850
      %889 = vmatprep.subr.bf16.mxu0 0
      %890 = vmatpush2.bf16.msra.mxu0 0
      %891 = vmatprep.subr.bf16.mxu0 0
      %892 = vmatpush2.bf16.msra.mxu0 0
      %893 = vmatprep.subr.bf16.mxu0 0
      %894 = vmatpush2.bf16.msra.mxu0 0
      %895 = vmatprep.subr.bf16.mxu0 0
      %896 = vmatpush2.bf16.msra.mxu0 0
      %897 = vmatprep.subr.bf16.mxu0 0
      %898 = vmatpush2.bf16.msra.mxu0 0
      %899 = vmatprep.subr.bf16.mxu0 0
      %900 = vmatpush2.bf16.msra.mxu0 0
      %901 = vmatprep.subr.bf16.mxu0 0
      %902 = vmatpush2.bf16.msra.mxu0 0
      %903 = vmatprep.subr.bf16.mxu0 0
      %904 = vmatpush2.bf16.msra.mxu0 0
      %905 = vmatprep.mubr.bf16.mxu0 0
      %906 = vmatmul.mubr.bf16.gmra.mxu0 %v841
      %v907 = vpop.f32.mrf.mxu0
      %v908 = vadd.f32 0.0, %v907
      %v909 = vpop.f32.mrf.mxu0
      %v910 = vpop.f32.mrf.mxu0
      %v911 = vadd.f32 0.0, %v910
      %v912 = vpop.f32.mrf.mxu0
      %913 = vmatprep.mubr.bf16.mxu0 0
      %914 = vmatmul.mubr.bf16.gmra.mxu0 %v842
      %v915 = vpop.f32.mrf.mxu0
      %v916 = vadd.f32 0.0, %v915
      %v917 = vpop.f32.mrf.mxu0
      %v918 = vpop.f32.mrf.mxu0
      %v919 = vadd.f32 0.0, %v918
      %v920 = vpop.f32.mrf.mxu0
      %921 = vmatprep.mubr.bf16.mxu0 0
      %922 = vmatmul.mubr.bf16.gmra.mxu0 %v843
      %v923 = vpop.f32.mrf.mxu0
      %v924 = vadd.f32 0.0, %v923
      %v925 = vpop.f32.mrf.mxu0
      %v926 = vpop.f32.mrf.mxu0
      %v927 = vadd.f32 0.0, %v926
      %v928 = vpop.f32.mrf.mxu0
      %929 = vmatprep.mubr.bf16.mxu0 0
      %930 = vmatmul.mubr.bf16.gmra.mxu0 %v844
      %v931 = vpop.f32.mrf.mxu0
      %v932 = vadd.f32 0.0, %v931
      %v933 = vpop.f32.mrf.mxu0
      %v934 = vpop.f32.mrf.mxu0
      %v935 = vadd.f32 0.0, %v934
      %v936 = vpop.f32.mrf.mxu0
      %937 = vmatprep.mubr.bf16.mxu0 0
      %938 = vmatmul.mubr.bf16.gmra.mxu0 %v845
      %v939 = vpop.f32.mrf.mxu0
      %v940 = vadd.f32 0.0, %v939
      %v941 = vpop.f32.mrf.mxu0
      %v942 = vpop.f32.mrf.mxu0
      %v943 = vadd.f32 0.0, %v942
      %v944 = vpop.f32.mrf.mxu0
      %945 = vmatprep.mubr.bf16.mxu0 0
      %946 = vmatmul.mubr.bf16.gmra.mxu0 %v846
      %v947 = vpop.f32.mrf.mxu0
      %v948 = vadd.f32 0.0, %v947
      %v949 = vpop.f32.mrf.mxu0
      %v950 = vpop.f32.mrf.mxu0
      %v951 = vadd.f32 0.0, %v950
      %v952 = vpop.f32.mrf.mxu0
      %953 = vmatprep.mubr.bf16.mxu0 0
      %954 = vmatmul.mubr.bf16.gmra.mxu0 %v847
      %v955 = vpop.f32.mrf.mxu0
      %v956 = vadd.f32 0.0, %v955
      %v957 = vpop.f32.mrf.mxu0
      %v958 = vpop.f32.mrf.mxu0
      %v959 = vadd.f32 0.0, %v958
      %v960 = vpop.f32.mrf.mxu0
      %961 = vmatprep.mubr.bf16.mxu0 0
      %962 = vmatmul.mubr.bf16.gmra.mxu0 %v848
      %v963 = vpop.f32.mrf.mxu0
      %v964 = vadd.f32 0.0, %v963
      %v965 = vpop.f32.mrf.mxu0
      %v966 = vpop.f32.mrf.mxu0
      %v967 = vadd.f32 0.0, %v966
      %v968 = vpop.f32.mrf.mxu0
      %969 = vdwg.mxu0
      %v970 = vmul.f32 %v908, %v825
      %v971 = vmul.f32 %v911, %v826
      %v972 = vmul.f32 %v916, %v827
      %v973 = vmul.f32 %v919, %v828
      %v974 = vmul.f32 %v924, %v829
      %v975 = vmul.f32 %v927, %v830
      %v976 = vmul.f32 %v932, %v831
      %v977 = vmul.f32 %v935, %v832
      %v978 = vmul.f32 %v940, %v833
      %v979 = vmul.f32 %v943, %v834
      %v980 = vmul.f32 %v948, %v835
      %v981 = vmul.f32 %v951, %v836
      %v982 = vmul.f32 %v956, %v837
      %v983 = vmul.f32 %v959, %v838
      %v984 = vmul.f32 %v964, %v839
      %v985 = vmul.f32 %v967, %v840
      %v986 = vpack.c.bf16 %v971, %v970
      %v987 = vpack.c.bf16 %v973, %v972
      %v988 = vpack.c.bf16 %v975, %v974
      %v989 = vpack.c.bf16 %v977, %v976
      %v990 = vpack.c.bf16 %v979, %v978
      %v991 = vpack.c.bf16 %v981, %v980
      %v992 = vpack.c.bf16 %v983, %v982
      %v993 = vpack.c.bf16 %v985, %v984
      %v1002 = vunpack.c.l.b16 %v986
      %v1003 = vunpack.c.h.b16 %v986
      %v1004 = vunpack.c.l.b16 %v987
      %v1005 = vunpack.c.h.b16 %v987
      %v1006 = vunpack.c.l.b16 %v988
      %v1007 = vunpack.c.h.b16 %v988
      %v1008 = vunpack.c.l.b16 %v989
      %v1009 = vunpack.c.h.b16 %v989
      %v1010 = vunpack.c.l.b16 %v990
      %v1011 = vunpack.c.h.b16 %v990
      %v1012 = vunpack.c.l.b16 %v991
      %v1013 = vunpack.c.h.b16 %v991
      %v1014 = vunpack.c.l.b16 %v992
      %v1015 = vunpack.c.h.b16 %v992
      %v1016 = vunpack.c.l.b16 %v993
      %v1017 = vunpack.c.h.b16 %v993
      %v1018 = vpack.c.b16 %v1002, %v1002
      %v1019 = vpack.c.b16 %v1003, %v1003
      %v1020 = vpack.c.b16 %v1004, %v1004
      %v1021 = vpack.c.b16 %v1005, %v1005
      %v1022 = vpack.c.b16 %v1006, %v1006
      %v1023 = vpack.c.b16 %v1007, %v1007
      %v1024 = vpack.c.b16 %v1008, %v1008
      %v1025 = vpack.c.b16 %v1009, %v1009
      %v1026 = vpack.c.b16 %v1010, %v1010
      %v1027 = vpack.c.b16 %v1011, %v1011
      %v1028 = vpack.c.b16 %v1012, %v1012
      %v1029 = vpack.c.b16 %v1013, %v1013
      %v1030 = vpack.c.b16 %v1014, %v1014
      %v1031 = vpack.c.b16 %v1015, %v1015
      %v1032 = vpack.c.b16 %v1016, %v1016
      %v1033 = vpack.c.b16 %v1017, %v1017
      %vm1050 = vcmask 27648
      %1051 = vst.msk [vmem:[#allocation3] sm:$0xf] %vm1050, %v1018
      %1052 = vst.msk [vmem:[#allocation3 + $0x4] sm:$0xf] %vm1050, %v1019
      %1053 = vst.msk [vmem:[#allocation3 + $0x8] sm:$0xf] %vm1050, %v1020
      %1054 = vst.msk [vmem:[#allocation3 + $0xc] sm:$0xf] %vm1050, %v1021
      %1055 = vst.msk [vmem:[#allocation3 + $0x10] sm:$0xf] %vm1050, %v1022
      %1056 = vst.msk [vmem:[#allocation3 + $0x14] sm:$0xf] %vm1050, %v1023
      %1057 = vst.msk [vmem:[#allocation3 + $0x18] sm:$0xf] %vm1050, %v1024
      %1058 = vst.msk [vmem:[#allocation3 + $0x1c] sm:$0xf] %vm1050, %v1025
      %1059 = vst.msk [vmem:[#allocation3 + $0x20] sm:$0xf] %vm1050, %v1026
      %1060 = vst.msk [vmem:[#allocation3 + $0x24] sm:$0xf] %vm1050, %v1027
      %1061 = vst.msk [vmem:[#allocation3 + $0x28] sm:$0xf] %vm1050, %v1028
      %1062 = vst.msk [vmem:[#allocation3 + $0x2c] sm:$0xf] %vm1050, %v1029
      %1063 = vst.msk [vmem:[#allocation3 + $0x30] sm:$0xf] %vm1050, %v1030
      %1064 = vst.msk [vmem:[#allocation3 + $0x34] sm:$0xf] %vm1050, %v1031
      %1065 = vst.msk [vmem:[#allocation3 + $0x38] sm:$0xf] %vm1050, %v1032
      %1066 = vst.msk [vmem:[#allocation3 + $0x3c] sm:$0xf] %vm1050, %v1033
      %v1067 = vld [vmem:[#allocation2] sm:$0xf]
      %v1068 = vld [vmem:[#allocation2 + $0x4] sm:$0xf]
      %v1069 = vld [vmem:[#allocation2 + $0x8] sm:$0xf]
      %v1070 = vld [vmem:[#allocation2 + $0xc] sm:$0xf]
      %v1071 = vld [vmem:[#allocation2 + $0x10] sm:$0xf]
      %v1072 = vld [vmem:[#allocation2 + $0x14] sm:$0xf]
      %v1073 = vld [vmem:[#allocation2 + $0x18] sm:$0xf]
      %v1074 = vld [vmem:[#allocation2 + $0x1c] sm:$0xf]
      %v1075 = vld [vmem:[#allocation2 + $0x20] sm:$0xf]
      %v1076 = vld [vmem:[#allocation2 + $0x24] sm:$0xf]
      %v1077 = vld [vmem:[#allocation2 + $0x28] sm:$0xf]
      %v1078 = vld [vmem:[#allocation2 + $0x2c] sm:$0xf]
      %v1079 = vld [vmem:[#allocation2 + $0x30] sm:$0xf]
      %v1080 = vld [vmem:[#allocation2 + $0x34] sm:$0xf]
      %v1081 = vld [vmem:[#allocation2 + $0x38] sm:$0xf]
      %v1082 = vld [vmem:[#allocation2 + $0x3c] sm:$0xf]
      %v1099 = vunpack.c.l.b16 %v1067
      %v1100 = vunpack.c.l.b16 %v1068
      %v1101 = vunpack.c.l.b16 %v1069
      %v1102 = vunpack.c.l.b16 %v1070
      %v1103 = vunpack.c.l.b16 %v1071
      %v1104 = vunpack.c.l.b16 %v1072
      %v1105 = vunpack.c.l.b16 %v1073
      %v1106 = vunpack.c.l.b16 %v1074
      %v1107 = vunpack.c.l.b16 %v1075
      %v1108 = vunpack.c.l.b16 %v1076
      %v1109 = vunpack.c.l.b16 %v1077
      %v1110 = vunpack.c.l.b16 %v1078
      %v1111 = vunpack.c.l.b16 %v1079
      %v1112 = vunpack.c.l.b16 %v1080
      %v1113 = vunpack.c.l.b16 %v1081
      %v1114 = vunpack.c.l.b16 %v1082
      %v1115 = vpack.c.b16 %v1100, %v1099
      %v1116 = vpack.c.b16 %v1102, %v1101
      %v1117 = vpack.c.b16 %v1104, %v1103
      %v1118 = vpack.c.b16 %v1106, %v1105
      %v1119 = vpack.c.b16 %v1108, %v1107
      %v1120 = vpack.c.b16 %v1110, %v1109
      %v1121 = vpack.c.b16 %v1112, %v1111
      %v1122 = vpack.c.b16 %v1114, %v1113
      %1123 = vrot.lane.b32.xlu0 %v1115, 124
      %v1124 = vpop.permute.xlu0 %1123
      %1125 = vrot.lane.b32.xlu0 %v1116, 124
      %v1126 = vpop.permute.xlu0 %1125
      %1127 = vrot.lane.b32.xlu0 %v1117, 124
      %v1128 = vpop.permute.xlu0 %1127
      %1129 = vrot.lane.b32.xlu0 %v1118, 124
      %v1130 = vpop.permute.xlu0 %1129
      %1131 = vrot.lane.b32.xlu0 %v1119, 124
      %v1132 = vpop.permute.xlu0 %1131
      %1133 = vrot.lane.b32.xlu0 %v1120, 124
      %v1134 = vpop.permute.xlu0 %1133
      %1135 = vrot.lane.b32.xlu0 %v1121, 124
      %v1136 = vpop.permute.xlu0 %1135
      %1137 = vrot.lane.b32.xlu0 %v1122, 124
      %v1138 = vpop.permute.xlu0 %1137
      %1139 = vrot.lane.b32.xlu0 %v1115, 92
      %v1140 = vpop.permute.xlu0 %1139
      %1141 = vrot.lane.b32.xlu0 %v1116, 92
      %v1142 = vpop.permute.xlu0 %1141
      %1143 = vrot.lane.b32.xlu0 %v1117, 92
      %v1144 = vpop.permute.xlu0 %1143
      %1145 = vrot.lane.b32.xlu0 %v1118, 92
      %v1146 = vpop.permute.xlu0 %1145
      %1147 = vrot.lane.b32.xlu0 %v1119, 92
      %v1148 = vpop.permute.xlu0 %1147
      %1149 = vrot.lane.b32.xlu0 %v1120, 92
      %v1150 = vpop.permute.xlu0 %1149
      %1151 = vrot.lane.b32.xlu0 %v1121, 92
      %v1152 = vpop.permute.xlu0 %1151
      %1153 = vrot.lane.b32.xlu0 %v1122, 92
      %v1154 = vpop.permute.xlu0 %1153
      %v1156 = vsel %vm549, %v1124, 0
      %v1159 = vsel %vm549, %v1126, 0
      %v1162 = vsel %vm549, %v1128, 0
      %v1165 = vsel %vm549, %v1130, 0
      %v1168 = vsel %vm549, %v1132, 0
      %v1171 = vsel %vm549, %v1134, 0
      %v1174 = vsel %vm549, %v1136, 0
      %v1177 = vsel %vm549, %v1138, 0
      %v1180 = vsel %vm549, %v1140, 0
      %v1183 = vsel %vm549, %v1142, 0
      %v1186 = vsel %vm549, %v1144, 0
      %v1189 = vsel %vm549, %v1146, 0
      %v1192 = vsel %vm549, %v1148, 0
      %v1195 = vsel %vm549, %v1150, 0
      %v1198 = vsel %vm549, %v1152, 0
      %v1201 = vsel %vm549, %v1154, 0
      %1203 = vmatprep.subr.bf16.mxu0 0
      %1204 = vmatpush1.bf16.xpose.msra.mxu0 %v1201
      %1205 = vmatprep.subr.bf16.mxu0 0
      %1206 = vmatpush1.bf16.xpose.msra.mxu0 %v1198
      %1207 = vmatprep.subr.bf16.mxu0 0
      %1208 = vmatpush1.bf16.xpose.msra.mxu0 %v1195
      %1209 = vmatprep.subr.bf16.mxu0 0
      %1210 = vmatpush1.bf16.xpose.msra.mxu0 %v1192
      %1211 = vmatprep.subr.bf16.mxu0 0
      %1212 = vmatpush1.bf16.xpose.msra.mxu0 %v1189
      %1213 = vmatprep.subr.bf16.mxu0 0
      %1214 = vmatpush1.bf16.xpose.msra.mxu0 %v1186
      %1215 = vmatprep.subr.bf16.mxu0 0
      %1216 = vmatpush1.bf16.xpose.msra.mxu0 %v1183
      %1217 = vmatprep.subr.bf16.mxu0 0
      %1218 = vmatpush1.bf16.xpose.msra.mxu0 %v1180
      %1219 = vmatprep.subr.bf16.mxu0 0
      %1220 = vmatpush2.bf16.xpose.msra.mxu0 0
      %1221 = vmatprep.subr.bf16.mxu0 0
      %1222 = vmatpush2.bf16.xpose.msra.mxu0 0
      %1223 = vmatprep.subr.bf16.mxu0 0
      %1224 = vmatpush2.bf16.xpose.msra.mxu0 0
      %1225 = vmatprep.subr.bf16.mxu0 0
      %1226 = vmatpush2.bf16.xpose.msra.mxu0 0
      %1227 = vmatprep.subr.bf16.mxu0 0
      %1228 = vmatpush2.bf16.xpose.msra.mxu0 0
      %1229 = vmatprep.subr.bf16.mxu0 0
      %1230 = vmatpush2.bf16.xpose.msra.mxu0 0
      %1231 = vmatprep.subr.bf16.mxu0 0
      %1232 = vmatpush2.bf16.xpose.msra.mxu0 0
      %1233 = vmatprep.subr.bf16.mxu0 0
      %1234 = vmatpush2.bf16.xpose.msra.mxu0 0
      %1235 = vmatprep.mubr.bf16.mxu0 0
      %1236 = vmatmul.mubr.bf16.gmra.mxu0 %v1156
      %v1237 = vpop.f32.mrf.mxu0
      %v1238 = vadd.f32 0.0, %v1237
      %v1239 = vpop.f32.mrf.mxu0
      %v1240 = vpop.f32.mrf.mxu0
      %v1241 = vadd.f32 0.0, %v1240
      %v1242 = vpop.f32.mrf.mxu0
      %1243 = vmatprep.mubr.bf16.mxu0 0
      %1244 = vmatmul.mubr.bf16.gmra.mxu0 %v1159
      %v1245 = vpop.f32.mrf.mxu0
      %v1246 = vadd.f32 0.0, %v1245
      %v1247 = vpop.f32.mrf.mxu0
      %v1248 = vpop.f32.mrf.mxu0
      %v1249 = vadd.f32 0.0, %v1248
      %v1250 = vpop.f32.mrf.mxu0
      %1251 = vmatprep.mubr.bf16.mxu0 0
      %1252 = vmatmul.mubr.bf16.gmra.mxu0 %v1162
      %v1253 = vpop.f32.mrf.mxu0
      %v1254 = vadd.f32 0.0, %v1253
      %v1255 = vpop.f32.mrf.mxu0
      %v1256 = vpop.f32.mrf.mxu0
      %v1257 = vadd.f32 0.0, %v1256
      %v1258 = vpop.f32.mrf.mxu0
      %1259 = vmatprep.mubr.bf16.mxu0 0
      %1260 = vmatmul.mubr.bf16.gmra.mxu0 %v1165
      %v1261 = vpop.f32.mrf.mxu0
      %v1262 = vadd.f32 0.0, %v1261
      %v1263 = vpop.f32.mrf.mxu0
      %v1264 = vpop.f32.mrf.mxu0
      %v1265 = vadd.f32 0.0, %v1264
      %v1266 = vpop.f32.mrf.mxu0
      %1267 = vmatprep.mubr.bf16.mxu0 0
      %1268 = vmatmul.mubr.bf16.gmra.mxu0 %v1168
      %v1269 = vpop.f32.mrf.mxu0
      %v1270 = vadd.f32 0.0, %v1269
      %v1271 = vpop.f32.mrf.mxu0
      %v1272 = vpop.f32.mrf.mxu0
      %v1273 = vadd.f32 0.0, %v1272
      %v1274 = vpop.f32.mrf.mxu0
      %1275 = vmatprep.mubr.bf16.mxu0 0
      %1276 = vmatmul.mubr.bf16.gmra.mxu0 %v1171
      %v1277 = vpop.f32.mrf.mxu0
      %v1278 = vadd.f32 0.0, %v1277
      %v1279 = vpop.f32.mrf.mxu0
      %v1280 = vpop.f32.mrf.mxu0
      %v1281 = vadd.f32 0.0, %v1280
      %v1282 = vpop.f32.mrf.mxu0
      %1283 = vmatprep.mubr.bf16.mxu0 0
      %1284 = vmatmul.mubr.bf16.gmra.mxu0 %v1174
      %v1285 = vpop.f32.mrf.mxu0
      %v1286 = vadd.f32 0.0, %v1285
      %v1287 = vpop.f32.mrf.mxu0
      %v1288 = vpop.f32.mrf.mxu0
      %v1289 = vadd.f32 0.0, %v1288
      %v1290 = vpop.f32.mrf.mxu0
      %1291 = vmatprep.mubr.bf16.mxu0 0
      %1292 = vmatmul.mubr.bf16.gmra.mxu0 %v1177
      %v1293 = vpop.f32.mrf.mxu0
      %v1294 = vadd.f32 0.0, %v1293
      %v1295 = vpop.f32.mrf.mxu0
      %v1296 = vpop.f32.mrf.mxu0
      %v1297 = vadd.f32 0.0, %v1296
      %v1298 = vpop.f32.mrf.mxu0
      %1299 = vdwg.mxu0
      %v1300 = vsel %vm696, %v1238, -1e+30
      %v1301 = vsel %vm696, %v1241, -1e+30
      %v1302 = vsel %vm696, %v1246, -1e+30
      %v1303 = vsel %vm696, %v1249, -1e+30
      %v1304 = vsel %vm696, %v1254, -1e+30
      %v1305 = vsel %vm696, %v1257, -1e+30
      %v1306 = vsel %vm696, %v1262, -1e+30
      %v1307 = vsel %vm696, %v1265, -1e+30
      %v1308 = vsel %vm696, %v1270, -1e+30
      %v1309 = vsel %vm696, %v1273, -1e+30
      %v1310 = vsel %vm696, %v1278, -1e+30
      %v1311 = vsel %vm696, %v1281, -1e+30
      %v1312 = vsel %vm696, %v1286, -1e+30
      %v1313 = vsel %vm696, %v1289, -1e+30
      %v1314 = vsel %vm696, %v1294, -1e+30
      %v1315 = vsel %vm696, %v1297, -1e+30
      %1316 = vmax.xlane.f32.xlu0 %v1300
      %v1317 = vpop.xlane.xlu0 %1316
      %1318 = vmax.xlane.f32.xlu0 %v1301
      %v1319 = vpop.xlane.xlu0 %1318
      %1320 = vmax.xlane.f32.xlu0 %v1302
      %v1321 = vpop.xlane.xlu0 %1320
      %1322 = vmax.xlane.f32.xlu0 %v1303
      %v1323 = vpop.xlane.xlu0 %1322
      %1324 = vmax.xlane.f32.xlu0 %v1304
      %v1325 = vpop.xlane.xlu0 %1324
      %1326 = vmax.xlane.f32.xlu0 %v1305
      %v1327 = vpop.xlane.xlu0 %1326
      %1328 = vmax.xlane.f32.xlu0 %v1306
      %v1329 = vpop.xlane.xlu0 %1328
      %1330 = vmax.xlane.f32.xlu0 %v1307
      %v1331 = vpop.xlane.xlu0 %1330
      %1332 = vmax.xlane.f32.xlu0 %v1308
      %v1333 = vpop.xlane.xlu0 %1332
      %1334 = vmax.xlane.f32.xlu0 %v1309
      %v1335 = vpop.xlane.xlu0 %1334
      %1336 = vmax.xlane.f32.xlu0 %v1310
      %v1337 = vpop.xlane.xlu0 %1336
      %1338 = vmax.xlane.f32.xlu0 %v1311
      %v1339 = vpop.xlane.xlu0 %1338
      %1340 = vmax.xlane.f32.xlu0 %v1312
      %v1341 = vpop.xlane.xlu0 %1340
      %1342 = vmax.xlane.f32.xlu0 %v1313
      %v1343 = vpop.xlane.xlu0 %1342
      %1344 = vmax.xlane.f32.xlu0 %v1314
      %v1345 = vpop.xlane.xlu0 %1344
      %1346 = vmax.xlane.f32.xlu0 %v1315
      %v1347 = vpop.xlane.xlu0 %1346
      %v1348 = vsub.f32 %v1300, %v1317
      %v1349 = vsub.f32 %v1301, %v1319
      %v1350 = vsub.f32 %v1302, %v1321
      %v1351 = vsub.f32 %v1303, %v1323
      %v1352 = vsub.f32 %v1304, %v1325
      %v1353 = vsub.f32 %v1305, %v1327
      %v1354 = vsub.f32 %v1306, %v1329
      %v1355 = vsub.f32 %v1307, %v1331
      %v1356 = vsub.f32 %v1308, %v1333
      %v1357 = vsub.f32 %v1309, %v1335
      %v1358 = vsub.f32 %v1310, %v1337
      %v1359 = vsub.f32 %v1311, %v1339
      %v1360 = vsub.f32 %v1312, %v1341
      %v1361 = vsub.f32 %v1313, %v1343
      %v1362 = vsub.f32 %v1314, %v1345
      %v1363 = vsub.f32 %v1315, %v1347
      %v1364 = vmul.f32 %v1348, 1.442695
      %v1365 = vpow.pop %v1364
      %v1366 = vmul.f32 %v1349, 1.442695
      %v1367 = vpow.pop %v1366
      %v1368 = vmul.f32 %v1350, 1.442695
      %v1369 = vpow.pop %v1368
      %v1370 = vmul.f32 %v1351, 1.442695
      %v1371 = vpow.pop %v1370
      %v1372 = vmul.f32 %v1352, 1.442695
      %v1373 = vpow.pop %v1372
      %v1374 = vmul.f32 %v1353, 1.442695
      %v1375 = vpow.pop %v1374
      %v1376 = vmul.f32 %v1354, 1.442695
      %v1377 = vpow.pop %v1376
      %v1378 = vmul.f32 %v1355, 1.442695
      %v1379 = vpow.pop %v1378
      %v1380 = vmul.f32 %v1356, 1.442695
      %v1381 = vpow.pop %v1380
      %v1382 = vmul.f32 %v1357, 1.442695
      %v1383 = vpow.pop %v1382
      %v1384 = vmul.f32 %v1358, 1.442695
      %v1385 = vpow.pop %v1384
      %v1386 = vmul.f32 %v1359, 1.442695
      %v1387 = vpow.pop %v1386
      %v1388 = vmul.f32 %v1360, 1.442695
      %v1389 = vpow.pop %v1388
      %v1390 = vmul.f32 %v1361, 1.442695
      %v1391 = vpow.pop %v1390
      %v1392 = vmul.f32 %v1362, 1.442695
      %v1393 = vpow.pop %v1392
      %v1394 = vmul.f32 %v1363, 1.442695
      %v1395 = vpow.pop %v1394
      %1396 = vadd.xlane.f32.xlu0 %v1365
      %v1397 = vpop.xlane.xlu0 %1396
      %1398 = vadd.xlane.f32.xlu0 %v1367
      %v1399 = vpop.xlane.xlu0 %1398
      %1400 = vadd.xlane.f32.xlu0 %v1369
      %v1401 = vpop.xlane.xlu0 %1400
      %1402 = vadd.xlane.f32.xlu0 %v1371
      %v1403 = vpop.xlane.xlu0 %1402
      %1404 = vadd.xlane.f32.xlu0 %v1373
      %v1405 = vpop.xlane.xlu0 %1404
      %1406 = vadd.xlane.f32.xlu0 %v1375
      %v1407 = vpop.xlane.xlu0 %1406
      %1408 = vadd.xlane.f32.xlu0 %v1377
      %v1409 = vpop.xlane.xlu0 %1408
      %1410 = vadd.xlane.f32.xlu0 %v1379
      %v1411 = vpop.xlane.xlu0 %1410
      %1412 = vadd.xlane.f32.xlu0 %v1381
      %v1413 = vpop.xlane.xlu0 %1412
      %1414 = vadd.xlane.f32.xlu0 %v1383
      %v1415 = vpop.xlane.xlu0 %1414
      %1416 = vadd.xlane.f32.xlu0 %v1385
      %v1417 = vpop.xlane.xlu0 %1416
      %1418 = vadd.xlane.f32.xlu0 %v1387
      %v1419 = vpop.xlane.xlu0 %1418
      %1420 = vadd.xlane.f32.xlu0 %v1389
      %v1421 = vpop.xlane.xlu0 %1420
      %1422 = vadd.xlane.f32.xlu0 %v1391
      %v1423 = vpop.xlane.xlu0 %1422
      %1424 = vadd.xlane.f32.xlu0 %v1393
      %v1425 = vpop.xlane.xlu0 %1424
      %1426 = vadd.xlane.f32.xlu0 %v1395
      %v1427 = vpop.xlane.xlu0 %1426
      %v1428 = vrcp.pop %v1397
      %v1429 = vrcp.pop %v1399
      %v1430 = vrcp.pop %v1401
      %v1431 = vrcp.pop %v1403
      %v1432 = vrcp.pop %v1405
      %v1433 = vrcp.pop %v1407
      %v1434 = vrcp.pop %v1409
      %v1435 = vrcp.pop %v1411
      %v1436 = vrcp.pop %v1413
      %v1437 = vrcp.pop %v1415
      %v1438 = vrcp.pop %v1417
      %v1439 = vrcp.pop %v1419
      %v1440 = vrcp.pop %v1421
      %v1441 = vrcp.pop %v1423
      %v1442 = vrcp.pop %v1425
      %v1443 = vrcp.pop %v1427
      %v1444 = vpack.c.bf16 %v1367, %v1365
      %v1445 = vpack.c.bf16 %v1371, %v1369
      %v1446 = vpack.c.bf16 %v1375, %v1373
      %v1447 = vpack.c.bf16 %v1379, %v1377
      %v1448 = vpack.c.bf16 %v1383, %v1381
      %v1449 = vpack.c.bf16 %v1387, %v1385
      %v1450 = vpack.c.bf16 %v1391, %v1389
      %v1451 = vpack.c.bf16 %v1395, %v1393
      %1452 = vrot.lane.b32.xlu0 %v1115, 60
      %v1453 = vpop.permute.xlu0 %1452
      %1454 = vrot.lane.b32.xlu0 %v1116, 60
      %v1455 = vpop.permute.xlu0 %1454
      %1456 = vrot.lane.b32.xlu0 %v1117, 60
      %v1457 = vpop.permute.xlu0 %1456
      %1458 = vrot.lane.b32.xlu0 %v1118, 60
      %v1459 = vpop.permute.xlu0 %1458
      %1460 = vrot.lane.b32.xlu0 %v1119, 60
      %v1461 = vpop.permute.xlu0 %1460
      %1462 = vrot.lane.b32.xlu0 %v1120, 60
      %v1463 = vpop.permute.xlu0 %1462
      %1464 = vrot.lane.b32.xlu0 %v1121, 60
      %v1465 = vpop.permute.xlu0 %1464
      %1466 = vrot.lane.b32.xlu0 %v1122, 60
      %v1467 = vpop.permute.xlu0 %1466
      %1476 = vmatprep.subr.bf16.mxu0 0
      %1477 = vmatpush1.bf16.msra.mxu0 %v1467
      %1478 = vmatprep.subr.bf16.mxu0 0
      %1479 = vmatpush1.bf16.msra.mxu0 %v1465
      %1480 = vmatprep.subr.bf16.mxu0 0
      %1481 = vmatpush1.bf16.msra.mxu0 %v1463
      %1482 = vmatprep.subr.bf16.mxu0 0
      %1483 = vmatpush1.bf16.msra.mxu0 %v1461
      %1484 = vmatprep.subr.bf16.mxu0 0
      %1485 = vmatpush1.bf16.msra.mxu0 %v1459
      %1486 = vmatprep.subr.bf16.mxu0 0
      %1487 = vmatpush1.bf16.msra.mxu0 %v1457
      %1488 = vmatprep.subr.bf16.mxu0 0
      %1489 = vmatpush1.bf16.msra.mxu0 %v1455
      %1490 = vmatprep.subr.bf16.mxu0 0
      %1491 = vmatpush1.bf16.msra.mxu0 %v1453
      %1492 = vmatprep.subr.bf16.mxu0 0
      %1493 = vmatpush2.bf16.msra.mxu0 0
      %1494 = vmatprep.subr.bf16.mxu0 0
      %1495 = vmatpush2.bf16.msra.mxu0 0
      %1496 = vmatprep.subr.bf16.mxu0 0
      %1497 = vmatpush2.bf16.msra.mxu0 0
      %1498 = vmatprep.subr.bf16.mxu0 0
      %1499 = vmatpush2.bf16.msra.mxu0 0
      %1500 = vmatprep.subr.bf16.mxu0 0
      %1501 = vmatpush2.bf16.msra.mxu0 0
      %1502 = vmatprep.subr.bf16.mxu0 0
      %1503 = vmatpush2.bf16.msra.mxu0 0
      %1504 = vmatprep.subr.bf16.mxu0 0
      %1505 = vmatpush2.bf16.msra.mxu0 0
      %1506 = vmatprep.subr.bf16.mxu0 0
      %1507 = vmatpush2.bf16.msra.mxu0 0
      %1508 = vmatprep.mubr.bf16.mxu0 0
      %1509 = vmatmul.mubr.bf16.gmra.mxu0 %v1444
      %v1510 = vpop.f32.mrf.mxu0
      %v1511 = vadd.f32 0.0, %v1510
      %v1512 = vpop.f32.mrf.mxu0
      %v1513 = vpop.f32.mrf.mxu0
      %v1514 = vadd.f32 0.0, %v1513
      %v1515 = vpop.f32.mrf.mxu0
      %1516 = vmatprep.mubr.bf16.mxu0 0
      %1517 = vmatmul.mubr.bf16.gmra.mxu0 %v1445
      %v1518 = vpop.f32.mrf.mxu0
      %v1519 = vadd.f32 0.0, %v1518
      %v1520 = vpop.f32.mrf.mxu0
      %v1521 = vpop.f32.mrf.mxu0
      %v1522 = vadd.f32 0.0, %v1521
      %v1523 = vpop.f32.mrf.mxu0
      %1524 = vmatprep.mubr.bf16.mxu0 0
      %1525 = vmatmul.mubr.bf16.gmra.mxu0 %v1446
      %v1526 = vpop.f32.mrf.mxu0
      %v1527 = vadd.f32 0.0, %v1526
      %v1528 = vpop.f32.mrf.mxu0
      %v1529 = vpop.f32.mrf.mxu0
      %v1530 = vadd.f32 0.0, %v1529
      %v1531 = vpop.f32.mrf.mxu0
      %1532 = vmatprep.mubr.bf16.mxu0 0
      %1533 = vmatmul.mubr.bf16.gmra.mxu0 %v1447
      %v1534 = vpop.f32.mrf.mxu0
      %v1535 = vadd.f32 0.0, %v1534
      %v1536 = vpop.f32.mrf.mxu0
      %v1537 = vpop.f32.mrf.mxu0
      %v1538 = vadd.f32 0.0, %v1537
      %v1539 = vpop.f32.mrf.mxu0
      %1540 = vmatprep.mubr.bf16.mxu0 0
      %1541 = vmatmul.mubr.bf16.gmra.mxu0 %v1448
      %v1542 = vpop.f32.mrf.mxu0
      %v1543 = vadd.f32 0.0, %v1542
      %v1544 = vpop.f32.mrf.mxu0
      %v1545 = vpop.f32.mrf.mxu0
      %v1546 = vadd.f32 0.0, %v1545
      %v1547 = vpop.f32.mrf.mxu0
      %1548 = vmatprep.mubr.bf16.mxu0 0
      %1549 = vmatmul.mubr.bf16.gmra.mxu0 %v1449
      %v1550 = vpop.f32.mrf.mxu0
      %v1551 = vadd.f32 0.0, %v1550
      %v1552 = vpop.f32.mrf.mxu0
      %v1553 = vpop.f32.mrf.mxu0
      %v1554 = vadd.f32 0.0, %v1553
      %v1555 = vpop.f32.mrf.mxu0
      %1556 = vmatprep.mubr.bf16.mxu0 0
      %1557 = vmatmul.mubr.bf16.gmra.mxu0 %v1450
      %v1558 = vpop.f32.mrf.mxu0
      %v1559 = vadd.f32 0.0, %v1558
      %v1560 = vpop.f32.mrf.mxu0
      %v1561 = vpop.f32.mrf.mxu0
      %v1562 = vadd.f32 0.0, %v1561
      %v1563 = vpop.f32.mrf.mxu0
      %1564 = vmatprep.mubr.bf16.mxu0 0
      %1565 = vmatmul.mubr.bf16.gmra.mxu0 %v1451
      %v1566 = vpop.f32.mrf.mxu0
      %v1567 = vadd.f32 0.0, %v1566
      %v1568 = vpop.f32.mrf.mxu0
      %v1569 = vpop.f32.mrf.mxu0
      %v1570 = vadd.f32 0.0, %v1569
      %v1571 = vpop.f32.mrf.mxu0
      %1572 = vdwg.mxu0
      %v1573 = vmul.f32 %v1511, %v1428
      %v1574 = vmul.f32 %v1514, %v1429
      %v1575 = vmul.f32 %v1519, %v1430
      %v1576 = vmul.f32 %v1522, %v1431
      %v1577 = vmul.f32 %v1527, %v1432
      %v1578 = vmul.f32 %v1530, %v1433
      %v1579 = vmul.f32 %v1535, %v1434
      %v1580 = vmul.f32 %v1538, %v1435
      %v1581 = vmul.f32 %v1543, %v1436
      %v1582 = vmul.f32 %v1546, %v1437
      %v1583 = vmul.f32 %v1551, %v1438
      %v1584 = vmul.f32 %v1554, %v1439
      %v1585 = vmul.f32 %v1559, %v1440
      %v1586 = vmul.f32 %v1562, %v1441
      %v1587 = vmul.f32 %v1567, %v1442
      %v1588 = vmul.f32 %v1570, %v1443
      %v1589 = vpack.c.bf16 %v1574, %v1573
      %v1590 = vpack.c.bf16 %v1576, %v1575
      %v1591 = vpack.c.bf16 %v1578, %v1577
      %v1592 = vpack.c.bf16 %v1580, %v1579
      %v1593 = vpack.c.bf16 %v1582, %v1581
      %v1594 = vpack.c.bf16 %v1584, %v1583
      %v1595 = vpack.c.bf16 %v1586, %v1585
      %v1596 = vpack.c.bf16 %v1588, %v1587
      %v1605 = vunpack.c.l.b16 %v1589
      %v1606 = vunpack.c.h.b16 %v1589
      %v1607 = vunpack.c.l.b16 %v1590
      %v1608 = vunpack.c.h.b16 %v1590
      %v1609 = vunpack.c.l.b16 %v1591
      %v1610 = vunpack.c.h.b16 %v1591
      %v1611 = vunpack.c.l.b16 %v1592
      %v1612 = vunpack.c.h.b16 %v1592
      %v1613 = vunpack.c.l.b16 %v1593
      %v1614 = vunpack.c.h.b16 %v1593
      %v1615 = vunpack.c.l.b16 %v1594
      %v1616 = vunpack.c.h.b16 %v1594
      %v1617 = vunpack.c.l.b16 %v1595
      %v1618 = vunpack.c.h.b16 %v1595
      %v1619 = vunpack.c.l.b16 %v1596
      %v1620 = vunpack.c.h.b16 %v1596
      %v1621 = vpack.c.b16 %v1605, %v1605
      %v1622 = vpack.c.b16 %v1606, %v1606
      %v1623 = vpack.c.b16 %v1607, %v1607
      %v1624 = vpack.c.b16 %v1608, %v1608
      %v1625 = vpack.c.b16 %v1609, %v1609
      %v1626 = vpack.c.b16 %v1610, %v1610
      %v1627 = vpack.c.b16 %v1611, %v1611
      %v1628 = vpack.c.b16 %v1612, %v1612
      %v1629 = vpack.c.b16 %v1613, %v1613
      %v1630 = vpack.c.b16 %v1614, %v1614
      %v1631 = vpack.c.b16 %v1615, %v1615
      %v1632 = vpack.c.b16 %v1616, %v1616
      %v1633 = vpack.c.b16 %v1617, %v1617
      %v1634 = vpack.c.b16 %v1618, %v1618
      %v1635 = vpack.c.b16 %v1619, %v1619
      %v1636 = vpack.c.b16 %v1620, %v1620
      %1637 = vrot.lane.b32.xlu0 %v1621, 4
      %v1638 = vpop.permute.xlu0 %1637
      %1639 = vrot.lane.b32.xlu0 %v1622, 4
      %v1640 = vpop.permute.xlu0 %1639
      %1641 = vrot.lane.b32.xlu0 %v1623, 4
      %v1642 = vpop.permute.xlu0 %1641
      %1643 = vrot.lane.b32.xlu0 %v1624, 4
      %v1644 = vpop.permute.xlu0 %1643
      %1645 = vrot.lane.b32.xlu0 %v1625, 4
      %v1646 = vpop.permute.xlu0 %1645
      %1647 = vrot.lane.b32.xlu0 %v1626, 4
      %v1648 = vpop.permute.xlu0 %1647
      %1649 = vrot.lane.b32.xlu0 %v1627, 4
      %v1650 = vpop.permute.xlu0 %1649
      %1651 = vrot.lane.b32.xlu0 %v1628, 4
      %v1652 = vpop.permute.xlu0 %1651
      %1653 = vrot.lane.b32.xlu0 %v1629, 4
      %v1654 = vpop.permute.xlu0 %1653
      %1655 = vrot.lane.b32.xlu0 %v1630, 4
      %v1656 = vpop.permute.xlu0 %1655
      %1657 = vrot.lane.b32.xlu0 %v1631, 4
      %v1658 = vpop.permute.xlu0 %1657
      %1659 = vrot.lane.b32.xlu0 %v1632, 4
      %v1660 = vpop.permute.xlu0 %1659
      %1661 = vrot.lane.b32.xlu0 %v1633, 4
      %v1662 = vpop.permute.xlu0 %1661
      %1663 = vrot.lane.b32.xlu0 %v1634, 4
      %v1664 = vpop.permute.xlu0 %1663
      %1665 = vrot.lane.b32.xlu0 %v1635, 4
      %v1666 = vpop.permute.xlu0 %1665
      %1667 = vrot.lane.b32.xlu0 %v1636, 4
      %v1668 = vpop.permute.xlu0 %1667
      %vm1685 = vcmask 60448
      %1686 = vst.msk [vmem:[#allocation3] sm:$0xf] %vm1685, %v1638
      %1687 = vst.msk [vmem:[#allocation3 + $0x4] sm:$0xf] %vm1685, %v1640
      %1688 = vst.msk [vmem:[#allocation3 + $0x8] sm:$0xf] %vm1685, %v1642
      %1689 = vst.msk [vmem:[#allocation3 + $0xc] sm:$0xf] %vm1685, %v1644
      %1690 = vst.msk [vmem:[#allocation3 + $0x10] sm:$0xf] %vm1685, %v1646
      %1691 = vst.msk [vmem:[#allocation3 + $0x14] sm:$0xf] %vm1685, %v1648
      %1692 = vst.msk [vmem:[#allocation3 + $0x18] sm:$0xf] %vm1685, %v1650
      %1693 = vst.msk [vmem:[#allocation3 + $0x1c] sm:$0xf] %vm1685, %v1652
      %1694 = vst.msk [vmem:[#allocation3 + $0x20] sm:$0xf] %vm1685, %v1654
      %1695 = vst.msk [vmem:[#allocation3 + $0x24] sm:$0xf] %vm1685, %v1656
      %1696 = vst.msk [vmem:[#allocation3 + $0x28] sm:$0xf] %vm1685, %v1658
      %1697 = vst.msk [vmem:[#allocation3 + $0x2c] sm:$0xf] %vm1685, %v1660
      %1698 = vst.msk [vmem:[#allocation3 + $0x30] sm:$0xf] %vm1685, %v1662
      %1699 = vst.msk [vmem:[#allocation3 + $0x34] sm:$0xf] %vm1685, %v1664
      %1700 = vst.msk [vmem:[#allocation3 + $0x38] sm:$0xf] %vm1685, %v1666
      %1701 = vst.msk [vmem:[#allocation3 + $0x3c] sm:$0xf] %vm1685, %v1668
      %v1702 = vld [vmem:[#allocation2] sm:$0xf]
      %v1703 = vld [vmem:[#allocation2 + $0x4] sm:$0xf]
      %v1704 = vld [vmem:[#allocation2 + $0x8] sm:$0xf]
      %v1705 = vld [vmem:[#allocation2 + $0xc] sm:$0xf]
      %v1706 = vld [vmem:[#allocation2 + $0x10] sm:$0xf]
      %v1707 = vld [vmem:[#allocation2 + $0x14] sm:$0xf]
      %v1708 = vld [vmem:[#allocation2 + $0x18] sm:$0xf]
      %v1709 = vld [vmem:[#allocation2 + $0x1c] sm:$0xf]
      %v1710 = vld [vmem:[#allocation2 + $0x20] sm:$0xf]
      %v1711 = vld [vmem:[#allocation2 + $0x24] sm:$0xf]
      %v1712 = vld [vmem:[#allocation2 + $0x28] sm:$0xf]
      %v1713 = vld [vmem:[#allocation2 + $0x2c] sm:$0xf]
      %v1714 = vld [vmem:[#allocation2 + $0x30] sm:$0xf]
      %v1715 = vld [vmem:[#allocation2 + $0x34] sm:$0xf]
      %v1716 = vld [vmem:[#allocation2 + $0x38] sm:$0xf]
      %v1717 = vld [vmem:[#allocation2 + $0x3c] sm:$0xf]
      %v1734 = vunpack.c.l.b16 %v1702
      %v1735 = vunpack.c.l.b16 %v1703
      %v1736 = vunpack.c.l.b16 %v1704
      %v1737 = vunpack.c.l.b16 %v1705
      %v1738 = vunpack.c.l.b16 %v1706
      %v1739 = vunpack.c.l.b16 %v1707
      %v1740 = vunpack.c.l.b16 %v1708
      %v1741 = vunpack.c.l.b16 %v1709
      %v1742 = vunpack.c.l.b16 %v1710
      %v1743 = vunpack.c.l.b16 %v1711
      %v1744 = vunpack.c.l.b16 %v1712
      %v1745 = vunpack.c.l.b16 %v1713
      %v1746 = vunpack.c.l.b16 %v1714
      %v1747 = vunpack.c.l.b16 %v1715
      %v1748 = vunpack.c.l.b16 %v1716
      %v1749 = vunpack.c.l.b16 %v1717
      %v1750 = vpack.c.b16 %v1735, %v1734
      %v1751 = vpack.c.b16 %v1737, %v1736
      %v1752 = vpack.c.b16 %v1739, %v1738
      %v1753 = vpack.c.b16 %v1741, %v1740
      %v1754 = vpack.c.b16 %v1743, %v1742
      %v1755 = vpack.c.b16 %v1745, %v1744
      %v1756 = vpack.c.b16 %v1747, %v1746
      %v1757 = vpack.c.b16 %v1749, %v1748
      %1758 = vrot.lane.b32.xlu0 %v1750, 120
      %v1759 = vpop.permute.xlu0 %1758
      %1760 = vrot.lane.b32.xlu0 %v1751, 120
      %v1761 = vpop.permute.xlu0 %1760
      %1762 = vrot.lane.b32.xlu0 %v1752, 120
      %v1763 = vpop.permute.xlu0 %1762
      %1764 = vrot.lane.b32.xlu0 %v1753, 120
      %v1765 = vpop.permute.xlu0 %1764
      %1766 = vrot.lane.b32.xlu0 %v1754, 120
      %v1767 = vpop.permute.xlu0 %1766
      %1768 = vrot.lane.b32.xlu0 %v1755, 120
      %v1769 = vpop.permute.xlu0 %1768
      %1770 = vrot.lane.b32.xlu0 %v1756, 120
      %v1771 = vpop.permute.xlu0 %1770
      %1772 = vrot.lane.b32.xlu0 %v1757, 120
      %v1773 = vpop.permute.xlu0 %1772
      %1774 = vrot.lane.b32.xlu0 %v1750, 88
      %v1775 = vpop.permute.xlu0 %1774
      %1776 = vrot.lane.b32.xlu0 %v1751, 88
      %v1777 = vpop.permute.xlu0 %1776
      %1778 = vrot.lane.b32.xlu0 %v1752, 88
      %v1779 = vpop.permute.xlu0 %1778
      %1780 = vrot.lane.b32.xlu0 %v1753, 88
      %v1781 = vpop.permute.xlu0 %1780
      %1782 = vrot.lane.b32.xlu0 %v1754, 88
      %v1783 = vpop.permute.xlu0 %1782
      %1784 = vrot.lane.b32.xlu0 %v1755, 88
      %v1785 = vpop.permute.xlu0 %1784
      %1786 = vrot.lane.b32.xlu0 %v1756, 88
      %v1787 = vpop.permute.xlu0 %1786
      %1788 = vrot.lane.b32.xlu0 %v1757, 88
      %v1789 = vpop.permute.xlu0 %1788
      %v1791 = vsel %vm549, %v1759, 0
      %v1794 = vsel %vm549, %v1761, 0
      %v1797 = vsel %vm549, %v1763, 0
      %v1800 = vsel %vm549, %v1765, 0
      %v1803 = vsel %vm549, %v1767, 0
      %v1806 = vsel %vm549, %v1769, 0
      %v1809 = vsel %vm549, %v1771, 0
      %v1812 = vsel %vm549, %v1773, 0
      %v1815 = vsel %vm549, %v1775, 0
      %v1818 = vsel %vm549, %v1777, 0
      %v1821 = vsel %vm549, %v1779, 0
      %v1824 = vsel %vm549, %v1781, 0
      %v1827 = vsel %vm549, %v1783, 0
      %v1830 = vsel %vm549, %v1785, 0
      %v1833 = vsel %vm549, %v1787, 0
      %v1836 = vsel %vm549, %v1789, 0
      %1838 = vmatprep.subr.bf16.mxu0 0
      %1839 = vmatpush1.bf16.xpose.msra.mxu0 %v1836
      %1840 = vmatprep.subr.bf16.mxu0 0
      %1841 = vmatpush1.bf16.xpose.msra.mxu0 %v1833
      %1842 = vmatprep.subr.bf16.mxu0 0
      %1843 = vmatpush1.bf16.xpose.msra.mxu0 %v1830
      %1844 = vmatprep.subr.bf16.mxu0 0
      %1845 = vmatpush1.bf16.xpose.msra.mxu0 %v1827
      %1846 = vmatprep.subr.bf16.mxu0 0
      %1847 = vmatpush1.bf16.xpose.msra.mxu0 %v1824
      %1848 = vmatprep.subr.bf16.mxu0 0
      %1849 = vmatpush1.bf16.xpose.msra.mxu0 %v1821
      %1850 = vmatprep.subr.bf16.mxu0 0
      %1851 = vmatpush1.bf16.xpose.msra.mxu0 %v1818
      %1852 = vmatprep.subr.bf16.mxu0 0
      %1853 = vmatpush1.bf16.xpose.msra.mxu0 %v1815
      %1854 = vmatprep.subr.bf16.mxu0 0
      %1855 = vmatpush2.bf16.xpose.msra.mxu0 0
      %1856 = vmatprep.subr.bf16.mxu0 0
      %1857 = vmatpush2.bf16.xpose.msra.mxu0 0
      %1858 = vmatprep.subr.bf16.mxu0 0
      %1859 = vmatpush2.bf16.xpose.msra.mxu0 0
      %1860 = vmatprep.subr.bf16.mxu0 0
      %1861 = vmatpush2.bf16.xpose.msra.mxu0 0
      %1862 = vmatprep.subr.bf16.mxu0 0
      %1863 = vmatpush2.bf16.xpose.msra.mxu0 0
      %1864 = vmatprep.subr.bf16.mxu0 0
      %1865 = vmatpush2.bf16.xpose.msra.mxu0 0
      %1866 = vmatprep.subr.bf16.mxu0 0
      %1867 = vmatpush2.bf16.xpose.msra.mxu0 0
      %1868 = vmatprep.subr.bf16.mxu0 0
      %1869 = vmatpush2.bf16.xpose.msra.mxu0 0
      %1870 = vmatprep.mubr.bf16.mxu0 0
      %1871 = vmatmul.mubr.bf16.gmra.mxu0 %v1791
      %v1872 = vpop.f32.mrf.mxu0
      %v1873 = vadd.f32 0.0, %v1872
      %v1874 = vpop.f32.mrf.mxu0
      %v1875 = vpop.f32.mrf.mxu0
      %v1876 = vadd.f32 0.0, %v1875
      %v1877 = vpop.f32.mrf.mxu0
      %1878 = vmatprep.mubr.bf16.mxu0 0
      %1879 = vmatmul.mubr.bf16.gmra.mxu0 %v1794
      %v1880 = vpop.f32.mrf.mxu0
      %v1881 = vadd.f32 0.0, %v1880
      %v1882 = vpop.f32.mrf.mxu0
      %v1883 = vpop.f32.mrf.mxu0
      %v1884 = vadd.f32 0.0, %v1883
      %v1885 = vpop.f32.mrf.mxu0
      %1886 = vmatprep.mubr.bf16.mxu0 0
      %1887 = vmatmul.mubr.bf16.gmra.mxu0 %v1797
      %v1888 = vpop.f32.mrf.mxu0
      %v1889 = vadd.f32 0.0, %v1888
      %v1890 = vpop.f32.mrf.mxu0
      %v1891 = vpop.f32.mrf.mxu0
      %v1892 = vadd.f32 0.0, %v1891
      %v1893 = vpop.f32.mrf.mxu0
      %1894 = vmatprep.mubr.bf16.mxu0 0
      %1895 = vmatmul.mubr.bf16.gmra.mxu0 %v1800
      %v1896 = vpop.f32.mrf.mxu0
      %v1897 = vadd.f32 0.0, %v1896
      %v1898 = vpop.f32.mrf.mxu0
      %v1899 = vpop.f32.mrf.mxu0
      %v1900 = vadd.f32 0.0, %v1899
      %v1901 = vpop.f32.mrf.mxu0
      %1902 = vmatprep.mubr.bf16.mxu0 0
      %1903 = vmatmul.mubr.bf16.gmra.mxu0 %v1803
      %v1904 = vpop.f32.mrf.mxu0
      %v1905 = vadd.f32 0.0, %v1904
      %v1906 = vpop.f32.mrf.mxu0
      %v1907 = vpop.f32.mrf.mxu0
      %v1908 = vadd.f32 0.0, %v1907
      %v1909 = vpop.f32.mrf.mxu0
      %1910 = vmatprep.mubr.bf16.mxu0 0
      %1911 = vmatmul.mubr.bf16.gmra.mxu0 %v1806
      %v1912 = vpop.f32.mrf.mxu0
      %v1913 = vadd.f32 0.0, %v1912
      %v1914 = vpop.f32.mrf.mxu0
      %v1915 = vpop.f32.mrf.mxu0
      %v1916 = vadd.f32 0.0, %v1915
      %v1917 = vpop.f32.mrf.mxu0
      %1918 = vmatprep.mubr.bf16.mxu0 0
      %1919 = vmatmul.mubr.bf16.gmra.mxu0 %v1809
      %v1920 = vpop.f32.mrf.mxu0
      %v1921 = vadd.f32 0.0, %v1920
      %v1922 = vpop.f32.mrf.mxu0
      %v1923 = vpop.f32.mrf.mxu0
      %v1924 = vadd.f32 0.0, %v1923
      %v1925 = vpop.f32.mrf.mxu0
      %1926 = vmatprep.mubr.bf16.mxu0 0
      %1927 = vmatmul.mubr.bf16.gmra.mxu0 %v1812
      %v1928 = vpop.f32.mrf.mxu0
      %v1929 = vadd.f32 0.0, %v1928
      %v1930 = vpop.f32.mrf.mxu0
      %v1931 = vpop.f32.mrf.mxu0
      %v1932 = vadd.f32 0.0, %v1931
      %v1933 = vpop.f32.mrf.mxu0
      %1934 = vdwg.mxu0
      %v1935 = vsel %vm696, %v1873, -1e+30
      %v1936 = vsel %vm696, %v1876, -1e+30
      %v1937 = vsel %vm696, %v1881, -1e+30
      %v1938 = vsel %vm696, %v1884, -1e+30
      %v1939 = vsel %vm696, %v1889, -1e+30
      %v1940 = vsel %vm696, %v1892, -1e+30
      %v1941 = vsel %vm696, %v1897, -1e+30
      %v1942 = vsel %vm696, %v1900, -1e+30
      %v1943 = vsel %vm696, %v1905, -1e+30
      %v1944 = vsel %vm696, %v1908, -1e+30
      %v1945 = vsel %vm696, %v1913, -1e+30
      %v1946 = vsel %vm696, %v1916, -1e+30
      %v1947 = vsel %vm696, %v1921, -1e+30
      %v1948 = vsel %vm696, %v1924, -1e+30
      %v1949 = vsel %vm696, %v1929, -1e+30
      %v1950 = vsel %vm696, %v1932, -1e+30
      %1951 = vmax.xlane.f32.xlu0 %v1935
      %v1952 = vpop.xlane.xlu0 %1951
      %1953 = vmax.xlane.f32.xlu0 %v1936
      %v1954 = vpop.xlane.xlu0 %1953
      %1955 = vmax.xlane.f32.xlu0 %v1937
      %v1956 = vpop.xlane.xlu0 %1955
      %1957 = vmax.xlane.f32.xlu0 %v1938
      %v1958 = vpop.xlane.xlu0 %1957
      %1959 = vmax.xlane.f32.xlu0 %v1939
      %v1960 = vpop.xlane.xlu0 %1959
      %1961 = vmax.xlane.f32.xlu0 %v1940
      %v1962 = vpop.xlane.xlu0 %1961
      %1963 = vmax.xlane.f32.xlu0 %v1941
      %v1964 = vpop.xlane.xlu0 %1963
      %1965 = vmax.xlane.f32.xlu0 %v1942
      %v1966 = vpop.xlane.xlu0 %1965
      %1967 = vmax.xlane.f32.xlu0 %v1943
      %v1968 = vpop.xlane.xlu0 %1967
      %1969 = vmax.xlane.f32.xlu0 %v1944
      %v1970 = vpop.xlane.xlu0 %1969
      %1971 = vmax.xlane.f32.xlu0 %v1945
      %v1972 = vpop.xlane.xlu0 %1971
      %1973 = vmax.xlane.f32.xlu0 %v1946
      %v1974 = vpop.xlane.xlu0 %1973
      %1975 = vmax.xlane.f32.xlu0 %v1947
      %v1976 = vpop.xlane.xlu0 %1975
      %1977 = vmax.xlane.f32.xlu0 %v1948
      %v1978 = vpop.xlane.xlu0 %1977
      %1979 = vmax.xlane.f32.xlu0 %v1949
      %v1980 = vpop.xlane.xlu0 %1979
      %1981 = vmax.xlane.f32.xlu0 %v1950
      %v1982 = vpop.xlane.xlu0 %1981
      %v1983 = vsub.f32 %v1935, %v1952
      %v1984 = vsub.f32 %v1936, %v1954
      %v1985 = vsub.f32 %v1937, %v1956
      %v1986 = vsub.f32 %v1938, %v1958
      %v1987 = vsub.f32 %v1939, %v1960
      %v1988 = vsub.f32 %v1940, %v1962
      %v1989 = vsub.f32 %v1941, %v1964
      %v1990 = vsub.f32 %v1942, %v1966
      %v1991 = vsub.f32 %v1943, %v1968
      %v1992 = vsub.f32 %v1944, %v1970
      %v1993 = vsub.f32 %v1945, %v1972
      %v1994 = vsub.f32 %v1946, %v1974
      %v1995 = vsub.f32 %v1947, %v1976
      %v1996 = vsub.f32 %v1948, %v1978
      %v1997 = vsub.f32 %v1949, %v1980
      %v1998 = vsub.f32 %v1950, %v1982
      %v1999 = vmul.f32 %v1983, 1.442695
      %v2000 = vpow.pop %v1999
      %v2001 = vmul.f32 %v1984, 1.442695
      %v2002 = vpow.pop %v2001
      %v2003 = vmul.f32 %v1985, 1.442695
      %v2004 = vpow.pop %v2003
      %v2005 = vmul.f32 %v1986, 1.442695
      %v2006 = vpow.pop %v2005
      %v2007 = vmul.f32 %v1987, 1.442695
      %v2008 = vpow.pop %v2007
      %v2009 = vmul.f32 %v1988, 1.442695
      %v2010 = vpow.pop %v2009
      %v2011 = vmul.f32 %v1989, 1.442695
      %v2012 = vpow.pop %v2011
      %v2013 = vmul.f32 %v1990, 1.442695
      %v2014 = vpow.pop %v2013
      %v2015 = vmul.f32 %v1991, 1.442695
      %v2016 = vpow.pop %v2015
      %v2017 = vmul.f32 %v1992, 1.442695
      %v2018 = vpow.pop %v2017
      %v2019 = vmul.f32 %v1993, 1.442695
      %v2020 = vpow.pop %v2019
      %v2021 = vmul.f32 %v1994, 1.442695
      %v2022 = vpow.pop %v2021
      %v2023 = vmul.f32 %v1995, 1.442695
      %v2024 = vpow.pop %v2023
      %v2025 = vmul.f32 %v1996, 1.442695
      %v2026 = vpow.pop %v2025
      %v2027 = vmul.f32 %v1997, 1.442695
      %v2028 = vpow.pop %v2027
      %v2029 = vmul.f32 %v1998, 1.442695
      %v2030 = vpow.pop %v2029
      %2031 = vadd.xlane.f32.xlu0 %v2000
      %v2032 = vpop.xlane.xlu0 %2031
      %2033 = vadd.xlane.f32.xlu0 %v2002
      %v2034 = vpop.xlane.xlu0 %2033
      %2035 = vadd.xlane.f32.xlu0 %v2004
      %v2036 = vpop.xlane.xlu0 %2035
      %2037 = vadd.xlane.f32.xlu0 %v2006
      %v2038 = vpop.xlane.xlu0 %2037
      %2039 = vadd.xlane.f32.xlu0 %v2008
      %v2040 = vpop.xlane.xlu0 %2039
      %2041 = vadd.xlane.f32.xlu0 %v2010
      %v2042 = vpop.xlane.xlu0 %2041
      %2043 = vadd.xlane.f32.xlu0 %v2012
      %v2044 = vpop.xlane.xlu0 %2043
      %2045 = vadd.xlane.f32.xlu0 %v2014
      %v2046 = vpop.xlane.xlu0 %2045
      %2047 = vadd.xlane.f32.xlu0 %v2016
      %v2048 = vpop.xlane.xlu0 %2047
      %2049 = vadd.xlane.f32.xlu0 %v2018
      %v2050 = vpop.xlane.xlu0 %2049
      %2051 = vadd.xlane.f32.xlu0 %v2020
      %v2052 = vpop.xlane.xlu0 %2051
      %2053 = vadd.xlane.f32.xlu0 %v2022
      %v2054 = vpop.xlane.xlu0 %2053
      %2055 = vadd.xlane.f32.xlu0 %v2024
      %v2056 = vpop.xlane.xlu0 %2055
      %2057 = vadd.xlane.f32.xlu0 %v2026
      %v2058 = vpop.xlane.xlu0 %2057
      %2059 = vadd.xlane.f32.xlu0 %v2028
      %v2060 = vpop.xlane.xlu0 %2059
      %2061 = vadd.xlane.f32.xlu0 %v2030
      %v2062 = vpop.xlane.xlu0 %2061
      %v2063 = vrcp.pop %v2032
      %v2064 = vrcp.pop %v2034
      %v2065 = vrcp.pop %v2036
      %v2066 = vrcp.pop %v2038
      %v2067 = vrcp.pop %v2040
      %v2068 = vrcp.pop %v2042
      %v2069 = vrcp.pop %v2044
      %v2070 = vrcp.pop %v2046
      %v2071 = vrcp.pop %v2048
      %v2072 = vrcp.pop %v2050
      %v2073 = vrcp.pop %v2052
      %v2074 = vrcp.pop %v2054
      %v2075 = vrcp.pop %v2056
      %v2076 = vrcp.pop %v2058
      %v2077 = vrcp.pop %v2060
      %v2078 = vrcp.pop %v2062
      %v2079 = vpack.c.bf16 %v2002, %v2000
      %v2080 = vpack.c.bf16 %v2006, %v2004
      %v2081 = vpack.c.bf16 %v2010, %v2008
      %v2082 = vpack.c.bf16 %v2014, %v2012
      %v2083 = vpack.c.bf16 %v2018, %v2016
      %v2084 = vpack.c.bf16 %v2022, %v2020
      %v2085 = vpack.c.bf16 %v2026, %v2024
      %v2086 = vpack.c.bf16 %v2030, %v2028
      %2087 = vrot.lane.b32.xlu0 %v1750, 56
      %v2088 = vpop.permute.xlu0 %2087
      %2089 = vrot.lane.b32.xlu0 %v1751, 56
      %v2090 = vpop.permute.xlu0 %2089
      %2091 = vrot.lane.b32.xlu0 %v1752, 56
      %v2092 = vpop.permute.xlu0 %2091
      %2093 = vrot.lane.b32.xlu0 %v1753, 56
      %v2094 = vpop.permute.xlu0 %2093
      %2095 = vrot.lane.b32.xlu0 %v1754, 56
      %v2096 = vpop.permute.xlu0 %2095
      %2097 = vrot.lane.b32.xlu0 %v1755, 56
      %v2098 = vpop.permute.xlu0 %2097
      %2099 = vrot.lane.b32.xlu0 %v1756, 56
      %v2100 = vpop.permute.xlu0 %2099
      %2101 = vrot.lane.b32.xlu0 %v1757, 56
      %v2102 = vpop.permute.xlu0 %2101
      %2111 = vmatprep.subr.bf16.mxu0 0
      %2112 = vmatpush1.bf16.msra.mxu0 %v2102
      %2113 = vmatprep.subr.bf16.mxu0 0
      %2114 = vmatpush1.bf16.msra.mxu0 %v2100
      %2115 = vmatprep.subr.bf16.mxu0 0
      %2116 = vmatpush1.bf16.msra.mxu0 %v2098
      %2117 = vmatprep.subr.bf16.mxu0 0
      %2118 = vmatpush1.bf16.msra.mxu0 %v2096
      %2119 = vmatprep.subr.bf16.mxu0 0
      %2120 = vmatpush1.bf16.msra.mxu0 %v2094
      %2121 = vmatprep.subr.bf16.mxu0 0
      %2122 = vmatpush1.bf16.msra.mxu0 %v2092
      %2123 = vmatprep.subr.bf16.mxu0 0
      %2124 = vmatpush1.bf16.msra.mxu0 %v2090
      %2125 = vmatprep.subr.bf16.mxu0 0
      %2126 = vmatpush1.bf16.msra.mxu0 %v2088
      %2127 = vmatprep.subr.bf16.mxu0 0
      %2128 = vmatpush2.bf16.msra.mxu0 0
      %2129 = vmatprep.subr.bf16.mxu0 0
      %2130 = vmatpush2.bf16.msra.mxu0 0
      %2131 = vmatprep.subr.bf16.mxu0 0
      %2132 = vmatpush2.bf16.msra.mxu0 0
      %2133 = vmatprep.subr.bf16.mxu0 0
      %2134 = vmatpush2.bf16.msra.mxu0 0
      %2135 = vmatprep.subr.bf16.mxu0 0
      %2136 = vmatpush2.bf16.msra.mxu0 0
      %2137 = vmatprep.subr.bf16.mxu0 0
      %2138 = vmatpush2.bf16.msra.mxu0 0
      %2139 = vmatprep.subr.bf16.mxu0 0
      %2140 = vmatpush2.bf16.msra.mxu0 0
      %2141 = vmatprep.subr.bf16.mxu0 0
      %2142 = vmatpush2.bf16.msra.mxu0 0
      %2143 = vmatprep.mubr.bf16.mxu0 0
      %2144 = vmatmul.mubr.bf16.gmra.mxu0 %v2079
      %v2145 = vpop.f32.mrf.mxu0
      %v2146 = vadd.f32 0.0, %v2145
      %v2147 = vpop.f32.mrf.mxu0
      %v2148 = vpop.f32.mrf.mxu0
      %v2149 = vadd.f32 0.0, %v2148
      %v2150 = vpop.f32.mrf.mxu0
      %2151 = vmatprep.mubr.bf16.mxu0 0
      %2152 = vmatmul.mubr.bf16.gmra.mxu0 %v2080
      %v2153 = vpop.f32.mrf.mxu0
      %v2154 = vadd.f32 0.0, %v2153
      %v2155 = vpop.f32.mrf.mxu0
      %v2156 = vpop.f32.mrf.mxu0
      %v2157 = vadd.f32 0.0, %v2156
      %v2158 = vpop.f32.mrf.mxu0
      %2159 = vmatprep.mubr.bf16.mxu0 0
      %2160 = vmatmul.mubr.bf16.gmra.mxu0 %v2081
      %v2161 = vpop.f32.mrf.mxu0
      %v2162 = vadd.f32 0.0, %v2161
      %v2163 = vpop.f32.mrf.mxu0
      %v2164 = vpop.f32.mrf.mxu0
      %v2165 = vadd.f32 0.0, %v2164
      %v2166 = vpop.f32.mrf.mxu0
      %2167 = vmatprep.mubr.bf16.mxu0 0
      %2168 = vmatmul.mubr.bf16.gmra.mxu0 %v2082
      %v2169 = vpop.f32.mrf.mxu0
      %v2170 = vadd.f32 0.0, %v2169
      %v2171 = vpop.f32.mrf.mxu0
      %v2172 = vpop.f32.mrf.mxu0
      %v2173 = vadd.f32 0.0, %v2172
      %v2174 = vpop.f32.mrf.mxu0
      %2175 = vmatprep.mubr.bf16.mxu0 0
      %2176 = vmatmul.mubr.bf16.gmra.mxu0 %v2083
      %v2177 = vpop.f32.mrf.mxu0
      %v2178 = vadd.f32 0.0, %v2177
      %v2179 = vpop.f32.mrf.mxu0
      %v2180 = vpop.f32.mrf.mxu0
      %v2181 = vadd.f32 0.0, %v2180
      %v2182 = vpop.f32.mrf.mxu0
      %2183 = vmatprep.mubr.bf16.mxu0 0
      %2184 = vmatmul.mubr.bf16.gmra.mxu0 %v2084
      %v2185 = vpop.f32.mrf.mxu0
      %v2186 = vadd.f32 0.0, %v2185
      %v2187 = vpop.f32.mrf.mxu0
      %v2188 = vpop.f32.mrf.mxu0
      %v2189 = vadd.f32 0.0, %v2188
      %v2190 = vpop.f32.mrf.mxu0
      %2191 = vmatprep.mubr.bf16.mxu0 0
      %2192 = vmatmul.mubr.bf16.gmra.mxu0 %v2085
      %v2193 = vpop.f32.mrf.mxu0
      %v2194 = vadd.f32 0.0, %v2193
      %v2195 = vpop.f32.mrf.mxu0
      %v2196 = vpop.f32.mrf.mxu0
      %v2197 = vadd.f32 0.0, %v2196
      %v2198 = vpop.f32.mrf.mxu0
      %2199 = vmatprep.mubr.bf16.mxu0 0
      %2200 = vmatmul.mubr.bf16.gmra.mxu0 %v2086
      %v2201 = vpop.f32.mrf.mxu0
      %v2202 = vadd.f32 0.0, %v2201
      %v2203 = vpop.f32.mrf.mxu0
      %v2204 = vpop.f32.mrf.mxu0
      %v2205 = vadd.f32 0.0, %v2204
      %v2206 = vpop.f32.mrf.mxu0
      %2207 = vdwg.mxu0
      %v2208 = vmul.f32 %v2146, %v2063
      %v2209 = vmul.f32 %v2149, %v2064
      %v2210 = vmul.f32 %v2154, %v2065
      %v2211 = vmul.f32 %v2157, %v2066
      %v2212 = vmul.f32 %v2162, %v2067
      %v2213 = vmul.f32 %v2165, %v2068
      %v2214 = vmul.f32 %v2170, %v2069
      %v2215 = vmul.f32 %v2173, %v2070
      %v2216 = vmul.f32 %v2178, %v2071
      %v2217 = vmul.f32 %v2181, %v2072
      %v2218 = vmul.f32 %v2186, %v2073
      %v2219 = vmul.f32 %v2189, %v2074
      %v2220 = vmul.f32 %v2194, %v2075
      %v2221 = vmul.f32 %v2197, %v2076
      %v2222 = vmul.f32 %v2202, %v2077
      %v2223 = vmul.f32 %v2205, %v2078
      %v2224 = vpack.c.bf16 %v2209, %v2208
      %v2225 = vpack.c.bf16 %v2211, %v2210
      %v2226 = vpack.c.bf16 %v2213, %v2212
      %v2227 = vpack.c.bf16 %v2215, %v2214
      %v2228 = vpack.c.bf16 %v2217, %v2216
      %v2229 = vpack.c.bf16 %v2219, %v2218
      %v2230 = vpack.c.bf16 %v2221, %v2220
      %v2231 = vpack.c.bf16 %v2223, %v2222
      %v2240 = vunpack.c.l.b16 %v2224
      %v2241 = vunpack.c.h.b16 %v2224
      %v2242 = vunpack.c.l.b16 %v2225
      %v2243 = vunpack.c.h.b16 %v2225
      %v2244 = vunpack.c.l.b16 %v2226
      %v2245 = vunpack.c.h.b16 %v2226
      %v2246 = vunpack.c.l.b16 %v2227
      %v2247 = vunpack.c.h.b16 %v2227
      %v2248 = vunpack.c.l.b16 %v2228
      %v2249 = vunpack.c.h.b16 %v2228
      %v2250 = vunpack.c.l.b16 %v2229
      %v2251 = vunpack.c.h.b16 %v2229
      %v2252 = vunpack.c.l.b16 %v2230
      %v2253 = vunpack.c.h.b16 %v2230
      %v2254 = vunpack.c.l.b16 %v2231
      %v2255 = vunpack.c.h.b16 %v2231
      %v2256 = vpack.c.b16 %v2240, %v2240
      %v2257 = vpack.c.b16 %v2241, %v2241
      %v2258 = vpack.c.b16 %v2242, %v2242
      %v2259 = vpack.c.b16 %v2243, %v2243
      %v2260 = vpack.c.b16 %v2244, %v2244
      %v2261 = vpack.c.b16 %v2245, %v2245
      %v2262 = vpack.c.b16 %v2246, %v2246
      %v2263 = vpack.c.b16 %v2247, %v2247
      %v2264 = vpack.c.b16 %v2248, %v2248
      %v2265 = vpack.c.b16 %v2249, %v2249
      %v2266 = vpack.c.b16 %v2250, %v2250
      %v2267 = vpack.c.b16 %v2251, %v2251
      %v2268 = vpack.c.b16 %v2252, %v2252
      %v2269 = vpack.c.b16 %v2253, %v2253
      %v2270 = vpack.c.b16 %v2254, %v2254
      %v2271 = vpack.c.b16 %v2255, %v2255
      %2272 = vrot.lane.b32.xlu0 %v2256, 8
      %v2273 = vpop.permute.xlu0 %2272
      %2274 = vrot.lane.b32.xlu0 %v2257, 8
      %v2275 = vpop.permute.xlu0 %2274
      %2276 = vrot.lane.b32.xlu0 %v2258, 8
      %v2277 = vpop.permute.xlu0 %2276
      %2278 = vrot.lane.b32.xlu0 %v2259, 8
      %v2279 = vpop.permute.xlu0 %2278
      %2280 = vrot.lane.b32.xlu0 %v2260, 8
      %v2281 = vpop.permute.xlu0 %2280
      %2282 = vrot.lane.b32.xlu0 %v2261, 8
      %v2283 = vpop.permute.xlu0 %2282
      %2284 = vrot.lane.b32.xlu0 %v2262, 8
      %v2285 = vpop.permute.xlu0 %2284
      %2286 = vrot.lane.b32.xlu0 %v2263, 8
      %v2287 = vpop.permute.xlu0 %2286
      %2288 = vrot.lane.b32.xlu0 %v2264, 8
      %v2289 = vpop.permute.xlu0 %2288
      %2290 = vrot.lane.b32.xlu0 %v2265, 8
      %v2291 = vpop.permute.xlu0 %2290
      %2292 = vrot.lane.b32.xlu0 %v2266, 8
      %v2293 = vpop.permute.xlu0 %2292
      %2294 = vrot.lane.b32.xlu0 %v2267, 8
      %v2295 = vpop.permute.xlu0 %2294
      %2296 = vrot.lane.b32.xlu0 %v2268, 8
      %v2297 = vpop.permute.xlu0 %2296
      %2298 = vrot.lane.b32.xlu0 %v2269, 8
      %v2299 = vpop.permute.xlu0 %2298
      %2300 = vrot.lane.b32.xlu0 %v2270, 8
      %v2301 = vpop.permute.xlu0 %2300
      %2302 = vrot.lane.b32.xlu0 %v2271, 8
      %v2303 = vpop.permute.xlu0 %2302
      %vm2320 = vcmask 93248
      %2321 = vst.msk [vmem:[#allocation3] sm:$0xf] %vm2320, %v2273
      %2322 = vst.msk [vmem:[#allocation3 + $0x4] sm:$0xf] %vm2320, %v2275
      %2323 = vst.msk [vmem:[#allocation3 + $0x8] sm:$0xf] %vm2320, %v2277
      %2324 = vst.msk [vmem:[#allocation3 + $0xc] sm:$0xf] %vm2320, %v2279
      %2325 = vst.msk [vmem:[#allocation3 + $0x10] sm:$0xf] %vm2320, %v2281
      %2326 = vst.msk [vmem:[#allocation3 + $0x14] sm:$0xf] %vm2320, %v2283
      %2327 = vst.msk [vmem:[#allocation3 + $0x18] sm:$0xf] %vm2320, %v2285
      %2328 = vst.msk [vmem:[#allocation3 + $0x1c] sm:$0xf] %vm2320, %v2287
      %2329 = vst.msk [vmem:[#allocation3 + $0x20] sm:$0xf] %vm2320, %v2289
      %2330 = vst.msk [vmem:[#allocation3 + $0x24] sm:$0xf] %vm2320, %v2291
      %2331 = vst.msk [vmem:[#allocation3 + $0x28] sm:$0xf] %vm2320, %v2293
      %2332 = vst.msk [vmem:[#allocation3 + $0x2c] sm:$0xf] %vm2320, %v2295
      %2333 = vst.msk [vmem:[#allocation3 + $0x30] sm:$0xf] %vm2320, %v2297
      %2334 = vst.msk [vmem:[#allocation3 + $0x34] sm:$0xf] %vm2320, %v2299
      %2335 = vst.msk [vmem:[#allocation3 + $0x38] sm:$0xf] %vm2320, %v2301
      %2336 = vst.msk [vmem:[#allocation3 + $0x3c] sm:$0xf] %vm2320, %v2303
      %v2337 = vld [vmem:[#allocation2] sm:$0xf]
      %v2338 = vld [vmem:[#allocation2 + $0x4] sm:$0xf]
      %v2339 = vld [vmem:[#allocation2 + $0x8] sm:$0xf]
      %v2340 = vld [vmem:[#allocation2 + $0xc] sm:$0xf]
      %v2341 = vld [vmem:[#allocation2 + $0x10] sm:$0xf]
      %v2342 = vld [vmem:[#allocation2 + $0x14] sm:$0xf]
      %v2343 = vld [vmem:[#allocation2 + $0x18] sm:$0xf]
      %v2344 = vld [vmem:[#allocation2 + $0x1c] sm:$0xf]
      %v2345 = vld [vmem:[#allocation2 + $0x20] sm:$0xf]
      %v2346 = vld [vmem:[#allocation2 + $0x24] sm:$0xf]
      %v2347 = vld [vmem:[#allocation2 + $0x28] sm:$0xf]
      %v2348 = vld [vmem:[#allocation2 + $0x2c] sm:$0xf]
      %v2349 = vld [vmem:[#allocation2 + $0x30] sm:$0xf]
      %v2350 = vld [vmem:[#allocation2 + $0x34] sm:$0xf]
      %v2351 = vld [vmem:[#allocation2 + $0x38] sm:$0xf]
      %v2352 = vld [vmem:[#allocation2 + $0x3c] sm:$0xf]
      %v2369 = vunpack.c.l.b16 %v2337
      %v2370 = vunpack.c.l.b16 %v2338
      %v2371 = vunpack.c.l.b16 %v2339
      %v2372 = vunpack.c.l.b16 %v2340
      %v2373 = vunpack.c.l.b16 %v2341
      %v2374 = vunpack.c.l.b16 %v2342
      %v2375 = vunpack.c.l.b16 %v2343
      %v2376 = vunpack.c.l.b16 %v2344
      %v2377 = vunpack.c.l.b16 %v2345
      %v2378 = vunpack.c.l.b16 %v2346
      %v2379 = vunpack.c.l.b16 %v2347
      %v2380 = vunpack.c.l.b16 %v2348
      %v2381 = vunpack.c.l.b16 %v2349
      %v2382 = vunpack.c.l.b16 %v2350
      %v2383 = vunpack.c.l.b16 %v2351
      %v2384 = vunpack.c.l.b16 %v2352
      %v2385 = vpack.c.b16 %v2370, %v2369
      %v2386 = vpack.c.b16 %v2372, %v2371
      %v2387 = vpack.c.b16 %v2374, %v2373
      %v2388 = vpack.c.b16 %v2376, %v2375
      %v2389 = vpack.c.b16 %v2378, %v2377
      %v2390 = vpack.c.b16 %v2380, %v2379
      %v2391 = vpack.c.b16 %v2382, %v2381
      %v2392 = vpack.c.b16 %v2384, %v2383
      %2393 = vrot.lane.b32.xlu0 %v2385, 116
      %v2394 = vpop.permute.xlu0 %2393
      %2395 = vrot.lane.b32.xlu0 %v2386, 116
      %v2396 = vpop.permute.xlu0 %2395
      %2397 = vrot.lane.b32.xlu0 %v2387, 116
      %v2398 = vpop.permute.xlu0 %2397
      %2399 = vrot.lane.b32.xlu0 %v2388, 116
      %v2400 = vpop.permute.xlu0 %2399
      %2401 = vrot.lane.b32.xlu0 %v2389, 116
      %v2402 = vpop.permute.xlu0 %2401
      %2403 = vrot.lane.b32.xlu0 %v2390, 116
      %v2404 = vpop.permute.xlu0 %2403
      %2405 = vrot.lane.b32.xlu0 %v2391, 116
      %v2406 = vpop.permute.xlu0 %2405
      %2407 = vrot.lane.b32.xlu0 %v2392, 116
      %v2408 = vpop.permute.xlu0 %2407
      %2409 = vrot.lane.b32.xlu0 %v2385, 84
      %v2410 = vpop.permute.xlu0 %2409
      %2411 = vrot.lane.b32.xlu0 %v2386, 84
      %v2412 = vpop.permute.xlu0 %2411
      %2413 = vrot.lane.b32.xlu0 %v2387, 84
      %v2414 = vpop.permute.xlu0 %2413
      %2415 = vrot.lane.b32.xlu0 %v2388, 84
      %v2416 = vpop.permute.xlu0 %2415
      %2417 = vrot.lane.b32.xlu0 %v2389, 84
      %v2418 = vpop.permute.xlu0 %2417
      %2419 = vrot.lane.b32.xlu0 %v2390, 84
      %v2420 = vpop.permute.xlu0 %2419
      %2421 = vrot.lane.b32.xlu0 %v2391, 84
      %v2422 = vpop.permute.xlu0 %2421
      %2423 = vrot.lane.b32.xlu0 %v2392, 84
      %v2424 = vpop.permute.xlu0 %2423
      %v2426 = vsel %vm549, %v2394, 0
      %v2429 = vsel %vm549, %v2396, 0
      %v2432 = vsel %vm549, %v2398, 0
      %v2435 = vsel %vm549, %v2400, 0
      %v2438 = vsel %vm549, %v2402, 0
      %v2441 = vsel %vm549, %v2404, 0
      %v2444 = vsel %vm549, %v2406, 0
      %v2447 = vsel %vm549, %v2408, 0
      %v2450 = vsel %vm549, %v2410, 0
      %v2453 = vsel %vm549, %v2412, 0
      %v2456 = vsel %vm549, %v2414, 0
      %v2459 = vsel %vm549, %v2416, 0
      %v2462 = vsel %vm549, %v2418, 0
      %v2465 = vsel %vm549, %v2420, 0
      %v2468 = vsel %vm549, %v2422, 0
      %v2471 = vsel %vm549, %v2424, 0
      %2473 = vmatprep.subr.bf16.mxu0 0
      %2474 = vmatpush1.bf16.xpose.msra.mxu0 %v2471
      %2475 = vmatprep.subr.bf16.mxu0 0
      %2476 = vmatpush1.bf16.xpose.msra.mxu0 %v2468
      %2477 = vmatprep.subr.bf16.mxu0 0
      %2478 = vmatpush1.bf16.xpose.msra.mxu0 %v2465
      %2479 = vmatprep.subr.bf16.mxu0 0
      %2480 = vmatpush1.bf16.xpose.msra.mxu0 %v2462
      %2481 = vmatprep.subr.bf16.mxu0 0
      %2482 = vmatpush1.bf16.xpose.msra.mxu0 %v2459
      %2483 = vmatprep.subr.bf16.mxu0 0
      %2484 = vmatpush1.bf16.xpose.msra.mxu0 %v2456
      %2485 = vmatprep.subr.bf16.mxu0 0
      %2486 = vmatpush1.bf16.xpose.msra.mxu0 %v2453
      %2487 = vmatprep.subr.bf16.mxu0 0
      %2488 = vmatpush1.bf16.xpose.msra.mxu0 %v2450
      %2489 = vmatprep.subr.bf16.mxu0 0
      %2490 = vmatpush2.bf16.xpose.msra.mxu0 0
      %2491 = vmatprep.subr.bf16.mxu0 0
      %2492 = vmatpush2.bf16.xpose.msra.mxu0 0
      %2493 = vmatprep.subr.bf16.mxu0 0
      %2494 = vmatpush2.bf16.xpose.msra.mxu0 0
      %2495 = vmatprep.subr.bf16.mxu0 0
      %2496 = vmatpush2.bf16.xpose.msra.mxu0 0
      %2497 = vmatprep.subr.bf16.mxu0 0
      %2498 = vmatpush2.bf16.xpose.msra.mxu0 0
      %2499 = vmatprep.subr.bf16.mxu0 0
      %2500 = vmatpush2.bf16.xpose.msra.mxu0 0
      %2501 = vmatprep.subr.bf16.mxu0 0
      %2502 = vmatpush2.bf16.xpose.msra.mxu0 0
      %2503 = vmatprep.subr.bf16.mxu0 0
      %2504 = vmatpush2.bf16.xpose.msra.mxu0 0
      %2505 = vmatprep.mubr.bf16.mxu0 0
      %2506 = vmatmul.mubr.bf16.gmra.mxu0 %v2426
      %v2507 = vpop.f32.mrf.mxu0
      %v2508 = vadd.f32 0.0, %v2507
      %v2509 = vpop.f32.mrf.mxu0
      %v2510 = vpop.f32.mrf.mxu0
      %v2511 = vadd.f32 0.0, %v2510
      %v2512 = vpop.f32.mrf.mxu0
      %2513 = vmatprep.mubr.bf16.mxu0 0
      %2514 = vmatmul.mubr.bf16.gmra.mxu0 %v2429
      %v2515 = vpop.f32.mrf.mxu0
      %v2516 = vadd.f32 0.0, %v2515
      %v2517 = vpop.f32.mrf.mxu0
      %v2518 = vpop.f32.mrf.mxu0
      %v2519 = vadd.f32 0.0, %v2518
      %v2520 = vpop.f32.mrf.mxu0
      %2521 = vmatprep.mubr.bf16.mxu0 0
      %2522 = vmatmul.mubr.bf16.gmra.mxu0 %v2432
      %v2523 = vpop.f32.mrf.mxu0
      %v2524 = vadd.f32 0.0, %v2523
      %v2525 = vpop.f32.mrf.mxu0
      %v2526 = vpop.f32.mrf.mxu0
      %v2527 = vadd.f32 0.0, %v2526
      %v2528 = vpop.f32.mrf.mxu0
      %2529 = vmatprep.mubr.bf16.mxu0 0
      %2530 = vmatmul.mubr.bf16.gmra.mxu0 %v2435
      %v2531 = vpop.f32.mrf.mxu0
      %v2532 = vadd.f32 0.0, %v2531
      %v2533 = vpop.f32.mrf.mxu0
      %v2534 = vpop.f32.mrf.mxu0
      %v2535 = vadd.f32 0.0, %v2534
      %v2536 = vpop.f32.mrf.mxu0
      %2537 = vmatprep.mubr.bf16.mxu0 0
      %2538 = vmatmul.mubr.bf16.gmra.mxu0 %v2438
      %v2539 = vpop.f32.mrf.mxu0
      %v2540 = vadd.f32 0.0, %v2539
      %v2541 = vpop.f32.mrf.mxu0
      %v2542 = vpop.f32.mrf.mxu0
      %v2543 = vadd.f32 0.0, %v2542
      %v2544 = vpop.f32.mrf.mxu0
      %2545 = vmatprep.mubr.bf16.mxu0 0
      %2546 = vmatmul.mubr.bf16.gmra.mxu0 %v2441
      %v2547 = vpop.f32.mrf.mxu0
      %v2548 = vadd.f32 0.0, %v2547
      %v2549 = vpop.f32.mrf.mxu0
      %v2550 = vpop.f32.mrf.mxu0
      %v2551 = vadd.f32 0.0, %v2550
      %v2552 = vpop.f32.mrf.mxu0
      %2553 = vmatprep.mubr.bf16.mxu0 0
      %2554 = vmatmul.mubr.bf16.gmra.mxu0 %v2444
      %v2555 = vpop.f32.mrf.mxu0
      %v2556 = vadd.f32 0.0, %v2555
      %v2557 = vpop.f32.mrf.mxu0
      %v2558 = vpop.f32.mrf.mxu0
      %v2559 = vadd.f32 0.0, %v2558
      %v2560 = vpop.f32.mrf.mxu0
      %2561 = vmatprep.mubr.bf16.mxu0 0
      %2562 = vmatmul.mubr.bf16.gmra.mxu0 %v2447
      %v2563 = vpop.f32.mrf.mxu0
      %v2564 = vadd.f32 0.0, %v2563
      %v2565 = vpop.f32.mrf.mxu0
      %v2566 = vpop.f32.mrf.mxu0
      %v2567 = vadd.f32 0.0, %v2566
      %v2568 = vpop.f32.mrf.mxu0
      %2569 = vdwg.mxu0
      %v2570 = vsel %vm696, %v2508, -1e+30
      %v2571 = vsel %vm696, %v2511, -1e+30
      %v2572 = vsel %vm696, %v2516, -1e+30
      %v2573 = vsel %vm696, %v2519, -1e+30
      %v2574 = vsel %vm696, %v2524, -1e+30
      %v2575 = vsel %vm696, %v2527, -1e+30
      %v2576 = vsel %vm696, %v2532, -1e+30
      %v2577 = vsel %vm696, %v2535, -1e+30
      %v2578 = vsel %vm696, %v2540, -1e+30
      %v2579 = vsel %vm696, %v2543, -1e+30
      %v2580 = vsel %vm696, %v2548, -1e+30
      %v2581 = vsel %vm696, %v2551, -1e+30
      %v2582 = vsel %vm696, %v2556, -1e+30
      %v2583 = vsel %vm696, %v2559, -1e+30
      %v2584 = vsel %vm696, %v2564, -1e+30
      %v2585 = vsel %vm696, %v2567, -1e+30
      %2586 = vmax.xlane.f32.xlu0 %v2570
      %v2587 = vpop.xlane.xlu0 %2586
      %2588 = vmax.xlane.f32.xlu0 %v2571
      %v2589 = vpop.xlane.xlu0 %2588
      %2590 = vmax.xlane.f32.xlu0 %v2572
      %v2591 = vpop.xlane.xlu0 %2590
      %2592 = vmax.xlane.f32.xlu0 %v2573
      %v2593 = vpop.xlane.xlu0 %2592
      %2594 = vmax.xlane.f32.xlu0 %v2574
      %v2595 = vpop.xlane.xlu0 %2594
      %2596 = vmax.xlane.f32.xlu0 %v2575
      %v2597 = vpop.xlane.xlu0 %2596
      %2598 = vmax.xlane.f32.xlu0 %v2576
      %v2599 = vpop.xlane.xlu0 %2598
      %2600 = vmax.xlane.f32.xlu0 %v2577
      %v2601 = vpop.xlane.xlu0 %2600
      %2602 = vmax.xlane.f32.xlu0 %v2578
      %v2603 = vpop.xlane.xlu0 %2602
      %2604 = vmax.xlane.f32.xlu0 %v2579
      %v2605 = vpop.xlane.xlu0 %2604
      %2606 = vmax.xlane.f32.xlu0 %v2580
      %v2607 = vpop.xlane.xlu0 %2606
      %2608 = vmax.xlane.f32.xlu0 %v2581
      %v2609 = vpop.xlane.xlu0 %2608
      %2610 = vmax.xlane.f32.xlu0 %v2582
      %v2611 = vpop.xlane.xlu0 %2610
      %2612 = vmax.xlane.f32.xlu0 %v2583
      %v2613 = vpop.xlane.xlu0 %2612
      %2614 = vmax.xlane.f32.xlu0 %v2584
      %v2615 = vpop.xlane.xlu0 %2614
      %2616 = vmax.xlane.f32.xlu0 %v2585
      %v2617 = vpop.xlane.xlu0 %2616
      %v2618 = vsub.f32 %v2570, %v2587
      %v2619 = vsub.f32 %v2571, %v2589
      %v2620 = vsub.f32 %v2572, %v2591
      %v2621 = vsub.f32 %v2573, %v2593
      %v2622 = vsub.f32 %v2574, %v2595
      %v2623 = vsub.f32 %v2575, %v2597
      %v2624 = vsub.f32 %v2576, %v2599
      %v2625 = vsub.f32 %v2577, %v2601
      %v2626 = vsub.f32 %v2578, %v2603
      %v2627 = vsub.f32 %v2579, %v2605
      %v2628 = vsub.f32 %v2580, %v2607
      %v2629 = vsub.f32 %v2581, %v2609
      %v2630 = vsub.f32 %v2582, %v2611
      %v2631 = vsub.f32 %v2583, %v2613
      %v2632 = vsub.f32 %v2584, %v2615
      %v2633 = vsub.f32 %v2585, %v2617
      %v2634 = vmul.f32 %v2618, 1.442695
      %v2635 = vpow.pop %v2634
      %v2636 = vmul.f32 %v2619, 1.442695
      %v2637 = vpow.pop %v2636
      %v2638 = vmul.f32 %v2620, 1.442695
      %v2639 = vpow.pop %v2638
      %v2640 = vmul.f32 %v2621, 1.442695
      %v2641 = vpow.pop %v2640
      %v2642 = vmul.f32 %v2622, 1.442695
      %v2643 = vpow.pop %v2642
      %v2644 = vmul.f32 %v2623, 1.442695
      %v2645 = vpow.pop %v2644
      %v2646 = vmul.f32 %v2624, 1.442695
      %v2647 = vpow.pop %v2646
      %v2648 = vmul.f32 %v2625, 1.442695
      %v2649 = vpow.pop %v2648
      %v2650 = vmul.f32 %v2626, 1.442695
      %v2651 = vpow.pop %v2650
      %v2652 = vmul.f32 %v2627, 1.442695
      %v2653 = vpow.pop %v2652
      %v2654 = vmul.f32 %v2628, 1.442695
      %v2655 = vpow.pop %v2654
      %v2656 = vmul.f32 %v2629, 1.442695
      %v2657 = vpow.pop %v2656
      %v2658 = vmul.f32 %v2630, 1.442695
      %v2659 = vpow.pop %v2658
      %v2660 = vmul.f32 %v2631, 1.442695
      %v2661 = vpow.pop %v2660
      %v2662 = vmul.f32 %v2632, 1.442695
      %v2663 = vpow.pop %v2662
      %v2664 = vmul.f32 %v2633, 1.442695
      %v2665 = vpow.pop %v2664
      %2666 = vadd.xlane.f32.xlu0 %v2635
      %v2667 = vpop.xlane.xlu0 %2666
      %2668 = vadd.xlane.f32.xlu0 %v2637
      %v2669 = vpop.xlane.xlu0 %2668
      %2670 = vadd.xlane.f32.xlu0 %v2639
      %v2671 = vpop.xlane.xlu0 %2670
      %2672 = vadd.xlane.f32.xlu0 %v2641
      %v2673 = vpop.xlane.xlu0 %2672
      %2674 = vadd.xlane.f32.xlu0 %v2643
      %v2675 = vpop.xlane.xlu0 %2674
      %2676 = vadd.xlane.f32.xlu0 %v2645
      %v2677 = vpop.xlane.xlu0 %2676
      %2678 = vadd.xlane.f32.xlu0 %v2647
      %v2679 = vpop.xlane.xlu0 %2678
      %2680 = vadd.xlane.f32.xlu0 %v2649
      %v2681 = vpop.xlane.xlu0 %2680
      %2682 = vadd.xlane.f32.xlu0 %v2651
      %v2683 = vpop.xlane.xlu0 %2682
      %2684 = vadd.xlane.f32.xlu0 %v2653
      %v2685 = vpop.xlane.xlu0 %2684
      %2686 = vadd.xlane.f32.xlu0 %v2655
      %v2687 = vpop.xlane.xlu0 %2686
      %2688 = vadd.xlane.f32.xlu0 %v2657
      %v2689 = vpop.xlane.xlu0 %2688
      %2690 = vadd.xlane.f32.xlu0 %v2659
      %v2691 = vpop.xlane.xlu0 %2690
      %2692 = vadd.xlane.f32.xlu0 %v2661
      %v2693 = vpop.xlane.xlu0 %2692
      %2694 = vadd.xlane.f32.xlu0 %v2663
      %v2695 = vpop.xlane.xlu0 %2694
      %2696 = vadd.xlane.f32.xlu0 %v2665
      %v2697 = vpop.xlane.xlu0 %2696
      %v2698 = vrcp.pop %v2667
      %v2699 = vrcp.pop %v2669
      %v2700 = vrcp.pop %v2671
      %v2701 = vrcp.pop %v2673
      %v2702 = vrcp.pop %v2675
      %v2703 = vrcp.pop %v2677
      %v2704 = vrcp.pop %v2679
      %v2705 = vrcp.pop %v2681
      %v2706 = vrcp.pop %v2683
      %v2707 = vrcp.pop %v2685
      %v2708 = vrcp.pop %v2687
      %v2709 = vrcp.pop %v2689
      %v2710 = vrcp.pop %v2691
      %v2711 = vrcp.pop %v2693
      %v2712 = vrcp.pop %v2695
      %v2713 = vrcp.pop %v2697
      %v2714 = vpack.c.bf16 %v2637, %v2635
      %v2715 = vpack.c.bf16 %v2641, %v2639
      %v2716 = vpack.c.bf16 %v2645, %v2643
      %v2717 = vpack.c.bf16 %v2649, %v2647
      %v2718 = vpack.c.bf16 %v2653, %v2651
      %v2719 = vpack.c.bf16 %v2657, %v2655
      %v2720 = vpack.c.bf16 %v2661, %v2659
      %v2721 = vpack.c.bf16 %v2665, %v2663
      %2722 = vrot.lane.b32.xlu0 %v2385, 52
      %v2723 = vpop.permute.xlu0 %2722
      %2724 = vrot.lane.b32.xlu0 %v2386, 52
      %v2725 = vpop.permute.xlu0 %2724
      %2726 = vrot.lane.b32.xlu0 %v2387, 52
      %v2727 = vpop.permute.xlu0 %2726
      %2728 = vrot.lane.b32.xlu0 %v2388, 52
      %v2729 = vpop.permute.xlu0 %2728
      %2730 = vrot.lane.b32.xlu0 %v2389, 52
      %v2731 = vpop.permute.xlu0 %2730
      %2732 = vrot.lane.b32.xlu0 %v2390, 52
      %v2733 = vpop.permute.xlu0 %2732
      %2734 = vrot.lane.b32.xlu0 %v2391, 52
      %v2735 = vpop.permute.xlu0 %2734
      %2736 = vrot.lane.b32.xlu0 %v2392, 52
      %v2737 = vpop.permute.xlu0 %2736
      %2746 = vmatprep.subr.bf16.mxu0 0
      %2747 = vmatpush1.bf16.msra.mxu0 %v2737
      %2748 = vmatprep.subr.bf16.mxu0 0
      %2749 = vmatpush1.bf16.msra.mxu0 %v2735
      %2750 = vmatprep.subr.bf16.mxu0 0
      %2751 = vmatpush1.bf16.msra.mxu0 %v2733
      %2752 = vmatprep.subr.bf16.mxu0 0
      %2753 = vmatpush1.bf16.msra.mxu0 %v2731
      %2754 = vmatprep.subr.bf16.mxu0 0
      %2755 = vmatpush1.bf16.msra.mxu0 %v2729
      %2756 = vmatprep.subr.bf16.mxu0 0
      %2757 = vmatpush1.bf16.msra.mxu0 %v2727
      %2758 = vmatprep.subr.bf16.mxu0 0
      %2759 = vmatpush1.bf16.msra.mxu0 %v2725
      %2760 = vmatprep.subr.bf16.mxu0 0
      %2761 = vmatpush1.bf16.msra.mxu0 %v2723
      %2762 = vmatprep.subr.bf16.mxu0 0
      %2763 = vmatpush2.bf16.msra.mxu0 0
      %2764 = vmatprep.subr.bf16.mxu0 0
      %2765 = vmatpush2.bf16.msra.mxu0 0
      %2766 = vmatprep.subr.bf16.mxu0 0
      %2767 = vmatpush2.bf16.msra.mxu0 0
      %2768 = vmatprep.subr.bf16.mxu0 0
      %2769 = vmatpush2.bf16.msra.mxu0 0
      %2770 = vmatprep.subr.bf16.mxu0 0
      %2771 = vmatpush2.bf16.msra.mxu0 0
      %2772 = vmatprep.subr.bf16.mxu0 0
      %2773 = vmatpush2.bf16.msra.mxu0 0
      %2774 = vmatprep.subr.bf16.mxu0 0
      %2775 = vmatpush2.bf16.msra.mxu0 0
      %2776 = vmatprep.subr.bf16.mxu0 0
      %2777 = vmatpush2.bf16.msra.mxu0 0
      %2778 = vmatprep.mubr.bf16.mxu0 0
      %2779 = vmatmul.mubr.bf16.gmra.mxu0 %v2714
      %v2780 = vpop.f32.mrf.mxu0
      %v2781 = vadd.f32 0.0, %v2780
      %v2782 = vpop.f32.mrf.mxu0
      %v2783 = vpop.f32.mrf.mxu0
      %v2784 = vadd.f32 0.0, %v2783
      %v2785 = vpop.f32.mrf.mxu0
      %2786 = vmatprep.mubr.bf16.mxu0 0
      %2787 = vmatmul.mubr.bf16.gmra.mxu0 %v2715
      %v2788 = vpop.f32.mrf.mxu0
      %v2789 = vadd.f32 0.0, %v2788
      %v2790 = vpop.f32.mrf.mxu0
      %v2791 = vpop.f32.mrf.mxu0
      %v2792 = vadd.f32 0.0, %v2791
      %v2793 = vpop.f32.mrf.mxu0
      %2794 = vmatprep.mubr.bf16.mxu0 0
      %2795 = vmatmul.mubr.bf16.gmra.mxu0 %v2716
      %v2796 = vpop.f32.mrf.mxu0
      %v2797 = vadd.f32 0.0, %v2796
      %v2798 = vpop.f32.mrf.mxu0
      %v2799 = vpop.f32.mrf.mxu0
      %v2800 = vadd.f32 0.0, %v2799
      %v2801 = vpop.f32.mrf.mxu0
      %2802 = vmatprep.mubr.bf16.mxu0 0
      %2803 = vmatmul.mubr.bf16.gmra.mxu0 %v2717
      %v2804 = vpop.f32.mrf.mxu0
      %v2805 = vadd.f32 0.0, %v2804
      %v2806 = vpop.f32.mrf.mxu0
      %v2807 = vpop.f32.mrf.mxu0
      %v2808 = vadd.f32 0.0, %v2807
      %v2809 = vpop.f32.mrf.mxu0
      %2810 = vmatprep.mubr.bf16.mxu0 0
      %2811 = vmatmul.mubr.bf16.gmra.mxu0 %v2718
      %v2812 = vpop.f32.mrf.mxu0
      %v2813 = vadd.f32 0.0, %v2812
      %v2814 = vpop.f32.mrf.mxu0
      %v2815 = vpop.f32.mrf.mxu0
      %v2816 = vadd.f32 0.0, %v2815
      %v2817 = vpop.f32.mrf.mxu0
      %2818 = vmatprep.mubr.bf16.mxu0 0
      %2819 = vmatmul.mubr.bf16.gmra.mxu0 %v2719
      %v2820 = vpop.f32.mrf.mxu0
      %v2821 = vadd.f32 0.0, %v2820
      %v2822 = vpop.f32.mrf.mxu0
      %v2823 = vpop.f32.mrf.mxu0
      %v2824 = vadd.f32 0.0, %v2823
      %v2825 = vpop.f32.mrf.mxu0
      %2826 = vmatprep.mubr.bf16.mxu0 0
      %2827 = vmatmul.mubr.bf16.gmra.mxu0 %v2720
      %v2828 = vpop.f32.mrf.mxu0
      %v2829 = vadd.f32 0.0, %v2828
      %v2830 = vpop.f32.mrf.mxu0
      %v2831 = vpop.f32.mrf.mxu0
      %v2832 = vadd.f32 0.0, %v2831
      %v2833 = vpop.f32.mrf.mxu0
      %2834 = vmatprep.mubr.bf16.mxu0 0
      %2835 = vmatmul.mubr.bf16.gmra.mxu0 %v2721
      %v2836 = vpop.f32.mrf.mxu0
      %v2837 = vadd.f32 0.0, %v2836
      %v2838 = vpop.f32.mrf.mxu0
      %v2839 = vpop.f32.mrf.mxu0
      %v2840 = vadd.f32 0.0, %v2839
      %v2841 = vpop.f32.mrf.mxu0
      %2842 = vdwg.mxu0
      %v2843 = vmul.f32 %v2781, %v2698
      %v2844 = vmul.f32 %v2784, %v2699
      %v2845 = vmul.f32 %v2789, %v2700
      %v2846 = vmul.f32 %v2792, %v2701
      %v2847 = vmul.f32 %v2797, %v2702
      %v2848 = vmul.f32 %v2800, %v2703
      %v2849 = vmul.f32 %v2805, %v2704
      %v2850 = vmul.f32 %v2808, %v2705
      %v2851 = vmul.f32 %v2813, %v2706
      %v2852 = vmul.f32 %v2816, %v2707
      %v2853 = vmul.f32 %v2821, %v2708
      %v2854 = vmul.f32 %v2824, %v2709
      %v2855 = vmul.f32 %v2829, %v2710
      %v2856 = vmul.f32 %v2832, %v2711
      %v2857 = vmul.f32 %v2837, %v2712
      %v2858 = vmul.f32 %v2840, %v2713
      %v2859 = vpack.c.bf16 %v2844, %v2843
      %v2860 = vpack.c.bf16 %v2846, %v2845
      %v2861 = vpack.c.bf16 %v2848, %v2847
      %v2862 = vpack.c.bf16 %v2850, %v2849
      %v2863 = vpack.c.bf16 %v2852, %v2851
      %v2864 = vpack.c.bf16 %v2854, %v2853
      %v2865 = vpack.c.bf16 %v2856, %v2855
      %v2866 = vpack.c.bf16 %v2858, %v2857
      %v2875 = vunpack.c.l.b16 %v2859
      %v2876 = vunpack.c.h.b16 %v2859
      %v2877 = vunpack.c.l.b16 %v2860
      %v2878 = vunpack.c.h.b16 %v2860
      %v2879 = vunpack.c.l.b16 %v2861
      %v2880 = vunpack.c.h.b16 %v2861
      %v2881 = vunpack.c.l.b16 %v2862
      %v2882 = vunpack.c.h.b16 %v2862
      %v2883 = vunpack.c.l.b16 %v2863
      %v2884 = vunpack.c.h.b16 %v2863
      %v2885 = vunpack.c.l.b16 %v2864
      %v2886 = vunpack.c.h.b16 %v2864
      %v2887 = vunpack.c.l.b16 %v2865
      %v2888 = vunpack.c.h.b16 %v2865
      %v2889 = vunpack.c.l.b16 %v2866
      %v2890 = vunpack.c.h.b16 %v2866
      %v2891 = vpack.c.b16 %v2875, %v2875
      %v2892 = vpack.c.b16 %v2876, %v2876
      %v2893 = vpack.c.b16 %v2877, %v2877
      %v2894 = vpack.c.b16 %v2878, %v2878
      %v2895 = vpack.c.b16 %v2879, %v2879
      %v2896 = vpack.c.b16 %v2880, %v2880
      %v2897 = vpack.c.b16 %v2881, %v2881
      %v2898 = vpack.c.b16 %v2882, %v2882
      %v2899 = vpack.c.b16 %v2883, %v2883
      %v2900 = vpack.c.b16 %v2884, %v2884
      %v2901 = vpack.c.b16 %v2885, %v2885
      %v2902 = vpack.c.b16 %v2886, %v2886
      %v2903 = vpack.c.b16 %v2887, %v2887
      %v2904 = vpack.c.b16 %v2888, %v2888
      %v2905 = vpack.c.b16 %v2889, %v2889
      %v2906 = vpack.c.b16 %v2890, %v2890
      %2907 = vrot.lane.b32.xlu0 %v2891, 12
      %v2908 = vpop.permute.xlu0 %2907
      %2909 = vrot.lane.b32.xlu0 %v2892, 12
      %v2910 = vpop.permute.xlu0 %2909
      %2911 = vrot.lane.b32.xlu0 %v2893, 12
      %v2912 = vpop.permute.xlu0 %2911
      %2913 = vrot.lane.b32.xlu0 %v2894, 12
      %v2914 = vpop.permute.xlu0 %2913
      %2915 = vrot.lane.b32.xlu0 %v2895, 12
      %v2916 = vpop.permute.xlu0 %2915
      %2917 = vrot.lane.b32.xlu0 %v2896, 12
      %v2918 = vpop.permute.xlu0 %2917
      %2919 = vrot.lane.b32.xlu0 %v2897, 12
      %v2920 = vpop.permute.xlu0 %2919
      %2921 = vrot.lane.b32.xlu0 %v2898, 12
      %v2922 = vpop.permute.xlu0 %2921
      %2923 = vrot.lane.b32.xlu0 %v2899, 12
      %v2924 = vpop.permute.xlu0 %2923
      %2925 = vrot.lane.b32.xlu0 %v2900, 12
      %v2926 = vpop.permute.xlu0 %2925
      %2927 = vrot.lane.b32.xlu0 %v2901, 12
      %v2928 = vpop.permute.xlu0 %2927
      %2929 = vrot.lane.b32.xlu0 %v2902, 12
      %v2930 = vpop.permute.xlu0 %2929
      %2931 = vrot.lane.b32.xlu0 %v2903, 12
      %v2932 = vpop.permute.xlu0 %2931
      %2933 = vrot.lane.b32.xlu0 %v2904, 12
      %v2934 = vpop.permute.xlu0 %2933
      %2935 = vrot.lane.b32.xlu0 %v2905, 12
      %v2936 = vpop.permute.xlu0 %2935
      %2937 = vrot.lane.b32.xlu0 %v2906, 12
      %v2938 = vpop.permute.xlu0 %2937
      %vm2955 = vcmask 126048
      %2956 = vst.msk [vmem:[#allocation3] sm:$0xf] %vm2955, %v2908
      %2957 = vst.msk [vmem:[#allocation3 + $0x4] sm:$0xf] %vm2955, %v2910
      %2958 = vst.msk [vmem:[#allocation3 + $0x8] sm:$0xf] %vm2955, %v2912
      %2959 = vst.msk [vmem:[#allocation3 + $0xc] sm:$0xf] %vm2955, %v2914
      %2960 = vst.msk [vmem:[#allocation3 + $0x10] sm:$0xf] %vm2955, %v2916
      %2961 = vst.msk [vmem:[#allocation3 + $0x14] sm:$0xf] %vm2955, %v2918
      %2962 = vst.msk [vmem:[#allocation3 + $0x18] sm:$0xf] %vm2955, %v2920
      %2963 = vst.msk [vmem:[#allocation3 + $0x1c] sm:$0xf] %vm2955, %v2922
      %2964 = vst.msk [vmem:[#allocation3 + $0x20] sm:$0xf] %vm2955, %v2924
      %2965 = vst.msk [vmem:[#allocation3 + $0x24] sm:$0xf] %vm2955, %v2926
      %2966 = vst.msk [vmem:[#allocation3 + $0x28] sm:$0xf] %vm2955, %v2928
      %2967 = vst.msk [vmem:[#allocation3 + $0x2c] sm:$0xf] %vm2955, %v2930
      %2968 = vst.msk [vmem:[#allocation3 + $0x30] sm:$0xf] %vm2955, %v2932
      %2969 = vst.msk [vmem:[#allocation3 + $0x34] sm:$0xf] %vm2955, %v2934
      %2970 = vst.msk [vmem:[#allocation3 + $0x38] sm:$0xf] %vm2955, %v2936
      %2971 = vst.msk [vmem:[#allocation3 + $0x3c] sm:$0xf] %vm2955, %v2938
      %v2972 = vld [vmem:[#allocation2] sm:$0xf]
      %v2973 = vld [vmem:[#allocation2 + $0x4] sm:$0xf]
      %v2974 = vld [vmem:[#allocation2 + $0x8] sm:$0xf]
      %v2975 = vld [vmem:[#allocation2 + $0xc] sm:$0xf]
      %v2976 = vld [vmem:[#allocation2 + $0x10] sm:$0xf]
      %v2977 = vld [vmem:[#allocation2 + $0x14] sm:$0xf]
      %v2978 = vld [vmem:[#allocation2 + $0x18] sm:$0xf]
      %v2979 = vld [vmem:[#allocation2 + $0x1c] sm:$0xf]
      %v2980 = vld [vmem:[#allocation2 + $0x20] sm:$0xf]
      %v2981 = vld [vmem:[#allocation2 + $0x24] sm:$0xf]
      %v2982 = vld [vmem:[#allocation2 + $0x28] sm:$0xf]
      %v2983 = vld [vmem:[#allocation2 + $0x2c] sm:$0xf]
      %v2984 = vld [vmem:[#allocation2 + $0x30] sm:$0xf]
      %v2985 = vld [vmem:[#allocation2 + $0x34] sm:$0xf]
      %v2986 = vld [vmem:[#allocation2 + $0x38] sm:$0xf]
      %v2987 = vld [vmem:[#allocation2 + $0x3c] sm:$0xf]
      %v3004 = vunpack.c.l.b16 %v2972
      %v3005 = vunpack.c.l.b16 %v2973
      %v3006 = vunpack.c.l.b16 %v2974
      %v3007 = vunpack.c.l.b16 %v2975
      %v3008 = vunpack.c.l.b16 %v2976
      %v3009 = vunpack.c.l.b16 %v2977
      %v3010 = vunpack.c.l.b16 %v2978
      %v3011 = vunpack.c.l.b16 %v2979
      %v3012 = vunpack.c.l.b16 %v2980
      %v3013 = vunpack.c.l.b16 %v2981
      %v3014 = vunpack.c.l.b16 %v2982
      %v3015 = vunpack.c.l.b16 %v2983
      %v3016 = vunpack.c.l.b16 %v2984
      %v3017 = vunpack.c.l.b16 %v2985
      %v3018 = vunpack.c.l.b16 %v2986
      %v3019 = vunpack.c.l.b16 %v2987
      %v3020 = vpack.c.b16 %v3005, %v3004
      %v3021 = vpack.c.b16 %v3007, %v3006
      %v3022 = vpack.c.b16 %v3009, %v3008
      %v3023 = vpack.c.b16 %v3011, %v3010
      %v3024 = vpack.c.b16 %v3013, %v3012
      %v3025 = vpack.c.b16 %v3015, %v3014
      %v3026 = vpack.c.b16 %v3017, %v3016
      %v3027 = vpack.c.b16 %v3019, %v3018
      %3028 = vrot.lane.b32.xlu0 %v3020, 112
      %v3029 = vpop.permute.xlu0 %3028
      %3030 = vrot.lane.b32.xlu0 %v3021, 112
      %v3031 = vpop.permute.xlu0 %3030
      %3032 = vrot.lane.b32.xlu0 %v3022, 112
      %v3033 = vpop.permute.xlu0 %3032
      %3034 = vrot.lane.b32.xlu0 %v3023, 112
      %v3035 = vpop.permute.xlu0 %3034
      %3036 = vrot.lane.b32.xlu0 %v3024, 112
      %v3037 = vpop.permute.xlu0 %3036
      %3038 = vrot.lane.b32.xlu0 %v3025, 112
      %v3039 = vpop.permute.xlu0 %3038
      %3040 = vrot.lane.b32.xlu0 %v3026, 112
      %v3041 = vpop.permute.xlu0 %3040
      %3042 = vrot.lane.b32.xlu0 %v3027, 112
      %v3043 = vpop.permute.xlu0 %3042
      %3044 = vrot.lane.b32.xlu0 %v3020, 80
      %v3045 = vpop.permute.xlu0 %3044
      %3046 = vrot.lane.b32.xlu0 %v3021, 80
      %v3047 = vpop.permute.xlu0 %3046
      %3048 = vrot.lane.b32.xlu0 %v3022, 80
      %v3049 = vpop.permute.xlu0 %3048
      %3050 = vrot.lane.b32.xlu0 %v3023, 80
      %v3051 = vpop.permute.xlu0 %3050
      %3052 = vrot.lane.b32.xlu0 %v3024, 80
      %v3053 = vpop.permute.xlu0 %3052
      %3054 = vrot.lane.b32.xlu0 %v3025, 80
      %v3055 = vpop.permute.xlu0 %3054
      %3056 = vrot.lane.b32.xlu0 %v3026, 80
      %v3057 = vpop.permute.xlu0 %3056
      %3058 = vrot.lane.b32.xlu0 %v3027, 80
      %v3059 = vpop.permute.xlu0 %3058
      %v3061 = vsel %vm549, %v3029, 0
      %v3064 = vsel %vm549, %v3031, 0
      %v3067 = vsel %vm549, %v3033, 0
      %v3070 = vsel %vm549, %v3035, 0
      %v3073 = vsel %vm549, %v3037, 0
      %v3076 = vsel %vm549, %v3039, 0
      %v3079 = vsel %vm549, %v3041, 0
      %v3082 = vsel %vm549, %v3043, 0
      %v3085 = vsel %vm549, %v3045, 0
      %v3088 = vsel %vm549, %v3047, 0
      %v3091 = vsel %vm549, %v3049, 0
      %v3094 = vsel %vm549, %v3051, 0
      %v3097 = vsel %vm549, %v3053, 0
      %v3100 = vsel %vm549, %v3055, 0
      %v3103 = vsel %vm549, %v3057, 0
      %v3106 = vsel %vm549, %v3059, 0
      %3108 = vmatprep.subr.bf16.mxu0 0
      %3109 = vmatpush1.bf16.xpose.msra.mxu0 %v3106
      %3110 = vmatprep.subr.bf16.mxu0 0
      %3111 = vmatpush1.bf16.xpose.msra.mxu0 %v3103
      %3112 = vmatprep.subr.bf16.mxu0 0
      %3113 = vmatpush1.bf16.xpose.msra.mxu0 %v3100
      %3114 = vmatprep.subr.bf16.mxu0 0
      %3115 = vmatpush1.bf16.xpose.msra.mxu0 %v3097
      %3116 = vmatprep.subr.bf16.mxu0 0
      %3117 = vmatpush1.bf16.xpose.msra.mxu0 %v3094
      %3118 = vmatprep.subr.bf16.mxu0 0
      %3119 = vmatpush1.bf16.xpose.msra.mxu0 %v3091
      %3120 = vmatprep.subr.bf16.mxu0 0
      %3121 = vmatpush1.bf16.xpose.msra.mxu0 %v3088
      %3122 = vmatprep.subr.bf16.mxu0 0
      %3123 = vmatpush1.bf16.xpose.msra.mxu0 %v3085
      %3124 = vmatprep.subr.bf16.mxu0 0
      %3125 = vmatpush2.bf16.xpose.msra.mxu0 0
      %3126 = vmatprep.subr.bf16.mxu0 0
      %3127 = vmatpush2.bf16.xpose.msra.mxu0 0
      %3128 = vmatprep.subr.bf16.mxu0 0
      %3129 = vmatpush2.bf16.xpose.msra.mxu0 0
      %3130 = vmatprep.subr.bf16.mxu0 0
      %3131 = vmatpush2.bf16.xpose.msra.mxu0 0
      %3132 = vmatprep.subr.bf16.mxu0 0
      %3133 = vmatpush2.bf16.xpose.msra.mxu0 0
      %3134 = vmatprep.subr.bf16.mxu0 0
      %3135 = vmatpush2.bf16.xpose.msra.mxu0 0
      %3136 = vmatprep.subr.bf16.mxu0 0
      %3137 = vmatpush2.bf16.xpose.msra.mxu0 0
      %3138 = vmatprep.subr.bf16.mxu0 0
      %3139 = vmatpush2.bf16.xpose.msra.mxu0 0
      %3140 = vmatprep.mubr.bf16.mxu0 0
      %3141 = vmatmul.mubr.bf16.gmra.mxu0 %v3061
      %v3142 = vpop.f32.mrf.mxu0
      %v3143 = vadd.f32 0.0, %v3142
      %v3144 = vpop.f32.mrf.mxu0
      %v3145 = vpop.f32.mrf.mxu0
      %v3146 = vadd.f32 0.0, %v3145
      %v3147 = vpop.f32.mrf.mxu0
      %3148 = vmatprep.mubr.bf16.mxu0 0
      %3149 = vmatmul.mubr.bf16.gmra.mxu0 %v3064
      %v3150 = vpop.f32.mrf.mxu0
      %v3151 = vadd.f32 0.0, %v3150
      %v3152 = vpop.f32.mrf.mxu0
      %v3153 = vpop.f32.mrf.mxu0
      %v3154 = vadd.f32 0.0, %v3153
      %v3155 = vpop.f32.mrf.mxu0
      %3156 = vmatprep.mubr.bf16.mxu0 0
      %3157 = vmatmul.mubr.bf16.gmra.mxu0 %v3067
      %v3158 = vpop.f32.mrf.mxu0
      %v3159 = vadd.f32 0.0, %v3158
      %v3160 = vpop.f32.mrf.mxu0
      %v3161 = vpop.f32.mrf.mxu0
      %v3162 = vadd.f32 0.0, %v3161
      %v3163 = vpop.f32.mrf.mxu0
      %3164 = vmatprep.mubr.bf16.mxu0 0
      %3165 = vmatmul.mubr.bf16.gmra.mxu0 %v3070
      %v3166 = vpop.f32.mrf.mxu0
      %v3167 = vadd.f32 0.0, %v3166
      %v3168 = vpop.f32.mrf.mxu0
      %v3169 = vpop.f32.mrf.mxu0
      %v3170 = vadd.f32 0.0, %v3169
      %v3171 = vpop.f32.mrf.mxu0
      %3172 = vmatprep.mubr.bf16.mxu0 0
      %3173 = vmatmul.mubr.bf16.gmra.mxu0 %v3073
      %v3174 = vpop.f32.mrf.mxu0
      %v3175 = vadd.f32 0.0, %v3174
      %v3176 = vpop.f32.mrf.mxu0
      %v3177 = vpop.f32.mrf.mxu0
      %v3178 = vadd.f32 0.0, %v3177
      %v3179 = vpop.f32.mrf.mxu0
      %3180 = vmatprep.mubr.bf16.mxu0 0
      %3181 = vmatmul.mubr.bf16.gmra.mxu0 %v3076
      %v3182 = vpop.f32.mrf.mxu0
      %v3183 = vadd.f32 0.0, %v3182
      %v3184 = vpop.f32.mrf.mxu0
      %v3185 = vpop.f32.mrf.mxu0
      %v3186 = vadd.f32 0.0, %v3185
      %v3187 = vpop.f32.mrf.mxu0
      %3188 = vmatprep.mubr.bf16.mxu0 0
      %3189 = vmatmul.mubr.bf16.gmra.mxu0 %v3079
      %v3190 = vpop.f32.mrf.mxu0
      %v3191 = vadd.f32 0.0, %v3190
      %v3192 = vpop.f32.mrf.mxu0
      %v3193 = vpop.f32.mrf.mxu0
      %v3194 = vadd.f32 0.0, %v3193
      %v3195 = vpop.f32.mrf.mxu0
      %3196 = vmatprep.mubr.bf16.mxu0 0
      %3197 = vmatmul.mubr.bf16.gmra.mxu0 %v3082
      %v3198 = vpop.f32.mrf.mxu0
      %v3199 = vadd.f32 0.0, %v3198
      %v3200 = vpop.f32.mrf.mxu0
      %v3201 = vpop.f32.mrf.mxu0
      %v3202 = vadd.f32 0.0, %v3201
      %v3203 = vpop.f32.mrf.mxu0
      %3204 = vdwg.mxu0
      %v3205 = vsel %vm696, %v3143, -1e+30
      %v3206 = vsel %vm696, %v3146, -1e+30
      %v3207 = vsel %vm696, %v3151, -1e+30
      %v3208 = vsel %vm696, %v3154, -1e+30
      %v3209 = vsel %vm696, %v3159, -1e+30
      %v3210 = vsel %vm696, %v3162, -1e+30
      %v3211 = vsel %vm696, %v3167, -1e+30
      %v3212 = vsel %vm696, %v3170, -1e+30
      %v3213 = vsel %vm696, %v3175, -1e+30
      %v3214 = vsel %vm696, %v3178, -1e+30
      %v3215 = vsel %vm696, %v3183, -1e+30
      %v3216 = vsel %vm696, %v3186, -1e+30
      %v3217 = vsel %vm696, %v3191, -1e+30
      %v3218 = vsel %vm696, %v3194, -1e+30
      %v3219 = vsel %vm696, %v3199, -1e+30
      %v3220 = vsel %vm696, %v3202, -1e+30
      %3221 = vmax.xlane.f32.xlu0 %v3205
      %v3222 = vpop.xlane.xlu0 %3221
      %3223 = vmax.xlane.f32.xlu0 %v3206
      %v3224 = vpop.xlane.xlu0 %3223
      %3225 = vmax.xlane.f32.xlu0 %v3207
      %v3226 = vpop.xlane.xlu0 %3225
      %3227 = vmax.xlane.f32.xlu0 %v3208
      %v3228 = vpop.xlane.xlu0 %3227
      %3229 = vmax.xlane.f32.xlu0 %v3209
      %v3230 = vpop.xlane.xlu0 %3229
      %3231 = vmax.xlane.f32.xlu0 %v3210
      %v3232 = vpop.xlane.xlu0 %3231
      %3233 = vmax.xlane.f32.xlu0 %v3211
      %v3234 = vpop.xlane.xlu0 %3233
      %3235 = vmax.xlane.f32.xlu0 %v3212
      %v3236 = vpop.xlane.xlu0 %3235
      %3237 = vmax.xlane.f32.xlu0 %v3213
      %v3238 = vpop.xlane.xlu0 %3237
      %3239 = vmax.xlane.f32.xlu0 %v3214
      %v3240 = vpop.xlane.xlu0 %3239
      %3241 = vmax.xlane.f32.xlu0 %v3215
      %v3242 = vpop.xlane.xlu0 %3241
      %3243 = vmax.xlane.f32.xlu0 %v3216
      %v3244 = vpop.xlane.xlu0 %3243
      %3245 = vmax.xlane.f32.xlu0 %v3217
      %v3246 = vpop.xlane.xlu0 %3245
      %3247 = vmax.xlane.f32.xlu0 %v3218
      %v3248 = vpop.xlane.xlu0 %3247
      %3249 = vmax.xlane.f32.xlu0 %v3219
      %v3250 = vpop.xlane.xlu0 %3249
      %3251 = vmax.xlane.f32.xlu0 %v3220
      %v3252 = vpop.xlane.xlu0 %3251
      %v3253 = vsub.f32 %v3205, %v3222
      %v3254 = vsub.f32 %v3206, %v3224
      %v3255 = vsub.f32 %v3207, %v3226
      %v3256 = vsub.f32 %v3208, %v3228
      %v3257 = vsub.f32 %v3209, %v3230
      %v3258 = vsub.f32 %v3210, %v3232
      %v3259 = vsub.f32 %v3211, %v3234
      %v3260 = vsub.f32 %v3212, %v3236
      %v3261 = vsub.f32 %v3213, %v3238
      %v3262 = vsub.f32 %v3214, %v3240
      %v3263 = vsub.f32 %v3215, %v3242
      %v3264 = vsub.f32 %v3216, %v3244
      %v3265 = vsub.f32 %v3217, %v3246
      %v3266 = vsub.f32 %v3218, %v3248
      %v3267 = vsub.f32 %v3219, %v3250
      %v3268 = vsub.f32 %v3220, %v3252
      %v3269 = vmul.f32 %v3253, 1.442695
      %v3270 = vpow.pop %v3269
      %v3271 = vmul.f32 %v3254, 1.442695
      %v3272 = vpow.pop %v3271
      %v3273 = vmul.f32 %v3255, 1.442695
      %v3274 = vpow.pop %v3273
      %v3275 = vmul.f32 %v3256, 1.442695
      %v3276 = vpow.pop %v3275
      %v3277 = vmul.f32 %v3257, 1.442695
      %v3278 = vpow.pop %v3277
      %v3279 = vmul.f32 %v3258, 1.442695
      %v3280 = vpow.pop %v3279
      %v3281 = vmul.f32 %v3259, 1.442695
      %v3282 = vpow.pop %v3281
      %v3283 = vmul.f32 %v3260, 1.442695
      %v3284 = vpow.pop %v3283
      %v3285 = vmul.f32 %v3261, 1.442695
      %v3286 = vpow.pop %v3285
      %v3287 = vmul.f32 %v3262, 1.442695
      %v3288 = vpow.pop %v3287
      %v3289 = vmul.f32 %v3263, 1.442695
      %v3290 = vpow.pop %v3289
      %v3291 = vmul.f32 %v3264, 1.442695
      %v3292 = vpow.pop %v3291
      %v3293 = vmul.f32 %v3265, 1.442695
      %v3294 = vpow.pop %v3293
      %v3295 = vmul.f32 %v3266, 1.442695
      %v3296 = vpow.pop %v3295
      %v3297 = vmul.f32 %v3267, 1.442695
      %v3298 = vpow.pop %v3297
      %v3299 = vmul.f32 %v3268, 1.442695
      %v3300 = vpow.pop %v3299
      %3301 = vadd.xlane.f32.xlu0 %v3270
      %v3302 = vpop.xlane.xlu0 %3301
      %3303 = vadd.xlane.f32.xlu0 %v3272
      %v3304 = vpop.xlane.xlu0 %3303
      %3305 = vadd.xlane.f32.xlu0 %v3274
      %v3306 = vpop.xlane.xlu0 %3305
      %3307 = vadd.xlane.f32.xlu0 %v3276
      %v3308 = vpop.xlane.xlu0 %3307
      %3309 = vadd.xlane.f32.xlu0 %v3278
      %v3310 = vpop.xlane.xlu0 %3309
      %3311 = vadd.xlane.f32.xlu0 %v3280
      %v3312 = vpop.xlane.xlu0 %3311
      %3313 = vadd.xlane.f32.xlu0 %v3282
      %v3314 = vpop.xlane.xlu0 %3313
      %3315 = vadd.xlane.f32.xlu0 %v3284
      %v3316 = vpop.xlane.xlu0 %3315
      %3317 = vadd.xlane.f32.xlu0 %v3286
      %v3318 = vpop.xlane.xlu0 %3317
      %3319 = vadd.xlane.f32.xlu0 %v3288
      %v3320 = vpop.xlane.xlu0 %3319
      %3321 = vadd.xlane.f32.xlu0 %v3290
      %v3322 = vpop.xlane.xlu0 %3321
      %3323 = vadd.xlane.f32.xlu0 %v3292
      %v3324 = vpop.xlane.xlu0 %3323
      %3325 = vadd.xlane.f32.xlu0 %v3294
      %v3326 = vpop.xlane.xlu0 %3325
      %3327 = vadd.xlane.f32.xlu0 %v3296
      %v3328 = vpop.xlane.xlu0 %3327
      %3329 = vadd.xlane.f32.xlu0 %v3298
      %v3330 = vpop.xlane.xlu0 %3329
      %3331 = vadd.xlane.f32.xlu0 %v3300
      %v3332 = vpop.xlane.xlu0 %3331
      %v3333 = vrcp.pop %v3302
      %v3334 = vrcp.pop %v3304
      %v3335 = vrcp.pop %v3306
      %v3336 = vrcp.pop %v3308
      %v3337 = vrcp.pop %v3310
      %v3338 = vrcp.pop %v3312
      %v3339 = vrcp.pop %v3314
      %v3340 = vrcp.pop %v3316
      %v3341 = vrcp.pop %v3318
      %v3342 = vrcp.pop %v3320
      %v3343 = vrcp.pop %v3322
      %v3344 = vrcp.pop %v3324
      %v3345 = vrcp.pop %v3326
      %v3346 = vrcp.pop %v3328
      %v3347 = vrcp.pop %v3330
      %v3348 = vrcp.pop %v3332
      %v3349 = vpack.c.bf16 %v3272, %v3270
      %v3350 = vpack.c.bf16 %v3276, %v3274
      %v3351 = vpack.c.bf16 %v3280, %v3278
      %v3352 = vpack.c.bf16 %v3284, %v3282
      %v3353 = vpack.c.bf16 %v3288, %v3286
      %v3354 = vpack.c.bf16 %v3292, %v3290
      %v3355 = vpack.c.bf16 %v3296, %v3294
      %v3356 = vpack.c.bf16 %v3300, %v3298
      %3357 = vrot.lane.b32.xlu0 %v3020, 48
      %v3358 = vpop.permute.xlu0 %3357
      %3359 = vrot.lane.b32.xlu0 %v3021, 48
      %v3360 = vpop.permute.xlu0 %3359
      %3361 = vrot.lane.b32.xlu0 %v3022, 48
      %v3362 = vpop.permute.xlu0 %3361
      %3363 = vrot.lane.b32.xlu0 %v3023, 48
      %v3364 = vpop.permute.xlu0 %3363
      %3365 = vrot.lane.b32.xlu0 %v3024, 48
      %v3366 = vpop.permute.xlu0 %3365
      %3367 = vrot.lane.b32.xlu0 %v3025, 48
      %v3368 = vpop.permute.xlu0 %3367
      %3369 = vrot.lane.b32.xlu0 %v3026, 48
      %v3370 = vpop.permute.xlu0 %3369
      %3371 = vrot.lane.b32.xlu0 %v3027, 48
      %v3372 = vpop.permute.xlu0 %3371
      %3381 = vmatprep.subr.bf16.mxu0 0
      %3382 = vmatpush1.bf16.msra.mxu0 %v3372
      %3383 = vmatprep.subr.bf16.mxu0 0
      %3384 = vmatpush1.bf16.msra.mxu0 %v3370
      %3385 = vmatprep.subr.bf16.mxu0 0
      %3386 = vmatpush1.bf16.msra.mxu0 %v3368
      %3387 = vmatprep.subr.bf16.mxu0 0
      %3388 = vmatpush1.bf16.msra.mxu0 %v3366
      %3389 = vmatprep.subr.bf16.mxu0 0
      %3390 = vmatpush1.bf16.msra.mxu0 %v3364
      %3391 = vmatprep.subr.bf16.mxu0 0
      %3392 = vmatpush1.bf16.msra.mxu0 %v3362
      %3393 = vmatprep.subr.bf16.mxu0 0
      %3394 = vmatpush1.bf16.msra.mxu0 %v3360
      %3395 = vmatprep.subr.bf16.mxu0 0
      %3396 = vmatpush1.bf16.msra.mxu0 %v3358
      %3397 = vmatprep.subr.bf16.mxu0 0
      %3398 = vmatpush2.bf16.msra.mxu0 0
      %3399 = vmatprep.subr.bf16.mxu0 0
      %3400 = vmatpush2.bf16.msra.mxu0 0
      %3401 = vmatprep.subr.bf16.mxu0 0
      %3402 = vmatpush2.bf16.msra.mxu0 0
      %3403 = vmatprep.subr.bf16.mxu0 0
      %3404 = vmatpush2.bf16.msra.mxu0 0
      %3405 = vmatprep.subr.bf16.mxu0 0
      %3406 = vmatpush2.bf16.msra.mxu0 0
      %3407 = vmatprep.subr.bf16.mxu0 0
      %3408 = vmatpush2.bf16.msra.mxu0 0
      %3409 = vmatprep.subr.bf16.mxu0 0
      %3410 = vmatpush2.bf16.msra.mxu0 0
      %3411 = vmatprep.subr.bf16.mxu0 0
      %3412 = vmatpush2.bf16.msra.mxu0 0
      %3413 = vmatprep.mubr.bf16.mxu0 0
      %3414 = vmatmul.mubr.bf16.gmra.mxu0 %v3349
      %v3415 = vpop.f32.mrf.mxu0
      %v3416 = vadd.f32 0.0, %v3415
      %v3417 = vpop.f32.mrf.mxu0
      %v3418 = vpop.f32.mrf.mxu0
      %v3419 = vadd.f32 0.0, %v3418
      %v3420 = vpop.f32.mrf.mxu0
      %3421 = vmatprep.mubr.bf16.mxu0 0
      %3422 = vmatmul.mubr.bf16.gmra.mxu0 %v3350
      %v3423 = vpop.f32.mrf.mxu0
      %v3424 = vadd.f32 0.0, %v3423
      %v3425 = vpop.f32.mrf.mxu0
      %v3426 = vpop.f32.mrf.mxu0
      %v3427 = vadd.f32 0.0, %v3426
      %v3428 = vpop.f32.mrf.mxu0
      %3429 = vmatprep.mubr.bf16.mxu0 0
      %3430 = vmatmul.mubr.bf16.gmra.mxu0 %v3351
      %v3431 = vpop.f32.mrf.mxu0
      %v3432 = vadd.f32 0.0, %v3431
      %v3433 = vpop.f32.mrf.mxu0
      %v3434 = vpop.f32.mrf.mxu0
      %v3435 = vadd.f32 0.0, %v3434
      %v3436 = vpop.f32.mrf.mxu0
      %3437 = vmatprep.mubr.bf16.mxu0 0
      %3438 = vmatmul.mubr.bf16.gmra.mxu0 %v3352
      %v3439 = vpop.f32.mrf.mxu0
      %v3440 = vadd.f32 0.0, %v3439
      %v3441 = vpop.f32.mrf.mxu0
      %v3442 = vpop.f32.mrf.mxu0
      %v3443 = vadd.f32 0.0, %v3442
      %v3444 = vpop.f32.mrf.mxu0
      %3445 = vmatprep.mubr.bf16.mxu0 0
      %3446 = vmatmul.mubr.bf16.gmra.mxu0 %v3353
      %v3447 = vpop.f32.mrf.mxu0
      %v3448 = vadd.f32 0.0, %v3447
      %v3449 = vpop.f32.mrf.mxu0
      %v3450 = vpop.f32.mrf.mxu0
      %v3451 = vadd.f32 0.0, %v3450
      %v3452 = vpop.f32.mrf.mxu0
      %3453 = vmatprep.mubr.bf16.mxu0 0
      %3454 = vmatmul.mubr.bf16.gmra.mxu0 %v3354
      %v3455 = vpop.f32.mrf.mxu0
      %v3456 = vadd.f32 0.0, %v3455
      %v3457 = vpop.f32.mrf.mxu0
      %v3458 = vpop.f32.mrf.mxu0
      %v3459 = vadd.f32 0.0, %v3458
      %v3460 = vpop.f32.mrf.mxu0
      %3461 = vmatprep.mubr.bf16.mxu0 0
      %3462 = vmatmul.mubr.bf16.gmra.mxu0 %v3355
      %v3463 = vpop.f32.mrf.mxu0
      %v3464 = vadd.f32 0.0, %v3463
      %v3465 = vpop.f32.mrf.mxu0
      %v3466 = vpop.f32.mrf.mxu0
      %v3467 = vadd.f32 0.0, %v3466
      %v3468 = vpop.f32.mrf.mxu0
      %3469 = vmatprep.mubr.bf16.mxu0 0
      %3470 = vmatmul.mubr.bf16.gmra.mxu0 %v3356
      %v3471 = vpop.f32.mrf.mxu0
      %v3472 = vadd.f32 0.0, %v3471
      %v3473 = vpop.f32.mrf.mxu0
      %v3474 = vpop.f32.mrf.mxu0
      %v3475 = vadd.f32 0.0, %v3474
      %v3476 = vpop.f32.mrf.mxu0
      %3477 = vdwg.mxu0
      %v3478 = vmul.f32 %v3416, %v3333
      %v3479 = vmul.f32 %v3419, %v3334
      %v3480 = vmul.f32 %v3424, %v3335
      %v3481 = vmul.f32 %v3427, %v3336
      %v3482 = vmul.f32 %v3432, %v3337
      %v3483 = vmul.f32 %v3435, %v3338
      %v3484 = vmul.f32 %v3440, %v3339
      %v3485 = vmul.f32 %v3443, %v3340
      %v3486 = vmul.f32 %v3448, %v3341
      %v3487 = vmul.f32 %v3451, %v3342
      %v3488 = vmul.f32 %v3456, %v3343
      %v3489 = vmul.f32 %v3459, %v3344
      %v3490 = vmul.f32 %v3464, %v3345
      %v3491 = vmul.f32 %v3467, %v3346
      %v3492 = vmul.f32 %v3472, %v3347
      %v3493 = vmul.f32 %v3475, %v3348
      %v3494 = vpack.c.bf16 %v3479, %v3478
      %v3495 = vpack.c.bf16 %v3481, %v3480
      %v3496 = vpack.c.bf16 %v3483, %v3482
      %v3497 = vpack.c.bf16 %v3485, %v3484
      %v3498 = vpack.c.bf16 %v3487, %v3486
      %v3499 = vpack.c.bf16 %v3489, %v3488
      %v3500 = vpack.c.bf16 %v3491, %v3490
      %v3501 = vpack.c.bf16 %v3493, %v3492
      %v3510 = vunpack.c.l.b16 %v3494
      %v3511 = vunpack.c.h.b16 %v3494
      %v3512 = vunpack.c.l.b16 %v3495
      %v3513 = vunpack.c.h.b16 %v3495
      %v3514 = vunpack.c.l.b16 %v3496
      %v3515 = vunpack.c.h.b16 %v3496
      %v3516 = vunpack.c.l.b16 %v3497
      %v3517 = vunpack.c.h.b16 %v3497
      %v3518 = vunpack.c.l.b16 %v3498
      %v3519 = vunpack.c.h.b16 %v3498
      %v3520 = vunpack.c.l.b16 %v3499
      %v3521 = vunpack.c.h.b16 %v3499
      %v3522 = vunpack.c.l.b16 %v3500
      %v3523 = vunpack.c.h.b16 %v3500
      %v3524 = vunpack.c.l.b16 %v3501
      %v3525 = vunpack.c.h.b16 %v3501
      %v3526 = vpack.c.b16 %v3510, %v3510
      %v3527 = vpack.c.b16 %v3511, %v3511
      %v3528 = vpack.c.b16 %v3512, %v3512
      %v3529 = vpack.c.b16 %v3513, %v3513
      %v3530 = vpack.c.b16 %v3514, %v3514
      %v3531 = vpack.c.b16 %v3515, %v3515
      %v3532 = vpack.c.b16 %v3516, %v3516
      %v3533 = vpack.c.b16 %v3517, %v3517
      %v3534 = vpack.c.b16 %v3518, %v3518
      %v3535 = vpack.c.b16 %v3519, %v3519
      %v3536 = vpack.c.b16 %v3520, %v3520
      %v3537 = vpack.c.b16 %v3521, %v3521
      %v3538 = vpack.c.b16 %v3522, %v3522
      %v3539 = vpack.c.b16 %v3523, %v3523
      %v3540 = vpack.c.b16 %v3524, %v3524
      %v3541 = vpack.c.b16 %v3525, %v3525
      %3542 = vrot.lane.b32.xlu0 %v3526, 16
      %v3543 = vpop.permute.xlu0 %3542
      %3544 = vrot.lane.b32.xlu0 %v3527, 16
      %v3545 = vpop.permute.xlu0 %3544
      %3546 = vrot.lane.b32.xlu0 %v3528, 16
      %v3547 = vpop.permute.xlu0 %3546
      %3548 = vrot.lane.b32.xlu0 %v3529, 16
      %v3549 = vpop.permute.xlu0 %3548
      %3550 = vrot.lane.b32.xlu0 %v3530, 16
      %v3551 = vpop.permute.xlu0 %3550
      %3552 = vrot.lane.b32.xlu0 %v3531, 16
      %v3553 = vpop.permute.xlu0 %3552
      %3554 = vrot.lane.b32.xlu0 %v3532, 16
      %v3555 = vpop.permute.xlu0 %3554
      %3556 = vrot.lane.b32.xlu0 %v3533, 16
      %v3557 = vpop.permute.xlu0 %3556
      %3558 = vrot.lane.b32.xlu0 %v3534, 16
      %v3559 = vpop.permute.xlu0 %3558
      %3560 = vrot.lane.b32.xlu0 %v3535, 16
      %v3561 = vpop.permute.xlu0 %3560
      %3562 = vrot.lane.b32.xlu0 %v3536, 16
      %v3563 = vpop.permute.xlu0 %3562
      %3564 = vrot.lane.b32.xlu0 %v3537, 16
      %v3565 = vpop.permute.xlu0 %3564
      %3566 = vrot.lane.b32.xlu0 %v3538, 16
      %v3567 = vpop.permute.xlu0 %3566
      %3568 = vrot.lane.b32.xlu0 %v3539, 16
      %v3569 = vpop.permute.xlu0 %3568
      %3570 = vrot.lane.b32.xlu0 %v3540, 16
      %v3571 = vpop.permute.xlu0 %3570
      %3572 = vrot.lane.b32.xlu0 %v3541, 16
      %v3573 = vpop.permute.xlu0 %3572
      %vm3590 = vcmask 158848
      %3591 = vst.msk [vmem:[#allocation3] sm:$0xf] %vm3590, %v3543
      %3592 = vst.msk [vmem:[#allocation3 + $0x4] sm:$0xf] %vm3590, %v3545
      %3593 = vst.msk [vmem:[#allocation3 + $0x8] sm:$0xf] %vm3590, %v3547
      %3594 = vst.msk [vmem:[#allocation3 + $0xc] sm:$0xf] %vm3590, %v3549
      %3595 = vst.msk [vmem:[#allocation3 + $0x10] sm:$0xf] %vm3590, %v3551
      %3596 = vst.msk [vmem:[#allocation3 + $0x14] sm:$0xf] %vm3590, %v3553
      %3597 = vst.msk [vmem:[#allocation3 + $0x18] sm:$0xf] %vm3590, %v3555
      %3598 = vst.msk [vmem:[#allocation3 + $0x1c] sm:$0xf] %vm3590, %v3557
      %3599 = vst.msk [vmem:[#allocation3 + $0x20] sm:$0xf] %vm3590, %v3559
      %3600 = vst.msk [vmem:[#allocation3 + $0x24] sm:$0xf] %vm3590, %v3561
      %3601 = vst.msk [vmem:[#allocation3 + $0x28] sm:$0xf] %vm3590, %v3563
      %3602 = vst.msk [vmem:[#allocation3 + $0x2c] sm:$0xf] %vm3590, %v3565
      %3603 = vst.msk [vmem:[#allocation3 + $0x30] sm:$0xf] %vm3590, %v3567
      %3604 = vst.msk [vmem:[#allocation3 + $0x34] sm:$0xf] %vm3590, %v3569
      %3605 = vst.msk [vmem:[#allocation3 + $0x38] sm:$0xf] %vm3590, %v3571
      %3606 = vst.msk [vmem:[#allocation3 + $0x3c] sm:$0xf] %vm3590, %v3573
      %v3607 = vld [vmem:[#allocation2] sm:$0xf]
      %v3608 = vld [vmem:[#allocation2 + $0x4] sm:$0xf]
      %v3609 = vld [vmem:[#allocation2 + $0x8] sm:$0xf]
      %v3610 = vld [vmem:[#allocation2 + $0xc] sm:$0xf]
      %v3611 = vld [vmem:[#allocation2 + $0x10] sm:$0xf]
      %v3612 = vld [vmem:[#allocation2 + $0x14] sm:$0xf]
      %v3613 = vld [vmem:[#allocation2 + $0x18] sm:$0xf]
      %v3614 = vld [vmem:[#allocation2 + $0x1c] sm:$0xf]
      %v3615 = vld [vmem:[#allocation2 + $0x20] sm:$0xf]
      %v3616 = vld [vmem:[#allocation2 + $0x24] sm:$0xf]
      %v3617 = vld [vmem:[#allocation2 + $0x28] sm:$0xf]
      %v3618 = vld [vmem:[#allocation2 + $0x2c] sm:$0xf]
      %v3619 = vld [vmem:[#allocation2 + $0x30] sm:$0xf]
      %v3620 = vld [vmem:[#allocation2 + $0x34] sm:$0xf]
      %v3621 = vld [vmem:[#allocation2 + $0x38] sm:$0xf]
      %v3622 = vld [vmem:[#allocation2 + $0x3c] sm:$0xf]
      %v3639 = vunpack.c.l.b16 %v3607
      %v3640 = vunpack.c.l.b16 %v3608
      %v3641 = vunpack.c.l.b16 %v3609
      %v3642 = vunpack.c.l.b16 %v3610
      %v3643 = vunpack.c.l.b16 %v3611
      %v3644 = vunpack.c.l.b16 %v3612
      %v3645 = vunpack.c.l.b16 %v3613
      %v3646 = vunpack.c.l.b16 %v3614
      %v3647 = vunpack.c.l.b16 %v3615
      %v3648 = vunpack.c.l.b16 %v3616
      %v3649 = vunpack.c.l.b16 %v3617
      %v3650 = vunpack.c.l.b16 %v3618
      %v3651 = vunpack.c.l.b16 %v3619
      %v3652 = vunpack.c.l.b16 %v3620
      %v3653 = vunpack.c.l.b16 %v3621
      %v3654 = vunpack.c.l.b16 %v3622
      %v3655 = vpack.c.b16 %v3640, %v3639
      %v3656 = vpack.c.b16 %v3642, %v3641
      %v3657 = vpack.c.b16 %v3644, %v3643
      %v3658 = vpack.c.b16 %v3646, %v3645
      %v3659 = vpack.c.b16 %v3648, %v3647
      %v3660 = vpack.c.b16 %v3650, %v3649
      %v3661 = vpack.c.b16 %v3652, %v3651
      %v3662 = vpack.c.b16 %v3654, %v3653
      %3663 = vrot.lane.b32.xlu0 %v3655, 108
      %v3664 = vpop.permute.xlu0 %3663
      %3665 = vrot.lane.b32.xlu0 %v3656, 108
      %v3666 = vpop.permute.xlu0 %3665
      %3667 = vrot.lane.b32.xlu0 %v3657, 108
      %v3668 = vpop.permute.xlu0 %3667
      %3669 = vrot.lane.b32.xlu0 %v3658, 108
      %v3670 = vpop.permute.xlu0 %3669
      %3671 = vrot.lane.b32.xlu0 %v3659, 108
      %v3672 = vpop.permute.xlu0 %3671
      %3673 = vrot.lane.b32.xlu0 %v3660, 108
      %v3674 = vpop.permute.xlu0 %3673
      %3675 = vrot.lane.b32.xlu0 %v3661, 108
      %v3676 = vpop.permute.xlu0 %3675
      %3677 = vrot.lane.b32.xlu0 %v3662, 108
      %v3678 = vpop.permute.xlu0 %3677
      %3679 = vrot.lane.b32.xlu0 %v3655, 76
      %v3680 = vpop.permute.xlu0 %3679
      %3681 = vrot.lane.b32.xlu0 %v3656, 76
      %v3682 = vpop.permute.xlu0 %3681
      %3683 = vrot.lane.b32.xlu0 %v3657, 76
      %v3684 = vpop.permute.xlu0 %3683
      %3685 = vrot.lane.b32.xlu0 %v3658, 76
      %v3686 = vpop.permute.xlu0 %3685
      %3687 = vrot.lane.b32.xlu0 %v3659, 76
      %v3688 = vpop.permute.xlu0 %3687
      %3689 = vrot.lane.b32.xlu0 %v3660, 76
      %v3690 = vpop.permute.xlu0 %3689
      %3691 = vrot.lane.b32.xlu0 %v3661, 76
      %v3692 = vpop.permute.xlu0 %3691
      %3693 = vrot.lane.b32.xlu0 %v3662, 76
      %v3694 = vpop.permute.xlu0 %3693
      %v3696 = vsel %vm549, %v3664, 0
      %v3699 = vsel %vm549, %v3666, 0
      %v3702 = vsel %vm549, %v3668, 0
      %v3705 = vsel %vm549, %v3670, 0
      %v3708 = vsel %vm549, %v3672, 0
      %v3711 = vsel %vm549, %v3674, 0
      %v3714 = vsel %vm549, %v3676, 0
      %v3717 = vsel %vm549, %v3678, 0
      %v3720 = vsel %vm549, %v3680, 0
      %v3723 = vsel %vm549, %v3682, 0
      %v3726 = vsel %vm549, %v3684, 0
      %v3729 = vsel %vm549, %v3686, 0
      %v3732 = vsel %vm549, %v3688, 0
      %v3735 = vsel %vm549, %v3690, 0
      %v3738 = vsel %vm549, %v3692, 0
      %v3741 = vsel %vm549, %v3694, 0
      %3743 = vmatprep.subr.bf16.mxu0 0
      %3744 = vmatpush1.bf16.xpose.msra.mxu0 %v3741
      %3745 = vmatprep.subr.bf16.mxu0 0
      %3746 = vmatpush1.bf16.xpose.msra.mxu0 %v3738
      %3747 = vmatprep.subr.bf16.mxu0 0
      %3748 = vmatpush1.bf16.xpose.msra.mxu0 %v3735
      %3749 = vmatprep.subr.bf16.mxu0 0
      %3750 = vmatpush1.bf16.xpose.msra.mxu0 %v3732
      %3751 = vmatprep.subr.bf16.mxu0 0
      %3752 = vmatpush1.bf16.xpose.msra.mxu0 %v3729
      %3753 = vmatprep.subr.bf16.mxu0 0
      %3754 = vmatpush1.bf16.xpose.msra.mxu0 %v3726
      %3755 = vmatprep.subr.bf16.mxu0 0
      %3756 = vmatpush1.bf16.xpose.msra.mxu0 %v3723
      %3757 = vmatprep.subr.bf16.mxu0 0
      %3758 = vmatpush1.bf16.xpose.msra.mxu0 %v3720
      %3759 = vmatprep.subr.bf16.mxu0 0
      %3760 = vmatpush2.bf16.xpose.msra.mxu0 0
      %3761 = vmatprep.subr.bf16.mxu0 0
      %3762 = vmatpush2.bf16.xpose.msra.mxu0 0
      %3763 = vmatprep.subr.bf16.mxu0 0
      %3764 = vmatpush2.bf16.xpose.msra.mxu0 0
      %3765 = vmatprep.subr.bf16.mxu0 0
      %3766 = vmatpush2.bf16.xpose.msra.mxu0 0
      %3767 = vmatprep.subr.bf16.mxu0 0
      %3768 = vmatpush2.bf16.xpose.msra.mxu0 0
      %3769 = vmatprep.subr.bf16.mxu0 0
      %3770 = vmatpush2.bf16.xpose.msra.mxu0 0
      %3771 = vmatprep.subr.bf16.mxu0 0
      %3772 = vmatpush2.bf16.xpose.msra.mxu0 0
      %3773 = vmatprep.subr.bf16.mxu0 0
      %3774 = vmatpush2.bf16.xpose.msra.mxu0 0
      %3775 = vmatprep.mubr.bf16.mxu0 0
      %3776 = vmatmul.mubr.bf16.gmra.mxu0 %v3696
      %v3777 = vpop.f32.mrf.mxu0
      %v3778 = vadd.f32 0.0, %v3777
      %v3779 = vpop.f32.mrf.mxu0
      %v3780 = vpop.f32.mrf.mxu0
      %v3781 = vadd.f32 0.0, %v3780
      %v3782 = vpop.f32.mrf.mxu0
      %3783 = vmatprep.mubr.bf16.mxu0 0
      %3784 = vmatmul.mubr.bf16.gmra.mxu0 %v3699
      %v3785 = vpop.f32.mrf.mxu0
      %v3786 = vadd.f32 0.0, %v3785
      %v3787 = vpop.f32.mrf.mxu0
      %v3788 = vpop.f32.mrf.mxu0
      %v3789 = vadd.f32 0.0, %v3788
      %v3790 = vpop.f32.mrf.mxu0
      %3791 = vmatprep.mubr.bf16.mxu0 0
      %3792 = vmatmul.mubr.bf16.gmra.mxu0 %v3702
      %v3793 = vpop.f32.mrf.mxu0
      %v3794 = vadd.f32 0.0, %v3793
      %v3795 = vpop.f32.mrf.mxu0
      %v3796 = vpop.f32.mrf.mxu0
      %v3797 = vadd.f32 0.0, %v3796
      %v3798 = vpop.f32.mrf.mxu0
      %3799 = vmatprep.mubr.bf16.mxu0 0
      %3800 = vmatmul.mubr.bf16.gmra.mxu0 %v3705
      %v3801 = vpop.f32.mrf.mxu0
      %v3802 = vadd.f32 0.0, %v3801
      %v3803 = vpop.f32.mrf.mxu0
      %v3804 = vpop.f32.mrf.mxu0
      %v3805 = vadd.f32 0.0, %v3804
      %v3806 = vpop.f32.mrf.mxu0
      %3807 = vmatprep.mubr.bf16.mxu0 0
      %3808 = vmatmul.mubr.bf16.gmra.mxu0 %v3708
      %v3809 = vpop.f32.mrf.mxu0
      %v3810 = vadd.f32 0.0, %v3809
      %v3811 = vpop.f32.mrf.mxu0
      %v3812 = vpop.f32.mrf.mxu0
      %v3813 = vadd.f32 0.0, %v3812
      %v3814 = vpop.f32.mrf.mxu0
      %3815 = vmatprep.mubr.bf16.mxu0 0
      %3816 = vmatmul.mubr.bf16.gmra.mxu0 %v3711
      %v3817 = vpop.f32.mrf.mxu0
      %v3818 = vadd.f32 0.0, %v3817
      %v3819 = vpop.f32.mrf.mxu0
      %v3820 = vpop.f32.mrf.mxu0
      %v3821 = vadd.f32 0.0, %v3820
      %v3822 = vpop.f32.mrf.mxu0
      %3823 = vmatprep.mubr.bf16.mxu0 0
      %3824 = vmatmul.mubr.bf16.gmra.mxu0 %v3714
      %v3825 = vpop.f32.mrf.mxu0
      %v3826 = vadd.f32 0.0, %v3825
      %v3827 = vpop.f32.mrf.mxu0
      %v3828 = vpop.f32.mrf.mxu0
      %v3829 = vadd.f32 0.0, %v3828
      %v3830 = vpop.f32.mrf.mxu0
      %3831 = vmatprep.mubr.bf16.mxu0 0
      %3832 = vmatmul.mubr.bf16.gmra.mxu0 %v3717
      %v3833 = vpop.f32.mrf.mxu0
      %v3834 = vadd.f32 0.0, %v3833
      %v3835 = vpop.f32.mrf.mxu0
      %v3836 = vpop.f32.mrf.mxu0
      %v3837 = vadd.f32 0.0, %v3836
      %v3838 = vpop.f32.mrf.mxu0
      %3839 = vdwg.mxu0
      %v3840 = vsel %vm696, %v3778, -1e+30
      %v3841 = vsel %vm696, %v3781, -1e+30
      %v3842 = vsel %vm696, %v3786, -1e+30
      %v3843 = vsel %vm696, %v3789, -1e+30
      %v3844 = vsel %vm696, %v3794, -1e+30
      %v3845 = vsel %vm696, %v3797, -1e+30
      %v3846 = vsel %vm696, %v3802, -1e+30
      %v3847 = vsel %vm696, %v3805, -1e+30
      %v3848 = vsel %vm696, %v3810, -1e+30
      %v3849 = vsel %vm696, %v3813, -1e+30
      %v3850 = vsel %vm696, %v3818, -1e+30
      %v3851 = vsel %vm696, %v3821, -1e+30
      %v3852 = vsel %vm696, %v3826, -1e+30
      %v3853 = vsel %vm696, %v3829, -1e+30
      %v3854 = vsel %vm696, %v3834, -1e+30
      %v3855 = vsel %vm696, %v3837, -1e+30
      %3856 = vmax.xlane.f32.xlu0 %v3840
      %v3857 = vpop.xlane.xlu0 %3856
      %3858 = vmax.xlane.f32.xlu0 %v3841
      %v3859 = vpop.xlane.xlu0 %3858
      %3860 = vmax.xlane.f32.xlu0 %v3842
      %v3861 = vpop.xlane.xlu0 %3860
      %3862 = vmax.xlane.f32.xlu0 %v3843
      %v3863 = vpop.xlane.xlu0 %3862
      %3864 = vmax.xlane.f32.xlu0 %v3844
      %v3865 = vpop.xlane.xlu0 %3864
      %3866 = vmax.xlane.f32.xlu0 %v3845
      %v3867 = vpop.xlane.xlu0 %3866
      %3868 = vmax.xlane.f32.xlu0 %v3846
      %v3869 = vpop.xlane.xlu0 %3868
      %3870 = vmax.xlane.f32.xlu0 %v3847
      %v3871 = vpop.xlane.xlu0 %3870
      %3872 = vmax.xlane.f32.xlu0 %v3848
      %v3873 = vpop.xlane.xlu0 %3872
      %3874 = vmax.xlane.f32.xlu0 %v3849
      %v3875 = vpop.xlane.xlu0 %3874
      %3876 = vmax.xlane.f32.xlu0 %v3850
      %v3877 = vpop.xlane.xlu0 %3876
      %3878 = vmax.xlane.f32.xlu0 %v3851
      %v3879 = vpop.xlane.xlu0 %3878
      %3880 = vmax.xlane.f32.xlu0 %v3852
      %v3881 = vpop.xlane.xlu0 %3880
      %3882 = vmax.xlane.f32.xlu0 %v3853
      %v3883 = vpop.xlane.xlu0 %3882
      %3884 = vmax.xlane.f32.xlu0 %v3854
      %v3885 = vpop.xlane.xlu0 %3884
      %3886 = vmax.xlane.f32.xlu0 %v3855
      %v3887 = vpop.xlane.xlu0 %3886
      %v3888 = vsub.f32 %v3840, %v3857
      %v3889 = vsub.f32 %v3841, %v3859
      %v3890 = vsub.f32 %v3842, %v3861
      %v3891 = vsub.f32 %v3843, %v3863
      %v3892 = vsub.f32 %v3844, %v3865
      %v3893 = vsub.f32 %v3845, %v3867
      %v3894 = vsub.f32 %v3846, %v3869
      %v3895 = vsub.f32 %v3847, %v3871
      %v3896 = vsub.f32 %v3848, %v3873
      %v3897 = vsub.f32 %v3849, %v3875
      %v3898 = vsub.f32 %v3850, %v3877
      %v3899 = vsub.f32 %v3851, %v3879
      %v3900 = vsub.f32 %v3852, %v3881
      %v3901 = vsub.f32 %v3853, %v3883
      %v3902 = vsub.f32 %v3854, %v3885
      %v3903 = vsub.f32 %v3855, %v3887
      %v3904 = vmul.f32 %v3888, 1.442695
      %v3905 = vpow.pop %v3904
      %v3906 = vmul.f32 %v3889, 1.442695
      %v3907 = vpow.pop %v3906
      %v3908 = vmul.f32 %v3890, 1.442695
      %v3909 = vpow.pop %v3908
      %v3910 = vmul.f32 %v3891, 1.442695
      %v3911 = vpow.pop %v3910
      %v3912 = vmul.f32 %v3892, 1.442695
      %v3913 = vpow.pop %v3912
      %v3914 = vmul.f32 %v3893, 1.442695
      %v3915 = vpow.pop %v3914
      %v3916 = vmul.f32 %v3894, 1.442695
      %v3917 = vpow.pop %v3916
      %v3918 = vmul.f32 %v3895, 1.442695
      %v3919 = vpow.pop %v3918
      %v3920 = vmul.f32 %v3896, 1.442695
      %v3921 = vpow.pop %v3920
      %v3922 = vmul.f32 %v3897, 1.442695
      %v3923 = vpow.pop %v3922
      %v3924 = vmul.f32 %v3898, 1.442695
      %v3925 = vpow.pop %v3924
      %v3926 = vmul.f32 %v3899, 1.442695
      %v3927 = vpow.pop %v3926
      %v3928 = vmul.f32 %v3900, 1.442695
      %v3929 = vpow.pop %v3928
      %v3930 = vmul.f32 %v3901, 1.442695
      %v3931 = vpow.pop %v3930
      %v3932 = vmul.f32 %v3902, 1.442695
      %v3933 = vpow.pop %v3932
      %v3934 = vmul.f32 %v3903, 1.442695
      %v3935 = vpow.pop %v3934
      %3936 = vadd.xlane.f32.xlu0 %v3905
      %v3937 = vpop.xlane.xlu0 %3936
      %3938 = vadd.xlane.f32.xlu0 %v3907
      %v3939 = vpop.xlane.xlu0 %3938
      %3940 = vadd.xlane.f32.xlu0 %v3909
      %v3941 = vpop.xlane.xlu0 %3940
      %3942 = vadd.xlane.f32.xlu0 %v3911
      %v3943 = vpop.xlane.xlu0 %3942
      %3944 = vadd.xlane.f32.xlu0 %v3913
      %v3945 = vpop.xlane.xlu0 %3944
      %3946 = vadd.xlane.f32.xlu0 %v3915
      %v3947 = vpop.xlane.xlu0 %3946
      %3948 = vadd.xlane.f32.xlu0 %v3917
      %v3949 = vpop.xlane.xlu0 %3948
      %3950 = vadd.xlane.f32.xlu0 %v3919
      %v3951 = vpop.xlane.xlu0 %3950
      %3952 = vadd.xlane.f32.xlu0 %v3921
      %v3953 = vpop.xlane.xlu0 %3952
      %3954 = vadd.xlane.f32.xlu0 %v3923
      %v3955 = vpop.xlane.xlu0 %3954
      %3956 = vadd.xlane.f32.xlu0 %v3925
      %v3957 = vpop.xlane.xlu0 %3956
      %3958 = vadd.xlane.f32.xlu0 %v3927
      %v3959 = vpop.xlane.xlu0 %3958
      %3960 = vadd.xlane.f32.xlu0 %v3929
      %v3961 = vpop.xlane.xlu0 %3960
      %3962 = vadd.xlane.f32.xlu0 %v3931
      %v3963 = vpop.xlane.xlu0 %3962
      %3964 = vadd.xlane.f32.xlu0 %v3933
      %v3965 = vpop.xlane.xlu0 %3964
      %3966 = vadd.xlane.f32.xlu0 %v3935
      %v3967 = vpop.xlane.xlu0 %3966
      %v3968 = vrcp.pop %v3937
      %v3969 = vrcp.pop %v3939
      %v3970 = vrcp.pop %v3941
      %v3971 = vrcp.pop %v3943
      %v3972 = vrcp.pop %v3945
      %v3973 = vrcp.pop %v3947
      %v3974 = vrcp.pop %v3949
      %v3975 = vrcp.pop %v3951
      %v3976 = vrcp.pop %v3953
      %v3977 = vrcp.pop %v3955
      %v3978 = vrcp.pop %v3957
      %v3979 = vrcp.pop %v3959
      %v3980 = vrcp.pop %v3961
      %v3981 = vrcp.pop %v3963
      %v3982 = vrcp.pop %v3965
      %v3983 = vrcp.pop %v3967
      %v3984 = vpack.c.bf16 %v3907, %v3905
      %v3985 = vpack.c.bf16 %v3911, %v3909
      %v3986 = vpack.c.bf16 %v3915, %v3913
      %v3987 = vpack.c.bf16 %v3919, %v3917
      %v3988 = vpack.c.bf16 %v3923, %v3921
      %v3989 = vpack.c.bf16 %v3927, %v3925
      %v3990 = vpack.c.bf16 %v3931, %v3929
      %v3991 = vpack.c.bf16 %v3935, %v3933
      %3992 = vrot.lane.b32.xlu0 %v3655, 44
      %v3993 = vpop.permute.xlu0 %3992
      %3994 = vrot.lane.b32.xlu0 %v3656, 44
      %v3995 = vpop.permute.xlu0 %3994
      %3996 = vrot.lane.b32.xlu0 %v3657, 44
      %v3997 = vpop.permute.xlu0 %3996
      %3998 = vrot.lane.b32.xlu0 %v3658, 44
      %v3999 = vpop.permute.xlu0 %3998
      %4000 = vrot.lane.b32.xlu0 %v3659, 44
      %v4001 = vpop.permute.xlu0 %4000
      %4002 = vrot.lane.b32.xlu0 %v3660, 44
      %v4003 = vpop.permute.xlu0 %4002
      %4004 = vrot.lane.b32.xlu0 %v3661, 44
      %v4005 = vpop.permute.xlu0 %4004
      %4006 = vrot.lane.b32.xlu0 %v3662, 44
      %v4007 = vpop.permute.xlu0 %4006
      %4016 = vmatprep.subr.bf16.mxu0 0
      %4017 = vmatpush1.bf16.msra.mxu0 %v4007
      %4018 = vmatprep.subr.bf16.mxu0 0
      %4019 = vmatpush1.bf16.msra.mxu0 %v4005
      %4020 = vmatprep.subr.bf16.mxu0 0
      %4021 = vmatpush1.bf16.msra.mxu0 %v4003
      %4022 = vmatprep.subr.bf16.mxu0 0
      %4023 = vmatpush1.bf16.msra.mxu0 %v4001
      %4024 = vmatprep.subr.bf16.mxu0 0
      %4025 = vmatpush1.bf16.msra.mxu0 %v3999
      %4026 = vmatprep.subr.bf16.mxu0 0
      %4027 = vmatpush1.bf16.msra.mxu0 %v3997
      %4028 = vmatprep.subr.bf16.mxu0 0
      %4029 = vmatpush1.bf16.msra.mxu0 %v3995
      %4030 = vmatprep.subr.bf16.mxu0 0
      %4031 = vmatpush1.bf16.msra.mxu0 %v3993
      %4032 = vmatprep.subr.bf16.mxu0 0
      %4033 = vmatpush2.bf16.msra.mxu0 0
      %4034 = vmatprep.subr.bf16.mxu0 0
      %4035 = vmatpush2.bf16.msra.mxu0 0
      %4036 = vmatprep.subr.bf16.mxu0 0
      %4037 = vmatpush2.bf16.msra.mxu0 0
      %4038 = vmatprep.subr.bf16.mxu0 0
      %4039 = vmatpush2.bf16.msra.mxu0 0
      %4040 = vmatprep.subr.bf16.mxu0 0
      %4041 = vmatpush2.bf16.msra.mxu0 0
      %4042 = vmatprep.subr.bf16.mxu0 0
      %4043 = vmatpush2.bf16.msra.mxu0 0
      %4044 = vmatprep.subr.bf16.mxu0 0
      %4045 = vmatpush2.bf16.msra.mxu0 0
      %4046 = vmatprep.subr.bf16.mxu0 0
      %4047 = vmatpush2.bf16.msra.mxu0 0
      %4048 = vmatprep.mubr.bf16.mxu0 0
      %4049 = vmatmul.mubr.bf16.gmra.mxu0 %v3984
      %v4050 = vpop.f32.mrf.mxu0
      %v4051 = vadd.f32 0.0, %v4050
      %v4052 = vpop.f32.mrf.mxu0
      %v4053 = vpop.f32.mrf.mxu0
      %v4054 = vadd.f32 0.0, %v4053
      %v4055 = vpop.f32.mrf.mxu0
      %4056 = vmatprep.mubr.bf16.mxu0 0
      %4057 = vmatmul.mubr.bf16.gmra.mxu0 %v3985
      %v4058 = vpop.f32.mrf.mxu0
      %v4059 = vadd.f32 0.0, %v4058
      %v4060 = vpop.f32.mrf.mxu0
      %v4061 = vpop.f32.mrf.mxu0
      %v4062 = vadd.f32 0.0, %v4061
      %v4063 = vpop.f32.mrf.mxu0
      %4064 = vmatprep.mubr.bf16.mxu0 0
      %4065 = vmatmul.mubr.bf16.gmra.mxu0 %v3986
      %v4066 = vpop.f32.mrf.mxu0
      %v4067 = vadd.f32 0.0, %v4066
      %v4068 = vpop.f32.mrf.mxu0
      %v4069 = vpop.f32.mrf.mxu0
      %v4070 = vadd.f32 0.0, %v4069
      %v4071 = vpop.f32.mrf.mxu0
      %4072 = vmatprep.mubr.bf16.mxu0 0
      %4073 = vmatmul.mubr.bf16.gmra.mxu0 %v3987
      %v4074 = vpop.f32.mrf.mxu0
      %v4075 = vadd.f32 0.0, %v4074
      %v4076 = vpop.f32.mrf.mxu0
      %v4077 = vpop.f32.mrf.mxu0
      %v4078 = vadd.f32 0.0, %v4077
      %v4079 = vpop.f32.mrf.mxu0
      %4080 = vmatprep.mubr.bf16.mxu0 0
      %4081 = vmatmul.mubr.bf16.gmra.mxu0 %v3988
      %v4082 = vpop.f32.mrf.mxu0
      %v4083 = vadd.f32 0.0, %v4082
      %v4084 = vpop.f32.mrf.mxu0
      %v4085 = vpop.f32.mrf.mxu0
      %v4086 = vadd.f32 0.0, %v4085
      %v4087 = vpop.f32.mrf.mxu0
      %4088 = vmatprep.mubr.bf16.mxu0 0
      %4089 = vmatmul.mubr.bf16.gmra.mxu0 %v3989
      %v4090 = vpop.f32.mrf.mxu0
      %v4091 = vadd.f32 0.0, %v4090
      %v4092 = vpop.f32.mrf.mxu0
      %v4093 = vpop.f32.mrf.mxu0
      %v4094 = vadd.f32 0.0, %v4093
      %v4095 = vpop.f32.mrf.mxu0
      %4096 = vmatprep.mubr.bf16.mxu0 0
      %4097 = vmatmul.mubr.bf16.gmra.mxu0 %v3990
      %v4098 = vpop.f32.mrf.mxu0
      %v4099 = vadd.f32 0.0, %v4098
      %v4100 = vpop.f32.mrf.mxu0
      %v4101 = vpop.f32.mrf.mxu0
      %v4102 = vadd.f32 0.0, %v4101
      %v4103 = vpop.f32.mrf.mxu0
      %4104 = vmatprep.mubr.bf16.mxu0 0
      %4105 = vmatmul.mubr.bf16.gmra.mxu0 %v3991
      %v4106 = vpop.f32.mrf.mxu0
      %v4107 = vadd.f32 0.0, %v4106
      %v4108 = vpop.f32.mrf.mxu0
      %v4109 = vpop.f32.mrf.mxu0
      %v4110 = vadd.f32 0.0, %v4109
      %v4111 = vpop.f32.mrf.mxu0
      %4112 = vdwg.mxu0
      %v4113 = vmul.f32 %v4051, %v3968
      %v4114 = vmul.f32 %v4054, %v3969
      %v4115 = vmul.f32 %v4059, %v3970
      %v4116 = vmul.f32 %v4062, %v3971
      %v4117 = vmul.f32 %v4067, %v3972
      %v4118 = vmul.f32 %v4070, %v3973
      %v4119 = vmul.f32 %v4075, %v3974
      %v4120 = vmul.f32 %v4078, %v3975
      %v4121 = vmul.f32 %v4083, %v3976
      %v4122 = vmul.f32 %v4086, %v3977
      %v4123 = vmul.f32 %v4091, %v3978
      %v4124 = vmul.f32 %v4094, %v3979
      %v4125 = vmul.f32 %v4099, %v3980
      %v4126 = vmul.f32 %v4102, %v3981
      %v4127 = vmul.f32 %v4107, %v3982
      %v4128 = vmul.f32 %v4110, %v3983
      %v4129 = vpack.c.bf16 %v4114, %v4113
      %v4130 = vpack.c.bf16 %v4116, %v4115
      %v4131 = vpack.c.bf16 %v4118, %v4117
      %v4132 = vpack.c.bf16 %v4120, %v4119
      %v4133 = vpack.c.bf16 %v4122, %v4121
      %v4134 = vpack.c.bf16 %v4124, %v4123
      %v4135 = vpack.c.bf16 %v4126, %v4125
      %v4136 = vpack.c.bf16 %v4128, %v4127
      %v4145 = vunpack.c.l.b16 %v4129
      %v4146 = vunpack.c.h.b16 %v4129
      %v4147 = vunpack.c.l.b16 %v4130
      %v4148 = vunpack.c.h.b16 %v4130
      %v4149 = vunpack.c.l.b16 %v4131
      %v4150 = vunpack.c.h.b16 %v4131
      %v4151 = vunpack.c.l.b16 %v4132
      %v4152 = vunpack.c.h.b16 %v4132
      %v4153 = vunpack.c.l.b16 %v4133
      %v4154 = vunpack.c.h.b16 %v4133
      %v4155 = vunpack.c.l.b16 %v4134
      %v4156 = vunpack.c.h.b16 %v4134
      %v4157 = vunpack.c.l.b16 %v4135
      %v4158 = vunpack.c.h.b16 %v4135
      %v4159 = vunpack.c.l.b16 %v4136
      %v4160 = vunpack.c.h.b16 %v4136
      %v4161 = vpack.c.b16 %v4145, %v4145
      %v4162 = vpack.c.b16 %v4146, %v4146
      %v4163 = vpack.c.b16 %v4147, %v4147
      %v4164 = vpack.c.b16 %v4148, %v4148
      %v4165 = vpack.c.b16 %v4149, %v4149
      %v4166 = vpack.c.b16 %v4150, %v4150
      %v4167 = vpack.c.b16 %v4151, %v4151
      %v4168 = vpack.c.b16 %v4152, %v4152
      %v4169 = vpack.c.b16 %v4153, %v4153
      %v4170 = vpack.c.b16 %v4154, %v4154
      %v4171 = vpack.c.b16 %v4155, %v4155
      %v4172 = vpack.c.b16 %v4156, %v4156
      %v4173 = vpack.c.b16 %v4157, %v4157
      %v4174 = vpack.c.b16 %v4158, %v4158
      %v4175 = vpack.c.b16 %v4159, %v4159
      %v4176 = vpack.c.b16 %v4160, %v4160
      %4177 = vrot.lane.b32.xlu0 %v4161, 20
      %v4178 = vpop.permute.xlu0 %4177
      %4179 = vrot.lane.b32.xlu0 %v4162, 20
      %v4180 = vpop.permute.xlu0 %4179
      %4181 = vrot.lane.b32.xlu0 %v4163, 20
      %v4182 = vpop.permute.xlu0 %4181
      %4183 = vrot.lane.b32.xlu0 %v4164, 20
      %v4184 = vpop.permute.xlu0 %4183
      %4185 = vrot.lane.b32.xlu0 %v4165, 20
      %v4186 = vpop.permute.xlu0 %4185
      %4187 = vrot.lane.b32.xlu0 %v4166, 20
      %v4188 = vpop.permute.xlu0 %4187
      %4189 = vrot.lane.b32.xlu0 %v4167, 20
      %v4190 = vpop.permute.xlu0 %4189
      %4191 = vrot.lane.b32.xlu0 %v4168, 20
      %v4192 = vpop.permute.xlu0 %4191
      %4193 = vrot.lane.b32.xlu0 %v4169, 20
      %v4194 = vpop.permute.xlu0 %4193
      %4195 = vrot.lane.b32.xlu0 %v4170, 20
      %v4196 = vpop.permute.xlu0 %4195
      %4197 = vrot.lane.b32.xlu0 %v4171, 20
      %v4198 = vpop.permute.xlu0 %4197
      %4199 = vrot.lane.b32.xlu0 %v4172, 20
      %v4200 = vpop.permute.xlu0 %4199
      %4201 = vrot.lane.b32.xlu0 %v4173, 20
      %v4202 = vpop.permute.xlu0 %4201
      %4203 = vrot.lane.b32.xlu0 %v4174, 20
      %v4204 = vpop.permute.xlu0 %4203
      %4205 = vrot.lane.b32.xlu0 %v4175, 20
      %v4206 = vpop.permute.xlu0 %4205
      %4207 = vrot.lane.b32.xlu0 %v4176, 20
      %v4208 = vpop.permute.xlu0 %4207
      %vm4225 = vcmask 191648
      %4226 = vst.msk [vmem:[#allocation3] sm:$0xf] %vm4225, %v4178
      %4227 = vst.msk [vmem:[#allocation3 + $0x4] sm:$0xf] %vm4225, %v4180
      %4228 = vst.msk [vmem:[#allocation3 + $0x8] sm:$0xf] %vm4225, %v4182
      %4229 = vst.msk [vmem:[#allocation3 + $0xc] sm:$0xf] %vm4225, %v4184
      %4230 = vst.msk [vmem:[#allocation3 + $0x10] sm:$0xf] %vm4225, %v4186
      %4231 = vst.msk [vmem:[#allocation3 + $0x14] sm:$0xf] %vm4225, %v4188
      %4232 = vst.msk [vmem:[#allocation3 + $0x18] sm:$0xf] %vm4225, %v4190
      %4233 = vst.msk [vmem:[#allocation3 + $0x1c] sm:$0xf] %vm4225, %v4192
      %4234 = vst.msk [vmem:[#allocation3 + $0x20] sm:$0xf] %vm4225, %v4194
      %4235 = vst.msk [vmem:[#allocation3 + $0x24] sm:$0xf] %vm4225, %v4196
      %4236 = vst.msk [vmem:[#allocation3 + $0x28] sm:$0xf] %vm4225, %v4198
      %4237 = vst.msk [vmem:[#allocation3 + $0x2c] sm:$0xf] %vm4225, %v4200
      %4238 = vst.msk [vmem:[#allocation3 + $0x30] sm:$0xf] %vm4225, %v4202
      %4239 = vst.msk [vmem:[#allocation3 + $0x34] sm:$0xf] %vm4225, %v4204
      %4240 = vst.msk [vmem:[#allocation3 + $0x38] sm:$0xf] %vm4225, %v4206
      %4241 = vst.msk [vmem:[#allocation3 + $0x3c] sm:$0xf] %vm4225, %v4208
      %v4242 = vld [vmem:[#allocation2] sm:$0xf]
      %v4243 = vld [vmem:[#allocation2 + $0x4] sm:$0xf]
      %v4244 = vld [vmem:[#allocation2 + $0x8] sm:$0xf]
      %v4245 = vld [vmem:[#allocation2 + $0xc] sm:$0xf]
      %v4246 = vld [vmem:[#allocation2 + $0x10] sm:$0xf]
      %v4247 = vld [vmem:[#allocation2 + $0x14] sm:$0xf]
      %v4248 = vld [vmem:[#allocation2 + $0x18] sm:$0xf]
      %v4249 = vld [vmem:[#allocation2 + $0x1c] sm:$0xf]
      %v4250 = vld [vmem:[#allocation2 + $0x20] sm:$0xf]
      %v4251 = vld [vmem:[#allocation2 + $0x24] sm:$0xf]
      %v4252 = vld [vmem:[#allocation2 + $0x28] sm:$0xf]
      %v4253 = vld [vmem:[#allocation2 + $0x2c] sm:$0xf]
      %v4254 = vld [vmem:[#allocation2 + $0x30] sm:$0xf]
      %v4255 = vld [vmem:[#allocation2 + $0x34] sm:$0xf]
      %v4256 = vld [vmem:[#allocation2 + $0x38] sm:$0xf]
      %v4257 = vld [vmem:[#allocation2 + $0x3c] sm:$0xf]
      %v4274 = vunpack.c.l.b16 %v4242
      %v4275 = vunpack.c.l.b16 %v4243
      %v4276 = vunpack.c.l.b16 %v4244
      %v4277 = vunpack.c.l.b16 %v4245
      %v4278 = vunpack.c.l.b16 %v4246
      %v4279 = vunpack.c.l.b16 %v4247
      %v4280 = vunpack.c.l.b16 %v4248
      %v4281 = vunpack.c.l.b16 %v4249
      %v4282 = vunpack.c.l.b16 %v4250
      %v4283 = vunpack.c.l.b16 %v4251
      %v4284 = vunpack.c.l.b16 %v4252
      %v4285 = vunpack.c.l.b16 %v4253
      %v4286 = vunpack.c.l.b16 %v4254
      %v4287 = vunpack.c.l.b16 %v4255
      %v4288 = vunpack.c.l.b16 %v4256
      %v4289 = vunpack.c.l.b16 %v4257
      %v4290 = vpack.c.b16 %v4275, %v4274
      %v4291 = vpack.c.b16 %v4277, %v4276
      %v4292 = vpack.c.b16 %v4279, %v4278
      %v4293 = vpack.c.b16 %v4281, %v4280
      %v4294 = vpack.c.b16 %v4283, %v4282
      %v4295 = vpack.c.b16 %v4285, %v4284
      %v4296 = vpack.c.b16 %v4287, %v4286
      %v4297 = vpack.c.b16 %v4289, %v4288
      %4298 = vrot.lane.b32.xlu0 %v4290, 104
      %v4299 = vpop.permute.xlu0 %4298
      %4300 = vrot.lane.b32.xlu0 %v4291, 104
      %v4301 = vpop.permute.xlu0 %4300
      %4302 = vrot.lane.b32.xlu0 %v4292, 104
      %v4303 = vpop.permute.xlu0 %4302
      %4304 = vrot.lane.b32.xlu0 %v4293, 104
      %v4305 = vpop.permute.xlu0 %4304
      %4306 = vrot.lane.b32.xlu0 %v4294, 104
      %v4307 = vpop.permute.xlu0 %4306
      %4308 = vrot.lane.b32.xlu0 %v4295, 104
      %v4309 = vpop.permute.xlu0 %4308
      %4310 = vrot.lane.b32.xlu0 %v4296, 104
      %v4311 = vpop.permute.xlu0 %4310
      %4312 = vrot.lane.b32.xlu0 %v4297, 104
      %v4313 = vpop.permute.xlu0 %4312
      %4314 = vrot.lane.b32.xlu0 %v4290, 72
      %v4315 = vpop.permute.xlu0 %4314
      %4316 = vrot.lane.b32.xlu0 %v4291, 72
      %v4317 = vpop.permute.xlu0 %4316
      %4318 = vrot.lane.b32.xlu0 %v4292, 72
      %v4319 = vpop.permute.xlu0 %4318
      %4320 = vrot.lane.b32.xlu0 %v4293, 72
      %v4321 = vpop.permute.xlu0 %4320
      %4322 = vrot.lane.b32.xlu0 %v4294, 72
      %v4323 = vpop.permute.xlu0 %4322
      %4324 = vrot.lane.b32.xlu0 %v4295, 72
      %v4325 = vpop.permute.xlu0 %4324
      %4326 = vrot.lane.b32.xlu0 %v4296, 72
      %v4327 = vpop.permute.xlu0 %4326
      %4328 = vrot.lane.b32.xlu0 %v4297, 72
      %v4329 = vpop.permute.xlu0 %4328
      %v4331 = vsel %vm549, %v4299, 0
      %v4334 = vsel %vm549, %v4301, 0
      %v4337 = vsel %vm549, %v4303, 0
      %v4340 = vsel %vm549, %v4305, 0
      %v4343 = vsel %vm549, %v4307, 0
      %v4346 = vsel %vm549, %v4309, 0
      %v4349 = vsel %vm549, %v4311, 0
      %v4352 = vsel %vm549, %v4313, 0
      %v4355 = vsel %vm549, %v4315, 0
      %v4358 = vsel %vm549, %v4317, 0
      %v4361 = vsel %vm549, %v4319, 0
      %v4364 = vsel %vm549, %v4321, 0
      %v4367 = vsel %vm549, %v4323, 0
      %v4370 = vsel %vm549, %v4325, 0
      %v4373 = vsel %vm549, %v4327, 0
      %v4376 = vsel %vm549, %v4329, 0
      %4378 = vmatprep.subr.bf16.mxu0 0
      %4379 = vmatpush1.bf16.xpose.msra.mxu0 %v4376
      %4380 = vmatprep.subr.bf16.mxu0 0
      %4381 = vmatpush1.bf16.xpose.msra.mxu0 %v4373
      %4382 = vmatprep.subr.bf16.mxu0 0
      %4383 = vmatpush1.bf16.xpose.msra.mxu0 %v4370
      %4384 = vmatprep.subr.bf16.mxu0 0
      %4385 = vmatpush1.bf16.xpose.msra.mxu0 %v4367
      %4386 = vmatprep.subr.bf16.mxu0 0
      %4387 = vmatpush1.bf16.xpose.msra.mxu0 %v4364
      %4388 = vmatprep.subr.bf16.mxu0 0
      %4389 = vmatpush1.bf16.xpose.msra.mxu0 %v4361
      %4390 = vmatprep.subr.bf16.mxu0 0
      %4391 = vmatpush1.bf16.xpose.msra.mxu0 %v4358
      %4392 = vmatprep.subr.bf16.mxu0 0
      %4393 = vmatpush1.bf16.xpose.msra.mxu0 %v4355
      %4394 = vmatprep.subr.bf16.mxu0 0
      %4395 = vmatpush2.bf16.xpose.msra.mxu0 0
      %4396 = vmatprep.subr.bf16.mxu0 0
      %4397 = vmatpush2.bf16.xpose.msra.mxu0 0
      %4398 = vmatprep.subr.bf16.mxu0 0
      %4399 = vmatpush2.bf16.xpose.msra.mxu0 0
      %4400 = vmatprep.subr.bf16.mxu0 0
      %4401 = vmatpush2.bf16.xpose.msra.mxu0 0
      %4402 = vmatprep.subr.bf16.mxu0 0
      %4403 = vmatpush2.bf16.xpose.msra.mxu0 0
      %4404 = vmatprep.subr.bf16.mxu0 0
      %4405 = vmatpush2.bf16.xpose.msra.mxu0 0
      %4406 = vmatprep.subr.bf16.mxu0 0
      %4407 = vmatpush2.bf16.xpose.msra.mxu0 0
      %4408 = vmatprep.subr.bf16.mxu0 0
      %4409 = vmatpush2.bf16.xpose.msra.mxu0 0
      %4410 = vmatprep.mubr.bf16.mxu0 0
      %4411 = vmatmul.mubr.bf16.gmra.mxu0 %v4331
      %v4412 = vpop.f32.mrf.mxu0
      %v4413 = vadd.f32 0.0, %v4412
      %v4414 = vpop.f32.mrf.mxu0
      %v4415 = vpop.f32.mrf.mxu0
      %v4416 = vadd.f32 0.0, %v4415
      %v4417 = vpop.f32.mrf.mxu0
      %4418 = vmatprep.mubr.bf16.mxu0 0
      %4419 = vmatmul.mubr.bf16.gmra.mxu0 %v4334
      %v4420 = vpop.f32.mrf.mxu0
      %v4421 = vadd.f32 0.0, %v4420
      %v4422 = vpop.f32.mrf.mxu0
      %v4423 = vpop.f32.mrf.mxu0
      %v4424 = vadd.f32 0.0, %v4423
      %v4425 = vpop.f32.mrf.mxu0
      %4426 = vmatprep.mubr.bf16.mxu0 0
      %4427 = vmatmul.mubr.bf16.gmra.mxu0 %v4337
      %v4428 = vpop.f32.mrf.mxu0
      %v4429 = vadd.f32 0.0, %v4428
      %v4430 = vpop.f32.mrf.mxu0
      %v4431 = vpop.f32.mrf.mxu0
      %v4432 = vadd.f32 0.0, %v4431
      %v4433 = vpop.f32.mrf.mxu0
      %4434 = vmatprep.mubr.bf16.mxu0 0
      %4435 = vmatmul.mubr.bf16.gmra.mxu0 %v4340
      %v4436 = vpop.f32.mrf.mxu0
      %v4437 = vadd.f32 0.0, %v4436
      %v4438 = vpop.f32.mrf.mxu0
      %v4439 = vpop.f32.mrf.mxu0
      %v4440 = vadd.f32 0.0, %v4439
      %v4441 = vpop.f32.mrf.mxu0
      %4442 = vmatprep.mubr.bf16.mxu0 0
      %4443 = vmatmul.mubr.bf16.gmra.mxu0 %v4343
      %v4444 = vpop.f32.mrf.mxu0
      %v4445 = vadd.f32 0.0, %v4444
      %v4446 = vpop.f32.mrf.mxu0
      %v4447 = vpop.f32.mrf.mxu0
      %v4448 = vadd.f32 0.0, %v4447
      %v4449 = vpop.f32.mrf.mxu0
      %4450 = vmatprep.mubr.bf16.mxu0 0
      %4451 = vmatmul.mubr.bf16.gmra.mxu0 %v4346
      %v4452 = vpop.f32.mrf.mxu0
      %v4453 = vadd.f32 0.0, %v4452
      %v4454 = vpop.f32.mrf.mxu0
      %v4455 = vpop.f32.mrf.mxu0
      %v4456 = vadd.f32 0.0, %v4455
      %v4457 = vpop.f32.mrf.mxu0
      %4458 = vmatprep.mubr.bf16.mxu0 0
      %4459 = vmatmul.mubr.bf16.gmra.mxu0 %v4349
      %v4460 = vpop.f32.mrf.mxu0
      %v4461 = vadd.f32 0.0, %v4460
      %v4462 = vpop.f32.mrf.mxu0
      %v4463 = vpop.f32.mrf.mxu0
      %v4464 = vadd.f32 0.0, %v4463
      %v4465 = vpop.f32.mrf.mxu0
      %4466 = vmatprep.mubr.bf16.mxu0 0
      %4467 = vmatmul.mubr.bf16.gmra.mxu0 %v4352
      %v4468 = vpop.f32.mrf.mxu0
      %v4469 = vadd.f32 0.0, %v4468
      %v4470 = vpop.f32.mrf.mxu0
      %v4471 = vpop.f32.mrf.mxu0
      %v4472 = vadd.f32 0.0, %v4471
      %v4473 = vpop.f32.mrf.mxu0
      %4474 = vdwg.mxu0
      %v4475 = vsel %vm696, %v4413, -1e+30
      %v4476 = vsel %vm696, %v4416, -1e+30
      %v4477 = vsel %vm696, %v4421, -1e+30
      %v4478 = vsel %vm696, %v4424, -1e+30
      %v4479 = vsel %vm696, %v4429, -1e+30
      %v4480 = vsel %vm696, %v4432, -1e+30
      %v4481 = vsel %vm696, %v4437, -1e+30
      %v4482 = vsel %vm696, %v4440, -1e+30
      %v4483 = vsel %vm696, %v4445, -1e+30
      %v4484 = vsel %vm696, %v4448, -1e+30
      %v4485 = vsel %vm696, %v4453, -1e+30
      %v4486 = vsel %vm696, %v4456, -1e+30
      %v4487 = vsel %vm696, %v4461, -1e+30
      %v4488 = vsel %vm696, %v4464, -1e+30
      %v4489 = vsel %vm696, %v4469, -1e+30
      %v4490 = vsel %vm696, %v4472, -1e+30
      %4491 = vmax.xlane.f32.xlu0 %v4475
      %v4492 = vpop.xlane.xlu0 %4491
      %4493 = vmax.xlane.f32.xlu0 %v4476
      %v4494 = vpop.xlane.xlu0 %4493
      %4495 = vmax.xlane.f32.xlu0 %v4477
      %v4496 = vpop.xlane.xlu0 %4495
      %4497 = vmax.xlane.f32.xlu0 %v4478
      %v4498 = vpop.xlane.xlu0 %4497
      %4499 = vmax.xlane.f32.xlu0 %v4479
      %v4500 = vpop.xlane.xlu0 %4499
      %4501 = vmax.xlane.f32.xlu0 %v4480
      %v4502 = vpop.xlane.xlu0 %4501
      %4503 = vmax.xlane.f32.xlu0 %v4481
      %v4504 = vpop.xlane.xlu0 %4503
      %4505 = vmax.xlane.f32.xlu0 %v4482
      %v4506 = vpop.xlane.xlu0 %4505
      %4507 = vmax.xlane.f32.xlu0 %v4483
      %v4508 = vpop.xlane.xlu0 %4507
      %4509 = vmax.xlane.f32.xlu0 %v4484
      %v4510 = vpop.xlane.xlu0 %4509
      %4511 = vmax.xlane.f32.xlu0 %v4485
      %v4512 = vpop.xlane.xlu0 %4511
      %4513 = vmax.xlane.f32.xlu0 %v4486
      %v4514 = vpop.xlane.xlu0 %4513
      %4515 = vmax.xlane.f32.xlu0 %v4487
      %v4516 = vpop.xlane.xlu0 %4515
      %4517 = vmax.xlane.f32.xlu0 %v4488
      %v4518 = vpop.xlane.xlu0 %4517
      %4519 = vmax.xlane.f32.xlu0 %v4489
      %v4520 = vpop.xlane.xlu0 %4519
      %4521 = vmax.xlane.f32.xlu0 %v4490
      %v4522 = vpop.xlane.xlu0 %4521
      %v4523 = vsub.f32 %v4475, %v4492
      %v4524 = vsub.f32 %v4476, %v4494
      %v4525 = vsub.f32 %v4477, %v4496
      %v4526 = vsub.f32 %v4478, %v4498
      %v4527 = vsub.f32 %v4479, %v4500
      %v4528 = vsub.f32 %v4480, %v4502
      %v4529 = vsub.f32 %v4481, %v4504
      %v4530 = vsub.f32 %v4482, %v4506
      %v4531 = vsub.f32 %v4483, %v4508
      %v4532 = vsub.f32 %v4484, %v4510
      %v4533 = vsub.f32 %v4485, %v4512
      %v4534 = vsub.f32 %v4486, %v4514
      %v4535 = vsub.f32 %v4487, %v4516
      %v4536 = vsub.f32 %v4488, %v4518
      %v4537 = vsub.f32 %v4489, %v4520
      %v4538 = vsub.f32 %v4490, %v4522
      %v4539 = vmul.f32 %v4523, 1.442695
      %v4540 = vpow.pop %v4539
      %v4541 = vmul.f32 %v4524, 1.442695
      %v4542 = vpow.pop %v4541
      %v4543 = vmul.f32 %v4525, 1.442695
      %v4544 = vpow.pop %v4543
      %v4545 = vmul.f32 %v4526, 1.442695
      %v4546 = vpow.pop %v4545
      %v4547 = vmul.f32 %v4527, 1.442695
      %v4548 = vpow.pop %v4547
      %v4549 = vmul.f32 %v4528, 1.442695
      %v4550 = vpow.pop %v4549
      %v4551 = vmul.f32 %v4529, 1.442695
      %v4552 = vpow.pop %v4551
      %v4553 = vmul.f32 %v4530, 1.442695
      %v4554 = vpow.pop %v4553
      %v4555 = vmul.f32 %v4531, 1.442695
      %v4556 = vpow.pop %v4555
      %v4557 = vmul.f32 %v4532, 1.442695
      %v4558 = vpow.pop %v4557
      %v4559 = vmul.f32 %v4533, 1.442695
      %v4560 = vpow.pop %v4559
      %v4561 = vmul.f32 %v4534, 1.442695
      %v4562 = vpow.pop %v4561
      %v4563 = vmul.f32 %v4535, 1.442695
      %v4564 = vpow.pop %v4563
      %v4565 = vmul.f32 %v4536, 1.442695
      %v4566 = vpow.pop %v4565
      %v4567 = vmul.f32 %v4537, 1.442695
      %v4568 = vpow.pop %v4567
      %v4569 = vmul.f32 %v4538, 1.442695
      %v4570 = vpow.pop %v4569
      %4571 = vadd.xlane.f32.xlu0 %v4540
      %v4572 = vpop.xlane.xlu0 %4571
      %4573 = vadd.xlane.f32.xlu0 %v4542
      %v4574 = vpop.xlane.xlu0 %4573
      %4575 = vadd.xlane.f32.xlu0 %v4544
      %v4576 = vpop.xlane.xlu0 %4575
      %4577 = vadd.xlane.f32.xlu0 %v4546
      %v4578 = vpop.xlane.xlu0 %4577
      %4579 = vadd.xlane.f32.xlu0 %v4548
      %v4580 = vpop.xlane.xlu0 %4579
      %4581 = vadd.xlane.f32.xlu0 %v4550
      %v4582 = vpop.xlane.xlu0 %4581
      %4583 = vadd.xlane.f32.xlu0 %v4552
      %v4584 = vpop.xlane.xlu0 %4583
      %4585 = vadd.xlane.f32.xlu0 %v4554
      %v4586 = vpop.xlane.xlu0 %4585
      %4587 = vadd.xlane.f32.xlu0 %v4556
      %v4588 = vpop.xlane.xlu0 %4587
      %4589 = vadd.xlane.f32.xlu0 %v4558
      %v4590 = vpop.xlane.xlu0 %4589
      %4591 = vadd.xlane.f32.xlu0 %v4560
      %v4592 = vpop.xlane.xlu0 %4591
      %4593 = vadd.xlane.f32.xlu0 %v4562
      %v4594 = vpop.xlane.xlu0 %4593
      %4595 = vadd.xlane.f32.xlu0 %v4564
      %v4596 = vpop.xlane.xlu0 %4595
      %4597 = vadd.xlane.f32.xlu0 %v4566
      %v4598 = vpop.xlane.xlu0 %4597
      %4599 = vadd.xlane.f32.xlu0 %v4568
      %v4600 = vpop.xlane.xlu0 %4599
      %4601 = vadd.xlane.f32.xlu0 %v4570
      %v4602 = vpop.xlane.xlu0 %4601
      %v4603 = vrcp.pop %v4572
      %v4604 = vrcp.pop %v4574
      %v4605 = vrcp.pop %v4576
      %v4606 = vrcp.pop %v4578
      %v4607 = vrcp.pop %v4580
      %v4608 = vrcp.pop %v4582
      %v4609 = vrcp.pop %v4584
      %v4610 = vrcp.pop %v4586
      %v4611 = vrcp.pop %v4588
      %v4612 = vrcp.pop %v4590
      %v4613 = vrcp.pop %v4592
      %v4614 = vrcp.pop %v4594
      %v4615 = vrcp.pop %v4596
      %v4616 = vrcp.pop %v4598
      %v4617 = vrcp.pop %v4600
      %v4618 = vrcp.pop %v4602
      %v4619 = vpack.c.bf16 %v4542, %v4540
      %v4620 = vpack.c.bf16 %v4546, %v4544
      %v4621 = vpack.c.bf16 %v4550, %v4548
      %v4622 = vpack.c.bf16 %v4554, %v4552
      %v4623 = vpack.c.bf16 %v4558, %v4556
      %v4624 = vpack.c.bf16 %v4562, %v4560
      %v4625 = vpack.c.bf16 %v4566, %v4564
      %v4626 = vpack.c.bf16 %v4570, %v4568
      %4627 = vrot.lane.b32.xlu0 %v4290, 40
      %v4628 = vpop.permute.xlu0 %4627
      %4629 = vrot.lane.b32.xlu0 %v4291, 40
      %v4630 = vpop.permute.xlu0 %4629
      %4631 = vrot.lane.b32.xlu0 %v4292, 40
      %v4632 = vpop.permute.xlu0 %4631
      %4633 = vrot.lane.b32.xlu0 %v4293, 40
      %v4634 = vpop.permute.xlu0 %4633
      %4635 = vrot.lane.b32.xlu0 %v4294, 40
      %v4636 = vpop.permute.xlu0 %4635
      %4637 = vrot.lane.b32.xlu0 %v4295, 40
      %v4638 = vpop.permute.xlu0 %4637
      %4639 = vrot.lane.b32.xlu0 %v4296, 40
      %v4640 = vpop.permute.xlu0 %4639
      %4641 = vrot.lane.b32.xlu0 %v4297, 40
      %v4642 = vpop.permute.xlu0 %4641
      %4651 = vmatprep.subr.bf16.mxu0 0
      %4652 = vmatpush1.bf16.msra.mxu0 %v4642
      %4653 = vmatprep.subr.bf16.mxu0 0
      %4654 = vmatpush1.bf16.msra.mxu0 %v4640
      %4655 = vmatprep.subr.bf16.mxu0 0
      %4656 = vmatpush1.bf16.msra.mxu0 %v4638
      %4657 = vmatprep.subr.bf16.mxu0 0
      %4658 = vmatpush1.bf16.msra.mxu0 %v4636
      %4659 = vmatprep.subr.bf16.mxu0 0
      %4660 = vmatpush1.bf16.msra.mxu0 %v4634
      %4661 = vmatprep.subr.bf16.mxu0 0
      %4662 = vmatpush1.bf16.msra.mxu0 %v4632
      %4663 = vmatprep.subr.bf16.mxu0 0
      %4664 = vmatpush1.bf16.msra.mxu0 %v4630
      %4665 = vmatprep.subr.bf16.mxu0 0
      %4666 = vmatpush1.bf16.msra.mxu0 %v4628
      %4667 = vmatprep.subr.bf16.mxu0 0
      %4668 = vmatpush2.bf16.msra.mxu0 0
      %4669 = vmatprep.subr.bf16.mxu0 0
      %4670 = vmatpush2.bf16.msra.mxu0 0
      %4671 = vmatprep.subr.bf16.mxu0 0
      %4672 = vmatpush2.bf16.msra.mxu0 0
      %4673 = vmatprep.subr.bf16.mxu0 0
      %4674 = vmatpush2.bf16.msra.mxu0 0
      %4675 = vmatprep.subr.bf16.mxu0 0
      %4676 = vmatpush2.bf16.msra.mxu0 0
      %4677 = vmatprep.subr.bf16.mxu0 0
      %4678 = vmatpush2.bf16.msra.mxu0 0
      %4679 = vmatprep.subr.bf16.mxu0 0
      %4680 = vmatpush2.bf16.msra.mxu0 0
      %4681 = vmatprep.subr.bf16.mxu0 0
      %4682 = vmatpush2.bf16.msra.mxu0 0
      %4683 = vmatprep.mubr.bf16.mxu0 0
      %4684 = vmatmul.mubr.bf16.gmra.mxu0 %v4619
      %v4685 = vpop.f32.mrf.mxu0
      %v4686 = vadd.f32 0.0, %v4685
      %v4687 = vpop.f32.mrf.mxu0
      %v4688 = vpop.f32.mrf.mxu0
      %v4689 = vadd.f32 0.0, %v4688
      %v4690 = vpop.f32.mrf.mxu0
      %4691 = vmatprep.mubr.bf16.mxu0 0
      %4692 = vmatmul.mubr.bf16.gmra.mxu0 %v4620
      %v4693 = vpop.f32.mrf.mxu0
      %v4694 = vadd.f32 0.0, %v4693
      %v4695 = vpop.f32.mrf.mxu0
      %v4696 = vpop.f32.mrf.mxu0
      %v4697 = vadd.f32 0.0, %v4696
      %v4698 = vpop.f32.mrf.mxu0
      %4699 = vmatprep.mubr.bf16.mxu0 0
      %4700 = vmatmul.mubr.bf16.gmra.mxu0 %v4621
      %v4701 = vpop.f32.mrf.mxu0
      %v4702 = vadd.f32 0.0, %v4701
      %v4703 = vpop.f32.mrf.mxu0
      %v4704 = vpop.f32.mrf.mxu0
      %v4705 = vadd.f32 0.0, %v4704
      %v4706 = vpop.f32.mrf.mxu0
      %4707 = vmatprep.mubr.bf16.mxu0 0
      %4708 = vmatmul.mubr.bf16.gmra.mxu0 %v4622
      %v4709 = vpop.f32.mrf.mxu0
      %v4710 = vadd.f32 0.0, %v4709
      %v4711 = vpop.f32.mrf.mxu0
      %v4712 = vpop.f32.mrf.mxu0
      %v4713 = vadd.f32 0.0, %v4712
      %v4714 = vpop.f32.mrf.mxu0
      %4715 = vmatprep.mubr.bf16.mxu0 0
      %4716 = vmatmul.mubr.bf16.gmra.mxu0 %v4623
      %v4717 = vpop.f32.mrf.mxu0
      %v4718 = vadd.f32 0.0, %v4717
      %v4719 = vpop.f32.mrf.mxu0
      %v4720 = vpop.f32.mrf.mxu0
      %v4721 = vadd.f32 0.0, %v4720
      %v4722 = vpop.f32.mrf.mxu0
      %4723 = vmatprep.mubr.bf16.mxu0 0
      %4724 = vmatmul.mubr.bf16.gmra.mxu0 %v4624
      %v4725 = vpop.f32.mrf.mxu0
      %v4726 = vadd.f32 0.0, %v4725
      %v4727 = vpop.f32.mrf.mxu0
      %v4728 = vpop.f32.mrf.mxu0
      %v4729 = vadd.f32 0.0, %v4728
      %v4730 = vpop.f32.mrf.mxu0
      %4731 = vmatprep.mubr.bf16.mxu0 0
      %4732 = vmatmul.mubr.bf16.gmra.mxu0 %v4625
      %v4733 = vpop.f32.mrf.mxu0
      %v4734 = vadd.f32 0.0, %v4733
      %v4735 = vpop.f32.mrf.mxu0
      %v4736 = vpop.f32.mrf.mxu0
      %v4737 = vadd.f32 0.0, %v4736
      %v4738 = vpop.f32.mrf.mxu0
      %4739 = vmatprep.mubr.bf16.mxu0 0
      %4740 = vmatmul.mubr.bf16.gmra.mxu0 %v4626
      %v4741 = vpop.f32.mrf.mxu0
      %v4742 = vadd.f32 0.0, %v4741
      %v4743 = vpop.f32.mrf.mxu0
      %v4744 = vpop.f32.mrf.mxu0
      %v4745 = vadd.f32 0.0, %v4744
      %v4746 = vpop.f32.mrf.mxu0
      %4747 = vdwg.mxu0
      %v4748 = vmul.f32 %v4686, %v4603
      %v4749 = vmul.f32 %v4689, %v4604
      %v4750 = vmul.f32 %v4694, %v4605
      %v4751 = vmul.f32 %v4697, %v4606
      %v4752 = vmul.f32 %v4702, %v4607
      %v4753 = vmul.f32 %v4705, %v4608
      %v4754 = vmul.f32 %v4710, %v4609
      %v4755 = vmul.f32 %v4713, %v4610
      %v4756 = vmul.f32 %v4718, %v4611
      %v4757 = vmul.f32 %v4721, %v4612
      %v4758 = vmul.f32 %v4726, %v4613
      %v4759 = vmul.f32 %v4729, %v4614
      %v4760 = vmul.f32 %v4734, %v4615
      %v4761 = vmul.f32 %v4737, %v4616
      %v4762 = vmul.f32 %v4742, %v4617
      %v4763 = vmul.f32 %v4745, %v4618
      %v4764 = vpack.c.bf16 %v4749, %v4748
      %v4765 = vpack.c.bf16 %v4751, %v4750
      %v4766 = vpack.c.bf16 %v4753, %v4752
      %v4767 = vpack.c.bf16 %v4755, %v4754
      %v4768 = vpack.c.bf16 %v4757, %v4756
      %v4769 = vpack.c.bf16 %v4759, %v4758
      %v4770 = vpack.c.bf16 %v4761, %v4760
      %v4771 = vpack.c.bf16 %v4763, %v4762
      %v4780 = vunpack.c.l.b16 %v4764
      %v4781 = vunpack.c.h.b16 %v4764
      %v4782 = vunpack.c.l.b16 %v4765
      %v4783 = vunpack.c.h.b16 %v4765
      %v4784 = vunpack.c.l.b16 %v4766
      %v4785 = vunpack.c.h.b16 %v4766
      %v4786 = vunpack.c.l.b16 %v4767
      %v4787 = vunpack.c.h.b16 %v4767
      %v4788 = vunpack.c.l.b16 %v4768
      %v4789 = vunpack.c.h.b16 %v4768
      %v4790 = vunpack.c.l.b16 %v4769
      %v4791 = vunpack.c.h.b16 %v4769
      %v4792 = vunpack.c.l.b16 %v4770
      %v4793 = vunpack.c.h.b16 %v4770
      %v4794 = vunpack.c.l.b16 %v4771
      %v4795 = vunpack.c.h.b16 %v4771
      %v4796 = vpack.c.b16 %v4780, %v4780
      %v4797 = vpack.c.b16 %v4781, %v4781
      %v4798 = vpack.c.b16 %v4782, %v4782
      %v4799 = vpack.c.b16 %v4783, %v4783
      %v4800 = vpack.c.b16 %v4784, %v4784
      %v4801 = vpack.c.b16 %v4785, %v4785
      %v4802 = vpack.c.b16 %v4786, %v4786
      %v4803 = vpack.c.b16 %v4787, %v4787
      %v4804 = vpack.c.b16 %v4788, %v4788
      %v4805 = vpack.c.b16 %v4789, %v4789
      %v4806 = vpack.c.b16 %v4790, %v4790
      %v4807 = vpack.c.b16 %v4791, %v4791
      %v4808 = vpack.c.b16 %v4792, %v4792
      %v4809 = vpack.c.b16 %v4793, %v4793
      %v4810 = vpack.c.b16 %v4794, %v4794
      %v4811 = vpack.c.b16 %v4795, %v4795
      %4812 = vrot.lane.b32.xlu0 %v4796, 24
      %v4813 = vpop.permute.xlu0 %4812
      %4814 = vrot.lane.b32.xlu0 %v4797, 24
      %v4815 = vpop.permute.xlu0 %4814
      %4816 = vrot.lane.b32.xlu0 %v4798, 24
      %v4817 = vpop.permute.xlu0 %4816
      %4818 = vrot.lane.b32.xlu0 %v4799, 24
      %v4819 = vpop.permute.xlu0 %4818
      %4820 = vrot.lane.b32.xlu0 %v4800, 24
      %v4821 = vpop.permute.xlu0 %4820
      %4822 = vrot.lane.b32.xlu0 %v4801, 24
      %v4823 = vpop.permute.xlu0 %4822
      %4824 = vrot.lane.b32.xlu0 %v4802, 24
      %v4825 = vpop.permute.xlu0 %4824
      %4826 = vrot.lane.b32.xlu0 %v4803, 24
      %v4827 = vpop.permute.xlu0 %4826
      %4828 = vrot.lane.b32.xlu0 %v4804, 24
      %v4829 = vpop.permute.xlu0 %4828
      %4830 = vrot.lane.b32.xlu0 %v4805, 24
      %v4831 = vpop.permute.xlu0 %4830
      %4832 = vrot.lane.b32.xlu0 %v4806, 24
      %v4833 = vpop.permute.xlu0 %4832
      %4834 = vrot.lane.b32.xlu0 %v4807, 24
      %v4835 = vpop.permute.xlu0 %4834
      %4836 = vrot.lane.b32.xlu0 %v4808, 24
      %v4837 = vpop.permute.xlu0 %4836
      %4838 = vrot.lane.b32.xlu0 %v4809, 24
      %v4839 = vpop.permute.xlu0 %4838
      %4840 = vrot.lane.b32.xlu0 %v4810, 24
      %v4841 = vpop.permute.xlu0 %4840
      %4842 = vrot.lane.b32.xlu0 %v4811, 24
      %v4843 = vpop.permute.xlu0 %4842
      %vm4860 = vcmask 224448
      %4861 = vst.msk [vmem:[#allocation3] sm:$0xf] %vm4860, %v4813
      %4862 = vst.msk [vmem:[#allocation3 + $0x4] sm:$0xf] %vm4860, %v4815
      %4863 = vst.msk [vmem:[#allocation3 + $0x8] sm:$0xf] %vm4860, %v4817
      %4864 = vst.msk [vmem:[#allocation3 + $0xc] sm:$0xf] %vm4860, %v4819
      %4865 = vst.msk [vmem:[#allocation3 + $0x10] sm:$0xf] %vm4860, %v4821
      %4866 = vst.msk [vmem:[#allocation3 + $0x14] sm:$0xf] %vm4860, %v4823
      %4867 = vst.msk [vmem:[#allocation3 + $0x18] sm:$0xf] %vm4860, %v4825
      %4868 = vst.msk [vmem:[#allocation3 + $0x1c] sm:$0xf] %vm4860, %v4827
      %4869 = vst.msk [vmem:[#allocation3 + $0x20] sm:$0xf] %vm4860, %v4829
      %4870 = vst.msk [vmem:[#allocation3 + $0x24] sm:$0xf] %vm4860, %v4831
      %4871 = vst.msk [vmem:[#allocation3 + $0x28] sm:$0xf] %vm4860, %v4833
      %4872 = vst.msk [vmem:[#allocation3 + $0x2c] sm:$0xf] %vm4860, %v4835
      %4873 = vst.msk [vmem:[#allocation3 + $0x30] sm:$0xf] %vm4860, %v4837
      %4874 = vst.msk [vmem:[#allocation3 + $0x34] sm:$0xf] %vm4860, %v4839
      %4875 = vst.msk [vmem:[#allocation3 + $0x38] sm:$0xf] %vm4860, %v4841
      %4876 = vst.msk [vmem:[#allocation3 + $0x3c] sm:$0xf] %vm4860, %v4843
      %v4877 = vld [vmem:[#allocation2] sm:$0xf]
      %v4878 = vld [vmem:[#allocation2 + $0x4] sm:$0xf]
      %v4879 = vld [vmem:[#allocation2 + $0x8] sm:$0xf]
      %v4880 = vld [vmem:[#allocation2 + $0xc] sm:$0xf]
      %v4881 = vld [vmem:[#allocation2 + $0x10] sm:$0xf]
      %v4882 = vld [vmem:[#allocation2 + $0x14] sm:$0xf]
      %v4883 = vld [vmem:[#allocation2 + $0x18] sm:$0xf]
      %v4884 = vld [vmem:[#allocation2 + $0x1c] sm:$0xf]
      %v4885 = vld [vmem:[#allocation2 + $0x20] sm:$0xf]
      %v4886 = vld [vmem:[#allocation2 + $0x24] sm:$0xf]
      %v4887 = vld [vmem:[#allocation2 + $0x28] sm:$0xf]
      %v4888 = vld [vmem:[#allocation2 + $0x2c] sm:$0xf]
      %v4889 = vld [vmem:[#allocation2 + $0x30] sm:$0xf]
      %v4890 = vld [vmem:[#allocation2 + $0x34] sm:$0xf]
      %v4891 = vld [vmem:[#allocation2 + $0x38] sm:$0xf]
      %v4892 = vld [vmem:[#allocation2 + $0x3c] sm:$0xf]
      %v4909 = vunpack.c.l.b16 %v4877
      %v4910 = vunpack.c.l.b16 %v4878
      %v4911 = vunpack.c.l.b16 %v4879
      %v4912 = vunpack.c.l.b16 %v4880
      %v4913 = vunpack.c.l.b16 %v4881
      %v4914 = vunpack.c.l.b16 %v4882
      %v4915 = vunpack.c.l.b16 %v4883
      %v4916 = vunpack.c.l.b16 %v4884
      %v4917 = vunpack.c.l.b16 %v4885
      %v4918 = vunpack.c.l.b16 %v4886
      %v4919 = vunpack.c.l.b16 %v4887
      %v4920 = vunpack.c.l.b16 %v4888
      %v4921 = vunpack.c.l.b16 %v4889
      %v4922 = vunpack.c.l.b16 %v4890
      %v4923 = vunpack.c.l.b16 %v4891
      %v4924 = vunpack.c.l.b16 %v4892
      %v4925 = vpack.c.b16 %v4910, %v4909
      %v4926 = vpack.c.b16 %v4912, %v4911
      %v4927 = vpack.c.b16 %v4914, %v4913
      %v4928 = vpack.c.b16 %v4916, %v4915
      %v4929 = vpack.c.b16 %v4918, %v4917
      %v4930 = vpack.c.b16 %v4920, %v4919
      %v4931 = vpack.c.b16 %v4922, %v4921
      %v4932 = vpack.c.b16 %v4924, %v4923
      %4933 = vrot.lane.b32.xlu0 %v4925, 100
      %v4934 = vpop.permute.xlu0 %4933
      %4935 = vrot.lane.b32.xlu0 %v4926, 100
      %v4936 = vpop.permute.xlu0 %4935
      %4937 = vrot.lane.b32.xlu0 %v4927, 100
      %v4938 = vpop.permute.xlu0 %4937
      %4939 = vrot.lane.b32.xlu0 %v4928, 100
      %v4940 = vpop.permute.xlu0 %4939
      %4941 = vrot.lane.b32.xlu0 %v4929, 100
      %v4942 = vpop.permute.xlu0 %4941
      %4943 = vrot.lane.b32.xlu0 %v4930, 100
      %v4944 = vpop.permute.xlu0 %4943
      %4945 = vrot.lane.b32.xlu0 %v4931, 100
      %v4946 = vpop.permute.xlu0 %4945
      %4947 = vrot.lane.b32.xlu0 %v4932, 100
      %v4948 = vpop.permute.xlu0 %4947
      %4949 = vrot.lane.b32.xlu0 %v4925, 68
      %v4950 = vpop.permute.xlu0 %4949
      %4951 = vrot.lane.b32.xlu0 %v4926, 68
      %v4952 = vpop.permute.xlu0 %4951
      %4953 = vrot.lane.b32.xlu0 %v4927, 68
      %v4954 = vpop.permute.xlu0 %4953
      %4955 = vrot.lane.b32.xlu0 %v4928, 68
      %v4956 = vpop.permute.xlu0 %4955
      %4957 = vrot.lane.b32.xlu0 %v4929, 68
      %v4958 = vpop.permute.xlu0 %4957
      %4959 = vrot.lane.b32.xlu0 %v4930, 68
      %v4960 = vpop.permute.xlu0 %4959
      %4961 = vrot.lane.b32.xlu0 %v4931, 68
      %v4962 = vpop.permute.xlu0 %4961
      %4963 = vrot.lane.b32.xlu0 %v4932, 68
      %v4964 = vpop.permute.xlu0 %4963
      %v4966 = vsel %vm549, %v4934, 0
      %v4969 = vsel %vm549, %v4936, 0
      %v4972 = vsel %vm549, %v4938, 0
      %v4975 = vsel %vm549, %v4940, 0
      %v4978 = vsel %vm549, %v4942, 0
      %v4981 = vsel %vm549, %v4944, 0
      %v4984 = vsel %vm549, %v4946, 0
      %v4987 = vsel %vm549, %v4948, 0
      %v4990 = vsel %vm549, %v4950, 0
      %v4993 = vsel %vm549, %v4952, 0
      %v4996 = vsel %vm549, %v4954, 0
      %v4999 = vsel %vm549, %v4956, 0
      %v5002 = vsel %vm549, %v4958, 0
      %v5005 = vsel %vm549, %v4960, 0
      %v5008 = vsel %vm549, %v4962, 0
      %v5011 = vsel %vm549, %v4964, 0
      %5013 = vmatprep.subr.bf16.mxu0 0
      %5014 = vmatpush1.bf16.xpose.msra.mxu0 %v5011
      %5015 = vmatprep.subr.bf16.mxu0 0
      %5016 = vmatpush1.bf16.xpose.msra.mxu0 %v5008
      %5017 = vmatprep.subr.bf16.mxu0 0
      %5018 = vmatpush1.bf16.xpose.msra.mxu0 %v5005
      %5019 = vmatprep.subr.bf16.mxu0 0
      %5020 = vmatpush1.bf16.xpose.msra.mxu0 %v5002
      %5021 = vmatprep.subr.bf16.mxu0 0
      %5022 = vmatpush1.bf16.xpose.msra.mxu0 %v4999
      %5023 = vmatprep.subr.bf16.mxu0 0
      %5024 = vmatpush1.bf16.xpose.msra.mxu0 %v4996
      %5025 = vmatprep.subr.bf16.mxu0 0
      %5026 = vmatpush1.bf16.xpose.msra.mxu0 %v4993
      %5027 = vmatprep.subr.bf16.mxu0 0
      %5028 = vmatpush1.bf16.xpose.msra.mxu0 %v4990
      %5029 = vmatprep.subr.bf16.mxu0 0
      %5030 = vmatpush2.bf16.xpose.msra.mxu0 0
      %5031 = vmatprep.subr.bf16.mxu0 0
      %5032 = vmatpush2.bf16.xpose.msra.mxu0 0
      %5033 = vmatprep.subr.bf16.mxu0 0
      %5034 = vmatpush2.bf16.xpose.msra.mxu0 0
      %5035 = vmatprep.subr.bf16.mxu0 0
      %5036 = vmatpush2.bf16.xpose.msra.mxu0 0
      %5037 = vmatprep.subr.bf16.mxu0 0
      %5038 = vmatpush2.bf16.xpose.msra.mxu0 0
      %5039 = vmatprep.subr.bf16.mxu0 0
      %5040 = vmatpush2.bf16.xpose.msra.mxu0 0
      %5041 = vmatprep.subr.bf16.mxu0 0
      %5042 = vmatpush2.bf16.xpose.msra.mxu0 0
      %5043 = vmatprep.subr.bf16.mxu0 0
      %5044 = vmatpush2.bf16.xpose.msra.mxu0 0
      %5045 = vmatprep.mubr.bf16.mxu0 0
      %5046 = vmatmul.mubr.bf16.gmra.mxu0 %v4966
      %v5047 = vpop.f32.mrf.mxu0
      %v5048 = vadd.f32 0.0, %v5047
      %v5049 = vpop.f32.mrf.mxu0
      %v5050 = vpop.f32.mrf.mxu0
      %v5051 = vadd.f32 0.0, %v5050
      %v5052 = vpop.f32.mrf.mxu0
      %5053 = vmatprep.mubr.bf16.mxu0 0
      %5054 = vmatmul.mubr.bf16.gmra.mxu0 %v4969
      %v5055 = vpop.f32.mrf.mxu0
      %v5056 = vadd.f32 0.0, %v5055
      %v5057 = vpop.f32.mrf.mxu0
      %v5058 = vpop.f32.mrf.mxu0
      %v5059 = vadd.f32 0.0, %v5058
      %v5060 = vpop.f32.mrf.mxu0
      %5061 = vmatprep.mubr.bf16.mxu0 0
      %5062 = vmatmul.mubr.bf16.gmra.mxu0 %v4972
      %v5063 = vpop.f32.mrf.mxu0
      %v5064 = vadd.f32 0.0, %v5063
      %v5065 = vpop.f32.mrf.mxu0
      %v5066 = vpop.f32.mrf.mxu0
      %v5067 = vadd.f32 0.0, %v5066
      %v5068 = vpop.f32.mrf.mxu0
      %5069 = vmatprep.mubr.bf16.mxu0 0
      %5070 = vmatmul.mubr.bf16.gmra.mxu0 %v4975
      %v5071 = vpop.f32.mrf.mxu0
      %v5072 = vadd.f32 0.0, %v5071
      %v5073 = vpop.f32.mrf.mxu0
      %v5074 = vpop.f32.mrf.mxu0
      %v5075 = vadd.f32 0.0, %v5074
      %v5076 = vpop.f32.mrf.mxu0
      %5077 = vmatprep.mubr.bf16.mxu0 0
      %5078 = vmatmul.mubr.bf16.gmra.mxu0 %v4978
      %v5079 = vpop.f32.mrf.mxu0
      %v5080 = vadd.f32 0.0, %v5079
      %v5081 = vpop.f32.mrf.mxu0
      %v5082 = vpop.f32.mrf.mxu0
      %v5083 = vadd.f32 0.0, %v5082
      %v5084 = vpop.f32.mrf.mxu0
      %5085 = vmatprep.mubr.bf16.mxu0 0
      %5086 = vmatmul.mubr.bf16.gmra.mxu0 %v4981
      %v5087 = vpop.f32.mrf.mxu0
      %v5088 = vadd.f32 0.0, %v5087
      %v5089 = vpop.f32.mrf.mxu0
      %v5090 = vpop.f32.mrf.mxu0
      %v5091 = vadd.f32 0.0, %v5090
      %v5092 = vpop.f32.mrf.mxu0
      %5093 = vmatprep.mubr.bf16.mxu0 0
      %5094 = vmatmul.mubr.bf16.gmra.mxu0 %v4984
      %v5095 = vpop.f32.mrf.mxu0
      %v5096 = vadd.f32 0.0, %v5095
      %v5097 = vpop.f32.mrf.mxu0
      %v5098 = vpop.f32.mrf.mxu0
      %v5099 = vadd.f32 0.0, %v5098
      %v5100 = vpop.f32.mrf.mxu0
      %5101 = vmatprep.mubr.bf16.mxu0 0
      %5102 = vmatmul.mubr.bf16.gmra.mxu0 %v4987
      %v5103 = vpop.f32.mrf.mxu0
      %v5104 = vadd.f32 0.0, %v5103
      %v5105 = vpop.f32.mrf.mxu0
      %v5106 = vpop.f32.mrf.mxu0
      %v5107 = vadd.f32 0.0, %v5106
      %v5108 = vpop.f32.mrf.mxu0
      %5109 = vdwg.mxu0
      %v5110 = vsel %vm696, %v5048, -1e+30
      %v5111 = vsel %vm696, %v5051, -1e+30
      %v5112 = vsel %vm696, %v5056, -1e+30
      %v5113 = vsel %vm696, %v5059, -1e+30
      %v5114 = vsel %vm696, %v5064, -1e+30
      %v5115 = vsel %vm696, %v5067, -1e+30
      %v5116 = vsel %vm696, %v5072, -1e+30
      %v5117 = vsel %vm696, %v5075, -1e+30
      %v5118 = vsel %vm696, %v5080, -1e+30
      %v5119 = vsel %vm696, %v5083, -1e+30
      %v5120 = vsel %vm696, %v5088, -1e+30
      %v5121 = vsel %vm696, %v5091, -1e+30
      %v5122 = vsel %vm696, %v5096, -1e+30
      %v5123 = vsel %vm696, %v5099, -1e+30
      %v5124 = vsel %vm696, %v5104, -1e+30
      %v5125 = vsel %vm696, %v5107, -1e+30
      %5126 = vmax.xlane.f32.xlu0 %v5110
      %v5127 = vpop.xlane.xlu0 %5126
      %5128 = vmax.xlane.f32.xlu0 %v5111
      %v5129 = vpop.xlane.xlu0 %5128
      %5130 = vmax.xlane.f32.xlu0 %v5112
      %v5131 = vpop.xlane.xlu0 %5130
      %5132 = vmax.xlane.f32.xlu0 %v5113
      %v5133 = vpop.xlane.xlu0 %5132
      %5134 = vmax.xlane.f32.xlu0 %v5114
      %v5135 = vpop.xlane.xlu0 %5134
      %5136 = vmax.xlane.f32.xlu0 %v5115
      %v5137 = vpop.xlane.xlu0 %5136
      %5138 = vmax.xlane.f32.xlu0 %v5116
      %v5139 = vpop.xlane.xlu0 %5138
      %5140 = vmax.xlane.f32.xlu0 %v5117
      %v5141 = vpop.xlane.xlu0 %5140
      %5142 = vmax.xlane.f32.xlu0 %v5118
      %v5143 = vpop.xlane.xlu0 %5142
      %5144 = vmax.xlane.f32.xlu0 %v5119
      %v5145 = vpop.xlane.xlu0 %5144
      %5146 = vmax.xlane.f32.xlu0 %v5120
      %v5147 = vpop.xlane.xlu0 %5146
      %5148 = vmax.xlane.f32.xlu0 %v5121
      %v5149 = vpop.xlane.xlu0 %5148
      %5150 = vmax.xlane.f32.xlu0 %v5122
      %v5151 = vpop.xlane.xlu0 %5150
      %5152 = vmax.xlane.f32.xlu0 %v5123
      %v5153 = vpop.xlane.xlu0 %5152
      %5154 = vmax.xlane.f32.xlu0 %v5124
      %v5155 = vpop.xlane.xlu0 %5154
      %5156 = vmax.xlane.f32.xlu0 %v5125
      %v5157 = vpop.xlane.xlu0 %5156
      %v5158 = vsub.f32 %v5110, %v5127
      %v5159 = vsub.f32 %v5111, %v5129
      %v5160 = vsub.f32 %v5112, %v5131
      %v5161 = vsub.f32 %v5113, %v5133
      %v5162 = vsub.f32 %v5114, %v5135
      %v5163 = vsub.f32 %v5115, %v5137
      %v5164 = vsub.f32 %v5116, %v5139
      %v5165 = vsub.f32 %v5117, %v5141
      %v5166 = vsub.f32 %v5118, %v5143
      %v5167 = vsub.f32 %v5119, %v5145
      %v5168 = vsub.f32 %v5120, %v5147
      %v5169 = vsub.f32 %v5121, %v5149
      %v5170 = vsub.f32 %v5122, %v5151
      %v5171 = vsub.f32 %v5123, %v5153
      %v5172 = vsub.f32 %v5124, %v5155
      %v5173 = vsub.f32 %v5125, %v5157
      %v5174 = vmul.f32 %v5158, 1.442695
      %v5175 = vpow.pop %v5174
      %v5176 = vmul.f32 %v5159, 1.442695
      %v5177 = vpow.pop %v5176
      %v5178 = vmul.f32 %v5160, 1.442695
      %v5179 = vpow.pop %v5178
      %v5180 = vmul.f32 %v5161, 1.442695
      %v5181 = vpow.pop %v5180
      %v5182 = vmul.f32 %v5162, 1.442695
      %v5183 = vpow.pop %v5182
      %v5184 = vmul.f32 %v5163, 1.442695
      %v5185 = vpow.pop %v5184
      %v5186 = vmul.f32 %v5164, 1.442695
      %v5187 = vpow.pop %v5186
      %v5188 = vmul.f32 %v5165, 1.442695
      %v5189 = vpow.pop %v5188
      %v5190 = vmul.f32 %v5166, 1.442695
      %v5191 = vpow.pop %v5190
      %v5192 = vmul.f32 %v5167, 1.442695
      %v5193 = vpow.pop %v5192
      %v5194 = vmul.f32 %v5168, 1.442695
      %v5195 = vpow.pop %v5194
      %v5196 = vmul.f32 %v5169, 1.442695
      %v5197 = vpow.pop %v5196
      %v5198 = vmul.f32 %v5170, 1.442695
      %v5199 = vpow.pop %v5198
      %v5200 = vmul.f32 %v5171, 1.442695
      %v5201 = vpow.pop %v5200
      %v5202 = vmul.f32 %v5172, 1.442695
      %v5203 = vpow.pop %v5202
      %v5204 = vmul.f32 %v5173, 1.442695
      %v5205 = vpow.pop %v5204
      %5206 = vadd.xlane.f32.xlu0 %v5175
      %v5207 = vpop.xlane.xlu0 %5206
      %5208 = vadd.xlane.f32.xlu0 %v5177
      %v5209 = vpop.xlane.xlu0 %5208
      %5210 = vadd.xlane.f32.xlu0 %v5179
      %v5211 = vpop.xlane.xlu0 %5210
      %5212 = vadd.xlane.f32.xlu0 %v5181
      %v5213 = vpop.xlane.xlu0 %5212
      %5214 = vadd.xlane.f32.xlu0 %v5183
      %v5215 = vpop.xlane.xlu0 %5214
      %5216 = vadd.xlane.f32.xlu0 %v5185
      %v5217 = vpop.xlane.xlu0 %5216
      %5218 = vadd.xlane.f32.xlu0 %v5187
      %v5219 = vpop.xlane.xlu0 %5218
      %5220 = vadd.xlane.f32.xlu0 %v5189
      %v5221 = vpop.xlane.xlu0 %5220
      %5222 = vadd.xlane.f32.xlu0 %v5191
      %v5223 = vpop.xlane.xlu0 %5222
      %5224 = vadd.xlane.f32.xlu0 %v5193
      %v5225 = vpop.xlane.xlu0 %5224
      %5226 = vadd.xlane.f32.xlu0 %v5195
      %v5227 = vpop.xlane.xlu0 %5226
      %5228 = vadd.xlane.f32.xlu0 %v5197
      %v5229 = vpop.xlane.xlu0 %5228
      %5230 = vadd.xlane.f32.xlu0 %v5199
      %v5231 = vpop.xlane.xlu0 %5230
      %5232 = vadd.xlane.f32.xlu0 %v5201
      %v5233 = vpop.xlane.xlu0 %5232
      %5234 = vadd.xlane.f32.xlu0 %v5203
      %v5235 = vpop.xlane.xlu0 %5234
      %5236 = vadd.xlane.f32.xlu0 %v5205
      %v5237 = vpop.xlane.xlu0 %5236
      %v5238 = vrcp.pop %v5207
      %v5239 = vrcp.pop %v5209
      %v5240 = vrcp.pop %v5211
      %v5241 = vrcp.pop %v5213
      %v5242 = vrcp.pop %v5215
      %v5243 = vrcp.pop %v5217
      %v5244 = vrcp.pop %v5219
      %v5245 = vrcp.pop %v5221
      %v5246 = vrcp.pop %v5223
      %v5247 = vrcp.pop %v5225
      %v5248 = vrcp.pop %v5227
      %v5249 = vrcp.pop %v5229
      %v5250 = vrcp.pop %v5231
      %v5251 = vrcp.pop %v5233
      %v5252 = vrcp.pop %v5235
      %v5253 = vrcp.pop %v5237
      %v5254 = vpack.c.bf16 %v5177, %v5175
      %v5255 = vpack.c.bf16 %v5181, %v5179
      %v5256 = vpack.c.bf16 %v5185, %v5183
      %v5257 = vpack.c.bf16 %v5189, %v5187
      %v5258 = vpack.c.bf16 %v5193, %v5191
      %v5259 = vpack.c.bf16 %v5197, %v5195
      %v5260 = vpack.c.bf16 %v5201, %v5199
      %v5261 = vpack.c.bf16 %v5205, %v5203
      %5262 = vrot.lane.b32.xlu0 %v4925, 36
      %v5263 = vpop.permute.xlu0 %5262
      %5264 = vrot.lane.b32.xlu0 %v4926, 36
      %v5265 = vpop.permute.xlu0 %5264
      %5266 = vrot.lane.b32.xlu0 %v4927, 36
      %v5267 = vpop.permute.xlu0 %5266
      %5268 = vrot.lane.b32.xlu0 %v4928, 36
      %v5269 = vpop.permute.xlu0 %5268
      %5270 = vrot.lane.b32.xlu0 %v4929, 36
      %v5271 = vpop.permute.xlu0 %5270
      %5272 = vrot.lane.b32.xlu0 %v4930, 36
      %v5273 = vpop.permute.xlu0 %5272
      %5274 = vrot.lane.b32.xlu0 %v4931, 36
      %v5275 = vpop.permute.xlu0 %5274
      %5276 = vrot.lane.b32.xlu0 %v4932, 36
      %v5277 = vpop.permute.xlu0 %5276
      %5286 = vmatprep.subr.bf16.mxu0 0
      %5287 = vmatpush1.bf16.msra.mxu0 %v5277
      %5288 = vmatprep.subr.bf16.mxu0 0
      %5289 = vmatpush1.bf16.msra.mxu0 %v5275
      %5290 = vmatprep.subr.bf16.mxu0 0
      %5291 = vmatpush1.bf16.msra.mxu0 %v5273
      %5292 = vmatprep.subr.bf16.mxu0 0
      %5293 = vmatpush1.bf16.msra.mxu0 %v5271
      %5294 = vmatprep.subr.bf16.mxu0 0
      %5295 = vmatpush1.bf16.msra.mxu0 %v5269
      %5296 = vmatprep.subr.bf16.mxu0 0
      %5297 = vmatpush1.bf16.msra.mxu0 %v5267
      %5298 = vmatprep.subr.bf16.mxu0 0
      %5299 = vmatpush1.bf16.msra.mxu0 %v5265
      %5300 = vmatprep.subr.bf16.mxu0 0
      %5301 = vmatpush1.bf16.msra.mxu0 %v5263
      %5302 = vmatprep.subr.bf16.mxu0 0
      %5303 = vmatpush2.bf16.msra.mxu0 0
      %5304 = vmatprep.subr.bf16.mxu0 0
      %5305 = vmatpush2.bf16.msra.mxu0 0
      %5306 = vmatprep.subr.bf16.mxu0 0
      %5307 = vmatpush2.bf16.msra.mxu0 0
      %5308 = vmatprep.subr.bf16.mxu0 0
      %5309 = vmatpush2.bf16.msra.mxu0 0
      %5310 = vmatprep.subr.bf16.mxu0 0
      %5311 = vmatpush2.bf16.msra.mxu0 0
      %5312 = vmatprep.subr.bf16.mxu0 0
      %5313 = vmatpush2.bf16.msra.mxu0 0
      %5314 = vmatprep.subr.bf16.mxu0 0
      %5315 = vmatpush2.bf16.msra.mxu0 0
      %5316 = vmatprep.subr.bf16.mxu0 0
      %5317 = vmatpush2.bf16.msra.mxu0 0
      %5318 = vmatprep.mubr.bf16.mxu0 0
      %5319 = vmatmul.mubr.bf16.gmra.mxu0 %v5254
      %v5320 = vpop.f32.mrf.mxu0
      %v5321 = vadd.f32 0.0, %v5320
      %v5322 = vpop.f32.mrf.mxu0
      %v5323 = vpop.f32.mrf.mxu0
      %v5324 = vadd.f32 0.0, %v5323
      %v5325 = vpop.f32.mrf.mxu0
      %5326 = vmatprep.mubr.bf16.mxu0 0
      %5327 = vmatmul.mubr.bf16.gmra.mxu0 %v5255
      %v5328 = vpop.f32.mrf.mxu0
      %v5329 = vadd.f32 0.0, %v5328
      %v5330 = vpop.f32.mrf.mxu0
      %v5331 = vpop.f32.mrf.mxu0
      %v5332 = vadd.f32 0.0, %v5331
      %v5333 = vpop.f32.mrf.mxu0
      %5334 = vmatprep.mubr.bf16.mxu0 0
      %5335 = vmatmul.mubr.bf16.gmra.mxu0 %v5256
      %v5336 = vpop.f32.mrf.mxu0
      %v5337 = vadd.f32 0.0, %v5336
      %v5338 = vpop.f32.mrf.mxu0
      %v5339 = vpop.f32.mrf.mxu0
      %v5340 = vadd.f32 0.0, %v5339
      %v5341 = vpop.f32.mrf.mxu0
      %5342 = vmatprep.mubr.bf16.mxu0 0
      %5343 = vmatmul.mubr.bf16.gmra.mxu0 %v5257
      %v5344 = vpop.f32.mrf.mxu0
      %v5345 = vadd.f32 0.0, %v5344
      %v5346 = vpop.f32.mrf.mxu0
      %v5347 = vpop.f32.mrf.mxu0
      %v5348 = vadd.f32 0.0, %v5347
      %v5349 = vpop.f32.mrf.mxu0
      %5350 = vmatprep.mubr.bf16.mxu0 0
      %5351 = vmatmul.mubr.bf16.gmra.mxu0 %v5258
      %v5352 = vpop.f32.mrf.mxu0
      %v5353 = vadd.f32 0.0, %v5352
      %v5354 = vpop.f32.mrf.mxu0
      %v5355 = vpop.f32.mrf.mxu0
      %v5356 = vadd.f32 0.0, %v5355
      %v5357 = vpop.f32.mrf.mxu0
      %5358 = vmatprep.mubr.bf16.mxu0 0
      %5359 = vmatmul.mubr.bf16.gmra.mxu0 %v5259
      %v5360 = vpop.f32.mrf.mxu0
      %v5361 = vadd.f32 0.0, %v5360
      %v5362 = vpop.f32.mrf.mxu0
      %v5363 = vpop.f32.mrf.mxu0
      %v5364 = vadd.f32 0.0, %v5363
      %v5365 = vpop.f32.mrf.mxu0
      %5366 = vmatprep.mubr.bf16.mxu0 0
      %5367 = vmatmul.mubr.bf16.gmra.mxu0 %v5260
      %v5368 = vpop.f32.mrf.mxu0
      %v5369 = vadd.f32 0.0, %v5368
      %v5370 = vpop.f32.mrf.mxu0
      %v5371 = vpop.f32.mrf.mxu0
      %v5372 = vadd.f32 0.0, %v5371
      %v5373 = vpop.f32.mrf.mxu0
      %5374 = vmatprep.mubr.bf16.mxu0 0
      %5375 = vmatmul.mubr.bf16.gmra.mxu0 %v5261
      %v5376 = vpop.f32.mrf.mxu0
      %v5377 = vadd.f32 0.0, %v5376
      %v5378 = vpop.f32.mrf.mxu0
      %v5379 = vpop.f32.mrf.mxu0
      %v5380 = vadd.f32 0.0, %v5379
      %v5381 = vpop.f32.mrf.mxu0
      %5382 = vdwg.mxu0
      %v5383 = vmul.f32 %v5321, %v5238
      %v5384 = vmul.f32 %v5324, %v5239
      %v5385 = vmul.f32 %v5329, %v5240
      %v5386 = vmul.f32 %v5332, %v5241
      %v5387 = vmul.f32 %v5337, %v5242
      %v5388 = vmul.f32 %v5340, %v5243
      %v5389 = vmul.f32 %v5345, %v5244
      %v5390 = vmul.f32 %v5348, %v5245
      %v5391 = vmul.f32 %v5353, %v5246
      %v5392 = vmul.f32 %v5356, %v5247
      %v5393 = vmul.f32 %v5361, %v5248
      %v5394 = vmul.f32 %v5364, %v5249
      %v5395 = vmul.f32 %v5369, %v5250
      %v5396 = vmul.f32 %v5372, %v5251
      %v5397 = vmul.f32 %v5377, %v5252
      %v5398 = vmul.f32 %v5380, %v5253
      %v5399 = vpack.c.bf16 %v5384, %v5383
      %v5400 = vpack.c.bf16 %v5386, %v5385
      %v5401 = vpack.c.bf16 %v5388, %v5387
      %v5402 = vpack.c.bf16 %v5390, %v5389
      %v5403 = vpack.c.bf16 %v5392, %v5391
      %v5404 = vpack.c.bf16 %v5394, %v5393
      %v5405 = vpack.c.bf16 %v5396, %v5395
      %v5406 = vpack.c.bf16 %v5398, %v5397
      %v5415 = vunpack.c.l.b16 %v5399
      %v5416 = vunpack.c.h.b16 %v5399
      %v5417 = vunpack.c.l.b16 %v5400
      %v5418 = vunpack.c.h.b16 %v5400
      %v5419 = vunpack.c.l.b16 %v5401
      %v5420 = vunpack.c.h.b16 %v5401
      %v5421 = vunpack.c.l.b16 %v5402
      %v5422 = vunpack.c.h.b16 %v5402
      %v5423 = vunpack.c.l.b16 %v5403
      %v5424 = vunpack.c.h.b16 %v5403
      %v5425 = vunpack.c.l.b16 %v5404
      %v5426 = vunpack.c.h.b16 %v5404
      %v5427 = vunpack.c.l.b16 %v5405
      %v5428 = vunpack.c.h.b16 %v5405
      %v5429 = vunpack.c.l.b16 %v5406
      %v5430 = vunpack.c.h.b16 %v5406
      %v5431 = vpack.c.b16 %v5415, %v5415
      %v5432 = vpack.c.b16 %v5416, %v5416
      %v5433 = vpack.c.b16 %v5417, %v5417
      %v5434 = vpack.c.b16 %v5418, %v5418
      %v5435 = vpack.c.b16 %v5419, %v5419
      %v5436 = vpack.c.b16 %v5420, %v5420
      %v5437 = vpack.c.b16 %v5421, %v5421
      %v5438 = vpack.c.b16 %v5422, %v5422
      %v5439 = vpack.c.b16 %v5423, %v5423
      %v5440 = vpack.c.b16 %v5424, %v5424
      %v5441 = vpack.c.b16 %v5425, %v5425
      %v5442 = vpack.c.b16 %v5426, %v5426
      %v5443 = vpack.c.b16 %v5427, %v5427
      %v5444 = vpack.c.b16 %v5428, %v5428
      %v5445 = vpack.c.b16 %v5429, %v5429
      %v5446 = vpack.c.b16 %v5430, %v5430
      %5447 = vrot.lane.b32.xlu0 %v5431, 28
      %v5448 = vpop.permute.xlu0 %5447
      %5449 = vrot.lane.b32.xlu0 %v5432, 28
      %v5450 = vpop.permute.xlu0 %5449
      %5451 = vrot.lane.b32.xlu0 %v5433, 28
      %v5452 = vpop.permute.xlu0 %5451
      %5453 = vrot.lane.b32.xlu0 %v5434, 28
      %v5454 = vpop.permute.xlu0 %5453
      %5455 = vrot.lane.b32.xlu0 %v5435, 28
      %v5456 = vpop.permute.xlu0 %5455
      %5457 = vrot.lane.b32.xlu0 %v5436, 28
      %v5458 = vpop.permute.xlu0 %5457
      %5459 = vrot.lane.b32.xlu0 %v5437, 28
      %v5460 = vpop.permute.xlu0 %5459
      %5461 = vrot.lane.b32.xlu0 %v5438, 28
      %v5462 = vpop.permute.xlu0 %5461
      %5463 = vrot.lane.b32.xlu0 %v5439, 28
      %v5464 = vpop.permute.xlu0 %5463
      %5465 = vrot.lane.b32.xlu0 %v5440, 28
      %v5466 = vpop.permute.xlu0 %5465
      %5467 = vrot.lane.b32.xlu0 %v5441, 28
      %v5468 = vpop.permute.xlu0 %5467
      %5469 = vrot.lane.b32.xlu0 %v5442, 28
      %v5470 = vpop.permute.xlu0 %5469
      %5471 = vrot.lane.b32.xlu0 %v5443, 28
      %v5472 = vpop.permute.xlu0 %5471
      %5473 = vrot.lane.b32.xlu0 %v5444, 28
      %v5474 = vpop.permute.xlu0 %5473
      %5475 = vrot.lane.b32.xlu0 %v5445, 28
      %v5476 = vpop.permute.xlu0 %5475
      %5477 = vrot.lane.b32.xlu0 %v5446, 28
      %v5478 = vpop.permute.xlu0 %5477
      %vm5495 = vcmask 257248
      %5496 = vst.msk [vmem:[#allocation3] sm:$0xf] %vm5495, %v5448
      %5497 = vst.msk [vmem:[#allocation3 + $0x4] sm:$0xf] %vm5495, %v5450
      %5498 = vst.msk [vmem:[#allocation3 + $0x8] sm:$0xf] %vm5495, %v5452
      %5499 = vst.msk [vmem:[#allocation3 + $0xc] sm:$0xf] %vm5495, %v5454
      %5500 = vst.msk [vmem:[#allocation3 + $0x10] sm:$0xf] %vm5495, %v5456
      %5501 = vst.msk [vmem:[#allocation3 + $0x14] sm:$0xf] %vm5495, %v5458
      %5502 = vst.msk [vmem:[#allocation3 + $0x18] sm:$0xf] %vm5495, %v5460
      %5503 = vst.msk [vmem:[#allocation3 + $0x1c] sm:$0xf] %vm5495, %v5462
      %5504 = vst.msk [vmem:[#allocation3 + $0x20] sm:$0xf] %vm5495, %v5464
      %5505 = vst.msk [vmem:[#allocation3 + $0x24] sm:$0xf] %vm5495, %v5466
      %5506 = vst.msk [vmem:[#allocation3 + $0x28] sm:$0xf] %vm5495, %v5468
      %5507 = vst.msk [vmem:[#allocation3 + $0x2c] sm:$0xf] %vm5495, %v5470
      %5508 = vst.msk [vmem:[#allocation3 + $0x30] sm:$0xf] %vm5495, %v5472
      %5509 = vst.msk [vmem:[#allocation3 + $0x34] sm:$0xf] %vm5495, %v5474
      %5510 = vst.msk [vmem:[#allocation3 + $0x38] sm:$0xf] %vm5495, %v5476
      %5511 = vst.msk [vmem:[#allocation3 + $0x3c] sm:$0xf] %vm5495, %v5478
      %v5512 = vld [vmem:[#allocation3] sm:$0xf]
      %v5513 = vld [vmem:[#allocation3 + $0x4] sm:$0xf]
      %v5514 = vld [vmem:[#allocation3 + $0x8] sm:$0xf]
      %v5515 = vld [vmem:[#allocation3 + $0xc] sm:$0xf]
      %v5516 = vld [vmem:[#allocation3 + $0x10] sm:$0xf]
      %v5517 = vld [vmem:[#allocation3 + $0x14] sm:$0xf]
      %v5518 = vld [vmem:[#allocation3 + $0x18] sm:$0xf]
      %v5519 = vld [vmem:[#allocation3 + $0x1c] sm:$0xf]
      %v5520 = vld [vmem:[#allocation3 + $0x20] sm:$0xf]
      %v5521 = vld [vmem:[#allocation3 + $0x24] sm:$0xf]
      %v5522 = vld [vmem:[#allocation3 + $0x28] sm:$0xf]
      %v5523 = vld [vmem:[#allocation3 + $0x2c] sm:$0xf]
      %v5524 = vld [vmem:[#allocation3 + $0x30] sm:$0xf]
      %v5525 = vld [vmem:[#allocation3 + $0x34] sm:$0xf]
      %v5526 = vld [vmem:[#allocation3 + $0x38] sm:$0xf]
      %v5527 = vld [vmem:[#allocation3 + $0x3c] sm:$0xf]
      %v5528 = vld [vmem:[%s2] sm:$0xf]
      %v5529 = vld [vmem:[%s2 + $0x4] sm:$0xf]
      %v5530 = vld [vmem:[%s2 + $0x8] sm:$0xf]
      %v5531 = vld [vmem:[%s2 + $0xc] sm:$0xf]
      %v5532 = vld [vmem:[%s3] sm:$0x1]
      %v5534 = vlaneseq
      %v5535 = vshrl.u32 %v5534, 7
      %v5536 = vsub.s32 0, %v5535
      %v5537 = vrot.slane %v5532, %v5536
      %v5555 = vunpack.c.l.b16 %v5512
      %v5556 = vunpack.c.l.b16 %v5513
      %v5557 = vunpack.c.l.b16 %v5514
      %v5558 = vunpack.c.l.b16 %v5515
      %v5559 = vunpack.c.l.b16 %v5516
      %v5560 = vunpack.c.l.b16 %v5517
      %v5561 = vunpack.c.l.b16 %v5518
      %v5562 = vunpack.c.l.b16 %v5519
      %v5563 = vunpack.c.l.b16 %v5520
      %v5564 = vunpack.c.l.b16 %v5521
      %v5565 = vunpack.c.l.b16 %v5522
      %v5566 = vunpack.c.l.b16 %v5523
      %v5567 = vunpack.c.l.b16 %v5524
      %v5568 = vunpack.c.l.b16 %v5525
      %v5569 = vunpack.c.l.b16 %v5526
      %v5570 = vunpack.c.l.b16 %v5527
      %v5571 = vpack.c.b16 %v5556, %v5555
      %v5572 = vpack.c.b16 %v5558, %v5557
      %v5573 = vpack.c.b16 %v5560, %v5559
      %v5574 = vpack.c.b16 %v5562, %v5561
      %v5575 = vpack.c.b16 %v5564, %v5563
      %v5576 = vpack.c.b16 %v5566, %v5565
      %v5577 = vpack.c.b16 %v5568, %v5567
      %v5578 = vpack.c.b16 %v5570, %v5569
      %v5583 = vunpack.c.l.b16 %v5528
      %v5584 = vunpack.c.l.b16 %v5529
      %v5585 = vunpack.c.l.b16 %v5530
      %v5586 = vunpack.c.l.b16 %v5531
      %v5587 = vpack.c.b16 %v5584, %v5583
      %v5588 = vpack.c.b16 %v5586, %v5585
      %v5592 = vsel %vm271, %v5571, 0
      %v5595 = vsel %vm271, %v5572, 0
      %v5598 = vsel %vm271, %v5573, 0
      %v5601 = vsel %vm271, %v5574, 0
      %v5604 = vsel %vm271, %v5575, 0
      %v5607 = vsel %vm271, %v5576, 0
      %v5610 = vsel %vm271, %v5577, 0
      %v5613 = vsel %vm271, %v5578, 0
      %5615 = vmatprep.subr.bf16.mxu0 0
      %5616 = vmatpush1.bf16.msra.mxu0 0
      %5617 = vmatprep.subr.bf16.mxu0 0
      %5618 = vmatpush1.bf16.msra.mxu0 0
      %5619 = vmatprep.subr.bf16.mxu0 0
      %5620 = vmatpush1.bf16.msra.mxu0 0
      %5621 = vmatprep.subr.bf16.mxu0 0
      %5622 = vmatpush1.bf16.msra.mxu0 0
      %5623 = vmatprep.subr.bf16.mxu0 0
      %5624 = vmatpush1.bf16.msra.mxu0 0
      %5625 = vmatprep.subr.bf16.mxu0 0
      %5626 = vmatpush1.bf16.msra.mxu0 0
      %5627 = vmatprep.subr.bf16.mxu0 0
      %5628 = vmatpush1.bf16.msra.mxu0 %v5588
      %5629 = vmatprep.subr.bf16.mxu0 0
      %5630 = vmatpush1.bf16.msra.mxu0 %v5587
      %5631 = vmatprep.subr.bf16.mxu0 0
      %5632 = vmatpush2.bf16.msra.mxu0 0
      %5633 = vmatprep.subr.bf16.mxu0 0
      %5634 = vmatpush2.bf16.msra.mxu0 0
      %5635 = vmatprep.subr.bf16.mxu0 0
      %5636 = vmatpush2.bf16.msra.mxu0 0
      %5637 = vmatprep.subr.bf16.mxu0 0
      %5638 = vmatpush2.bf16.msra.mxu0 0
      %5639 = vmatprep.subr.bf16.mxu0 0
      %5640 = vmatpush2.bf16.msra.mxu0 0
      %5641 = vmatprep.subr.bf16.mxu0 0
      %5642 = vmatpush2.bf16.msra.mxu0 0
      %5643 = vmatprep.subr.bf16.mxu0 0
      %5644 = vmatpush2.bf16.msra.mxu0 0
      %5645 = vmatprep.subr.bf16.mxu0 0
      %5646 = vmatpush2.bf16.msra.mxu0 0
      %5647 = vmatprep.mubr.bf16.mxu0 0
      %5648 = vmatmul.mubr.bf16.gmra.mxu0 %v5592
      %v5649 = vpop.f32.mrf.mxu0
      %v5650 = vadd.f32 %v5537, %v5649
      %v5651 = vpop.f32.mrf.mxu0
      %v5652 = vpop.f32.mrf.mxu0
      %v5653 = vadd.f32 %v5537, %v5652
      %v5654 = vpop.f32.mrf.mxu0
      %5655 = vmatprep.mubr.bf16.mxu0 0
      %5656 = vmatmul.mubr.bf16.gmra.mxu0 %v5595
      %v5657 = vpop.f32.mrf.mxu0
      %v5658 = vadd.f32 %v5537, %v5657
      %v5659 = vpop.f32.mrf.mxu0
      %v5660 = vpop.f32.mrf.mxu0
      %v5661 = vadd.f32 %v5537, %v5660
      %v5662 = vpop.f32.mrf.mxu0
      %5663 = vmatprep.mubr.bf16.mxu0 0
      %5664 = vmatmul.mubr.bf16.gmra.mxu0 %v5598
      %v5665 = vpop.f32.mrf.mxu0
      %v5666 = vadd.f32 %v5537, %v5665
      %v5667 = vpop.f32.mrf.mxu0
      %v5668 = vpop.f32.mrf.mxu0
      %v5669 = vadd.f32 %v5537, %v5668
      %v5670 = vpop.f32.mrf.mxu0
      %5671 = vmatprep.mubr.bf16.mxu0 0
      %5672 = vmatmul.mubr.bf16.gmra.mxu0 %v5601
      %v5673 = vpop.f32.mrf.mxu0
      %v5674 = vadd.f32 %v5537, %v5673
      %v5675 = vpop.f32.mrf.mxu0
      %v5676 = vpop.f32.mrf.mxu0
      %v5677 = vadd.f32 %v5537, %v5676
      %v5678 = vpop.f32.mrf.mxu0
      %5679 = vmatprep.mubr.bf16.mxu0 0
      %5680 = vmatmul.mubr.bf16.gmra.mxu0 %v5604
      %v5681 = vpop.f32.mrf.mxu0
      %v5682 = vadd.f32 %v5537, %v5681
      %v5683 = vpop.f32.mrf.mxu0
      %v5684 = vpop.f32.mrf.mxu0
      %v5685 = vadd.f32 %v5537, %v5684
      %v5686 = vpop.f32.mrf.mxu0
      %5687 = vmatprep.mubr.bf16.mxu0 0
      %5688 = vmatmul.mubr.bf16.gmra.mxu0 %v5607
      %v5689 = vpop.f32.mrf.mxu0
      %v5690 = vadd.f32 %v5537, %v5689
      %v5691 = vpop.f32.mrf.mxu0
      %v5692 = vpop.f32.mrf.mxu0
      %v5693 = vadd.f32 %v5537, %v5692
      %v5694 = vpop.f32.mrf.mxu0
      %5695 = vmatprep.mubr.bf16.mxu0 0
      %5696 = vmatmul.mubr.bf16.gmra.mxu0 %v5610
      %v5697 = vpop.f32.mrf.mxu0
      %v5698 = vadd.f32 %v5537, %v5697
      %v5699 = vpop.f32.mrf.mxu0
      %v5700 = vpop.f32.mrf.mxu0
      %v5701 = vadd.f32 %v5537, %v5700
      %v5702 = vpop.f32.mrf.mxu0
      %5703 = vmatprep.mubr.bf16.mxu0 0
      %5704 = vmatmul.mubr.bf16.gmra.mxu0 %v5613
      %v5705 = vpop.f32.mrf.mxu0
      %v5706 = vadd.f32 %v5537, %v5705
      %v5707 = vpop.f32.mrf.mxu0
      %v5708 = vpop.f32.mrf.mxu0
      %v5709 = vadd.f32 %v5537, %v5708
      %v5710 = vpop.f32.mrf.mxu0
      %5711 = vdwg.mxu0
      %5712 = vst.msk [vmem:[%s197] sm:$0xff] %vm271, %v5650
      %5713 = vst.msk [vmem:[%s197 + $0x8] sm:$0xff] %vm271, %v5653
      %5714 = vst.msk [vmem:[%s197 + $0x10] sm:$0xff] %vm271, %v5658
      %5715 = vst.msk [vmem:[%s197 + $0x18] sm:$0xff] %vm271, %v5661
      %5716 = vst.msk [vmem:[%s197 + $0x20] sm:$0xff] %vm271, %v5666
      %5717 = vst.msk [vmem:[%s197 + $0x28] sm:$0xff] %vm271, %v5669
      %5718 = vst.msk [vmem:[%s197 + $0x30] sm:$0xff] %vm271, %v5674
      %5719 = vst.msk [vmem:[%s197 + $0x38] sm:$0xff] %vm271, %v5677
      %5720 = vst.msk [vmem:[%s197 + $0x40] sm:$0xff] %vm271, %v5682
      %5721 = vst.msk [vmem:[%s197 + $0x48] sm:$0xff] %vm271, %v5685
      %5722 = vst.msk [vmem:[%s197 + $0x50] sm:$0xff] %vm271, %v5690
      %5723 = vst.msk [vmem:[%s197 + $0x58] sm:$0xff] %vm271, %v5693
      %5724 = vst.msk [vmem:[%s197 + $0x60] sm:$0xff] %vm271, %v5698
      %5725 = vst.msk [vmem:[%s197 + $0x68] sm:$0xff] %vm271, %v5701
      %5726 = vst.msk [vmem:[%s197 + $0x70] sm:$0xff] %vm271, %v5706
      %5727 = vst.msk [vmem:[%s197 + $0x78] sm:$0xff] %vm271, %v5709
      %p5728 = scmp.lt.s32.totalorder %s15, 1
      %s5729 = scalar_select %p5728, %s15, 1
      %s5730 = smul.addr %s5729, 16
      %s5731 = smul.addr %s5730, 8
      %s5732 = scalar_lea.vmem %s4, %s5731
      // Predicated region
      $region37: #{tpu_custom_call.1} parent=35 // pred_check
        %p5733 = pneg %p122
      $region38: #{tpu_custom_call.1} parent=35 // pred_check_branch
        %5735 = sbr.rel (%p5733) target = $region40
      $region39: #{tpu_custom_call.1} parent=35 // pred_region
        _
      $region40: #{tpu_custom_call.1} parent=35 // pred_fallthru
        _
    $region36: #{tpu_custom_call.1} parent=5 // pred_fallthru
      _
    %p5736 = scmp.le.s32.totalorder 2, %s10
    // Predicated region
    $region41: #{tpu_custom_call.1} parent=5 // pred_check
      %p5737 = pneg %p5736
    $region42: #{tpu_custom_call.1} parent=5 // pred_check_branch
      %5739 = sbr.rel (%p5737) target = $region44
    $region43: #{tpu_custom_call.1} parent=5 // pred_region
      %s5740 = ssub.s32 %s10, 2
      // Predicated region
      $region45: #{tpu_custom_call.1} parent=43 // pred_check
        %p5741 = pneg %p128
      $region46: #{tpu_custom_call.1} parent=43 // pred_check_branch
        %5743 = sbr.rel (%p5741) target = $region48
      $region47: #{tpu_custom_call.1} parent=43 // pred_region
        %p5744 = scmp.lt.s32.totalorder %s16, 1
        %s5745 = scalar_select %p5744, %s16, 1
        %s5746 = smul.addr %s5745, 16
        %s5747 = smul.addr %s5746, 8
        %s5748 = scalar_lea.vmem %s4, %s5747
      $region48: #{tpu_custom_call.1} parent=43 // pred_fallthru
        _
    $region44: #{tpu_custom_call.1} parent=5 // pred_fallthru
      _
  $region6: #{tpu_custom_call.1} parent=0 // loop_footer
    %s14 = sadd.s32 1, %s10
  $region7: #{tpu_custom_call.1} parent=0 // loop_footer_branch
    %9 = sbr.rel target = $region3
  $region8: #{tpu_custom_call.1} parent=0 // loop_exit
    _

</llo_original>
